<compile_context>
chip_gen: v7x
topology: tpu7x:2x2x1
jax: 0.10.0
libtpu: 0.0.40
codegen_flags: <defaults>
</compile_context>

<pallas_src>
import jax
import jax.numpy as jnp
from jax import lax
from jax.experimental import pallas as pl
from jax.experimental.pallas import tpu as pltpu

N_EMBD = 256
N_HEADS = 1
HEAD_SIZE = N_EMBD // N_HEADS
LN_EPS = 1e-5


def block_kernel(
    x_ref,                       # (B_blk, T, C)
    g1_ref, bt1_ref,             # LN1 gamma/beta      (1, C)    f32
    wqkv_ref, bqkv_ref,          # fused QKV           (C, 3H) bf16, (1, 3H) f32
    wp_ref, bp_ref,              # attention proj      (C, C)  bf16, (1, C)  f32
    g2_ref, bt2_ref,             # LN2 gamma/beta      (1, C)    f32
    w1_ref, bf1_ref,             # FFN up              (C, 4C) bf16, (1, 4C) f32
    w2_ref, bf2_ref,             # FFN down            (4C, C) bf16, (1, C)  f32
    o_ref,                       # (B_blk, T, C)
):
    Bb, T, C = x_ref.shape
    H = wqkv_ref.shape[1] // 3
    M = Bb * T

    # Flatten batch*seq into the matmul M dimension.
    x = x_ref[...].reshape(M, C).astype(jnp.float32)

    # ---- LayerNorm 1 (f32) ----
    mu = jnp.mean(x, axis=-1, keepdims=True)
    var = jnp.mean((x - mu) ** 2, axis=-1, keepdims=True)
    h = (x - mu) * lax.rsqrt(var + LN_EPS) * g1_ref[...] + bt1_ref[...]

    # ---- Fused QKV: one (M, C) @ (C, 3H) matmul, bf16 in / f32 accumulate ----
    qkv = jnp.dot(h.astype(jnp.bfloat16), wqkv_ref[...],
                  preferred_element_type=jnp.float32) + bqkv_ref[...]
    q = qkv[:, :H].reshape(Bb, T, H).astype(jnp.bfloat16)
    k = qkv[:, H:2 * H].reshape(Bb, T, H).astype(jnp.bfloat16)
    v = qkv[:, 2 * H:].reshape(Bb, T, H).astype(jnp.bfloat16)

    # ---- Attention scores, batched per sequence (no explicit k.T) ----
    # NOTE: PyTorch scales by C**-0.5 (n_embd), not head_size**-0.5; they
    # coincide here because N_HEADS == 1. Keep the module's exact semantics.
    scores = lax.dot_general(
        q, k, dimension_numbers=(((2,), (2,)), ((0,), (0,))),
        preferred_element_type=jnp.float32) * (C ** -0.5)          # (Bb, T, T)
    scores = scores - jnp.max(scores, axis=-1, keepdims=True)
    p = jnp.exp(scores)
    p = p * pl.reciprocal(jnp.sum(p, axis=-1, keepdims=True), approx=True)
    # attention dropout (p=0.1) is identity in eval mode.

    attn = lax.dot_general(
        p.astype(jnp.bfloat16), v,
        dimension_numbers=(((2,), (1,)), ((0,), (0,))),
        preferred_element_type=jnp.float32)                        # (Bb, T, H)
    attn = attn.reshape(M, H).astype(jnp.bfloat16)
    proj = jnp.dot(attn, wp_ref[...],
                   preferred_element_type=jnp.float32) + bp_ref[...]
    # projection dropout is identity in eval mode.

    x1 = x + proj

    # ---- LayerNorm 2 (f32) ----
    mu2 = jnp.mean(x1, axis=-1, keepdims=True)
    var2 = jnp.mean((x1 - mu2) ** 2, axis=-1, keepdims=True)
    h2 = (x1 - mu2) * lax.rsqrt(var2 + LN_EPS) * g2_ref[...] + bt2_ref[...]

    # ---- FeedForward: Linear(C,4C) -> ReLU -> Linear(4C,C) ----
    f = jnp.dot(h2.astype(jnp.bfloat16), w1_ref[...],
                preferred_element_type=jnp.float32) + bf1_ref[...]
    f = jnp.maximum(f, 0.0).astype(jnp.bfloat16)
    f = jnp.dot(f, w2_ref[...],
                preferred_element_type=jnp.float32) + bf2_ref[...]
    # FFN dropout is identity in eval mode.

    o_ref[...] = (x1 + f).reshape(Bb, T, C).astype(o_ref.dtype)


def transformer_block(x, params, *, batch_block=None):
    """x: (B, T, C) float32. params: dict of f32 weights (see init_params)."""
    B, T, C = x.shape
    H = HEAD_SIZE

    # ---- choose how many sequences to fold into one grid step ----
    if batch_block is None:
        target_rows = 512                      # aim for M >= 256 rows per step
        bb = max(1, min(B, target_rows // max(T, 1)))
        while B % bb:                          # must divide B evenly
            bb -= 1
        # keep >=2 parallel grid steps (v7x dual TensorCore) only if each step
        # would still hold >=256 MXU rows.
        if B // bb < 2 and bb % 2 == 0 and (bb // 2) * T >= 256:
            bb //= 2
        batch_block = bb
    assert B % batch_block == 0
    grid = (B // batch_block,)

    # ---- fuse + cast weights (bf16 matmul operands, f32 biases) ----
    wqkv = jnp.concatenate(
        [params["wq"], params["wk"], params["wv"]], axis=1).astype(jnp.bfloat16)
    bqkv = jnp.concatenate(
        [params["bq"], params["bk"], jnp.zeros((1, H), jnp.float32)], axis=1)
    wp = params["wp"].astype(jnp.bfloat16)
    w1 = params["w1"].astype(jnp.bfloat16)
    w2 = params["w2"].astype(jnp.bfloat16)

    def rep(shape):
        # full-array (untiled) weight spec, replicated across the batch grid
        ndim = len(shape)
        return pl.BlockSpec(shape, lambda b, _n=ndim: (0,) * _n)

    in_specs = [
        pl.BlockSpec((batch_block, T, C), lambda b: (b, 0, 0)),    # x
        rep((1, C)), rep((1, C)),                                  # ln1 gamma, beta
        rep((C, 3 * H)), rep((1, 3 * H)),                          # Wqkv, bqkv
        rep((C, C)), rep((1, C)),                                  # Wproj, bproj
        rep((1, C)), rep((1, C)),                                  # ln2 gamma, beta
        rep((C, 4 * C)), rep((1, 4 * C)),                          # W1, b1
        rep((4 * C, C)), rep((1, C)),                              # W2, b2
    ]

    fn = pl.pallas_call(
        block_kernel,
        out_shape=jax.ShapeDtypeStruct((B, T, C), x.dtype),
        grid_spec=pltpu.PrefetchScalarGridSpec(
            num_scalar_prefetch=0,
            grid=grid,
            in_specs=in_specs,
            out_specs=pl.BlockSpec((batch_block, T, C), lambda b: (b, 0, 0)),
        ),
        compiler_params=pltpu.CompilerParams(
            dimension_semantics=("parallel",),
            # well under v7x's 64 MiB physical VMEM; plenty for v5e/v6e too.
            vmem_limit_bytes=48 << 20,
        ),
    )
    return fn(
        x,
        params["g1"], params["bt1"],
        wqkv, bqkv,
        wp, params["bp"],
        params["g2"], params["bt2"],
        w1, params["bf1"],
        w2, params["bf2"],
    )


def init_params(key, C=N_EMBD, H=HEAD_SIZE):
    ks = jax.random.split(key, 10)
    scale = 0.02

    def w(k, shape):
        return (scale * jax.random.normal(k, shape)).astype(jnp.float32)

    return {
        # LayerNorm 1 / 2 (PyTorch default init: gamma=1, beta=0)
        "g1": jnp.ones((1, C), jnp.float32),
        "bt1": jnp.zeros((1, C), jnp.float32),
        "g2": jnp.ones((1, C), jnp.float32),
        "bt2": jnp.zeros((1, C), jnp.float32),
        # attention linears, stored transposed: y = x @ W  (W has shape (in, out))
        "wq": w(ks[0], (C, H)), "bq": w(ks[1], (1, H)),
        "wk": w(ks[2], (C, H)), "bk": w(ks[3], (1, H)),
        "wv": w(ks[4], (C, H)),
        "wp": w(ks[5], (C, C)), "bp": w(ks[6], (1, C)),
        # feed-forward
        "w1": w(ks[7], (C, 4 * C)), "bf1": jnp.zeros((1, 4 * C), jnp.float32),
        "w2": w(ks[8], (4 * C, C)), "bf2": jnp.zeros((1, C), jnp.float32),
    }


def reference_block(x, p):
    """Plain-JAX f32 reference of the PyTorch forward (eval mode)."""
    def ln(v, g, b):
        mu = jnp.mean(v, axis=-1, keepdims=True)
        var = jnp.mean((v - mu) ** 2, axis=-1, keepdims=True)
        return (v - mu) * lax.rsqrt(var + LN_EPS) * g + b

    C = x.shape[-1]
    h = ln(x, p["g1"], p["bt1"])
    q = h @ p["wq"] + p["bq"]
    k = h @ p["wk"] + p["bk"]
    v = h @ p["wv"]
    wei = jax.nn.softmax(jnp.einsum("btd,bsd->bts", q, k) * (C ** -0.5), axis=-1)
    attn = jnp.einsum("bts,bsd->btd", wei, v) @ p["wp"] + p["bp"]
    x1 = x + attn
    h2 = ln(x1, p["g2"], p["bt2"])
    f = jnp.maximum(h2 @ p["w1"] + p["bf1"], 0.0) @ p["w2"] + p["bf2"]
    return x1 + f


if __name__ == "__main__":
    key = jax.random.PRNGKey(0)
    kx, kp = jax.random.split(key)

    B, T, C = 2, 8, N_EMBD
    x = jax.random.normal(kx, (B, T, C), dtype=jnp.float32)
    params = init_params(kp)

    out = transformer_block(x, params)
    out = jax.block_until_ready(out)

    ref = reference_block(x, params)
    assert out.shape == (B, T, C)
    # bf16 matmul operands (f32 accumulation) vs f32 reference -> loose tolerance
    assert jnp.allclose(out, ref, atol=2e-2, rtol=2e-2), "mismatch vs reference"

    print("KERNEL_OK")
</pallas_src>

<mosaic_0001>
module attributes {stable_mosaic.version = 11 : i64} {
  func.func @block_kernel(%arg0: i32, %arg1: memref<2x8x256xf32, #tpu.memory_space<vmem>>, %arg2: memref<1x256xf32, #tpu.memory_space<vmem>>, %arg3: memref<1x256xf32, #tpu.memory_space<vmem>>, %arg4: memref<256x768xbf16, #tpu.memory_space<vmem>>, %arg5: memref<1x768xf32, #tpu.memory_space<vmem>>, %arg6: memref<256x256xbf16, #tpu.memory_space<vmem>>, %arg7: memref<1x256xf32, #tpu.memory_space<vmem>>, %arg8: memref<1x256xf32, #tpu.memory_space<vmem>>, %arg9: memref<1x256xf32, #tpu.memory_space<vmem>>, %arg10: memref<256x1024xbf16, #tpu.memory_space<vmem>>, %arg11: memref<1x1024xf32, #tpu.memory_space<vmem>>, %arg12: memref<1024x256xbf16, #tpu.memory_space<vmem>>, %arg13: memref<1x256xf32, #tpu.memory_space<vmem>>, %arg14: memref<2x8x256xf32, #tpu.memory_space<vmem>>) attributes {dimension_semantics = [#tpu.dimension_semantics<parallel>], iteration_bounds = array<i64: 1>, scalar_prefetch = 0 : i64, scratch_operands = 0 : i64, tpu.core_type = #tpu.core_type<tc>, window_params = [{transform_indices = @transform_0, window_bounds = array<i64: 2, 8, 256>}, {pipeline_mode = #tpu.pipeline_mode<synchronous>, transform_indices = @transform_1, window_bounds = array<i64: 1, 256>}, {pipeline_mode = #tpu.pipeline_mode<synchronous>, transform_indices = @transform_2, window_bounds = array<i64: 1, 256>}, {pipeline_mode = #tpu.pipeline_mode<synchronous>, transform_indices = @transform_3, window_bounds = array<i64: 256, 768>}, {pipeline_mode = #tpu.pipeline_mode<synchronous>, transform_indices = @transform_4, window_bounds = array<i64: 1, 768>}, {pipeline_mode = #tpu.pipeline_mode<synchronous>, transform_indices = @transform_5, window_bounds = array<i64: 256, 256>}, {pipeline_mode = #tpu.pipeline_mode<synchronous>, transform_indices = @transform_6, window_bounds = array<i64: 1, 256>}, {pipeline_mode = #tpu.pipeline_mode<synchronous>, transform_indices = @transform_7, window_bounds = array<i64: 1, 256>}, {pipeline_mode = #tpu.pipeline_mode<synchronous>, transform_indices = @transform_8, window_bounds = array<i64: 1, 256>}, {pipeline_mode = #tpu.pipeline_mode<synchronous>, transform_indices = @transform_9, window_bounds = array<i64: 256, 1024>}, {pipeline_mode = #tpu.pipeline_mode<synchronous>, transform_indices = @transform_10, window_bounds = array<i64: 1, 1024>}, {pipeline_mode = #tpu.pipeline_mode<synchronous>, transform_indices = @transform_11, window_bounds = array<i64: 1024, 256>}, {pipeline_mode = #tpu.pipeline_mode<synchronous>, transform_indices = @transform_12, window_bounds = array<i64: 1, 256>}, {transform_indices = @transform_13, window_bounds = array<i64: 2, 8, 256>}]} {
    %c0 = arith.constant 0 : index
    %c0_0 = arith.constant 0 : index
    %c0_1 = arith.constant 0 : index
    %0 = vector.load %arg1[%c0, %c0_0, %c0_1] : memref<2x8x256xf32, #tpu.memory_space<vmem>>, vector<2x8x256xf32>
    %1 = vector.shape_cast %0 : vector<2x8x256xf32> to vector<16x256xf32>
    %cst = arith.constant dense<0.000000e+00> : vector<16xf32>
    %2 = vector.multi_reduction <add>, %1, %cst [1] : vector<16x256xf32> to vector<16xf32>
    %3 = vector.shape_cast %2 : vector<16xf32> to vector<16x1xf32>
    %cst_2 = arith.constant 2.560000e+02 : f32
    %4 = vector.broadcast %cst_2 : f32 to vector<16x1xf32>
    %5 = arith.divf %3, %4 : vector<16x1xf32>
    %6 = vector.broadcast %5 : vector<16x1xf32> to vector<16x256xf32>
    %7 = arith.subf %1, %6 : vector<16x256xf32>
    %8 = arith.mulf %7, %7 : vector<16x256xf32>
    %cst_3 = arith.constant dense<0.000000e+00> : vector<16xf32>
    %9 = vector.multi_reduction <add>, %8, %cst_3 [1] : vector<16x256xf32> to vector<16xf32>
    %10 = vector.shape_cast %9 : vector<16xf32> to vector<16x1xf32>
    %cst_4 = arith.constant 2.560000e+02 : f32
    %11 = vector.broadcast %cst_4 : f32 to vector<16x1xf32>
    %12 = arith.divf %10, %11 : vector<16x1xf32>
    %13 = vector.broadcast %5 : vector<16x1xf32> to vector<16x256xf32>
    %14 = arith.subf %1, %13 : vector<16x256xf32>
    %cst_5 = arith.constant 9.99999974E-6 : f32
    %15 = vector.broadcast %cst_5 : f32 to vector<16x1xf32>
    %16 = arith.addf %12, %15 : vector<16x1xf32>
    %17 = math.rsqrt %16 : vector<16x1xf32>
    %18 = vector.broadcast %17 : vector<16x1xf32> to vector<16x256xf32>
    %19 = arith.mulf %14, %18 : vector<16x256xf32>
    %c0_6 = arith.constant 0 : index
    %c0_7 = arith.constant 0 : index
    %20 = vector.load %arg2[%c0_6, %c0_7] : memref<1x256xf32, #tpu.memory_space<vmem>>, vector<1x256xf32>
    %21 = vector.broadcast %20 : vector<1x256xf32> to vector<16x256xf32>
    %22 = arith.mulf %19, %21 : vector<16x256xf32>
    %c0_8 = arith.constant 0 : index
    %c0_9 = arith.constant 0 : index
    %23 = vector.load %arg3[%c0_8, %c0_9] : memref<1x256xf32, #tpu.memory_space<vmem>>, vector<1x256xf32>
    %24 = vector.broadcast %23 : vector<1x256xf32> to vector<16x256xf32>
    %25 = arith.addf %22, %24 : vector<16x256xf32>
    %26 = arith.truncf %25 : vector<16x256xf32> to vector<16x256xbf16>
    %c0_10 = arith.constant 0 : index
    %c0_11 = arith.constant 0 : index
    %27 = vector.load %arg4[%c0_10, %c0_11] : memref<256x768xbf16, #tpu.memory_space<vmem>>, vector<256x768xbf16>
    %cst_12 = arith.constant dense<0.000000e+00> : vector<16x768xf32>
    %28 = tpu.matmul %26, %27, %cst_12 {dimension_numbers = #tpu.dot_dimension_numbers<[1], [0], [0], [1], [0, 0, 1, 1], [], []>} : vector<16x256xbf16>, vector<256x768xbf16>, vector<16x768xf32> -> vector<16x768xf32>
    %c0_13 = arith.constant 0 : index
    %c0_14 = arith.constant 0 : index
    %29 = vector.load %arg5[%c0_13, %c0_14] : memref<1x768xf32, #tpu.memory_space<vmem>>, vector<1x768xf32>
    %30 = vector.broadcast %29 : vector<1x768xf32> to vector<16x768xf32>
    %31 = arith.addf %28, %30 : vector<16x768xf32>
    %32 = vector.extract_strided_slice %31 {offsets = [0, 0], sizes = [16, 256], strides = [1, 1]} : vector<16x768xf32> to vector<16x256xf32>
    %33 = vector.shape_cast %32 : vector<16x256xf32> to vector<2x8x256xf32>
    %34 = arith.truncf %33 : vector<2x8x256xf32> to vector<2x8x256xbf16>
    %35 = vector.extract_strided_slice %31 {offsets = [0, 256], sizes = [16, 256], strides = [1, 1]} : vector<16x768xf32> to vector<16x256xf32>
    %36 = vector.shape_cast %35 : vector<16x256xf32> to vector<2x8x256xf32>
    %37 = arith.truncf %36 : vector<2x8x256xf32> to vector<2x8x256xbf16>
    %38 = vector.extract_strided_slice %31 {offsets = [0, 512], sizes = [16, 256], strides = [1, 1]} : vector<16x768xf32> to vector<16x256xf32>
    %39 = vector.shape_cast %38 : vector<16x256xf32> to vector<2x8x256xf32>
    %40 = arith.truncf %39 : vector<2x8x256xf32> to vector<2x8x256xbf16>
    %cst_15 = arith.constant dense<0.000000e+00> : vector<2x8x8xf32>
    %41 = tpu.matmul %34, %37, %cst_15 {dimension_numbers = #tpu.dot_dimension_numbers<[2], [2], [1], [1], [0, 0, 0, 1, 1, 1], [0], [0]>} : vector<2x8x256xbf16>, vector<2x8x256xbf16>, vector<2x8x8xf32> -> vector<2x8x8xf32>
    %cst_16 = arith.constant 6.250000e-02 : f32
    %42 = vector.broadcast %cst_16 : f32 to vector<2x8x8xf32>
    %43 = arith.mulf %41, %42 : vector<2x8x8xf32>
    %cst_17 = arith.constant dense<0xFF800000> : vector<2x8xf32>
    %44 = vector.multi_reduction <maximumf>, %43, %cst_17 [2] : vector<2x8x8xf32> to vector<2x8xf32>
    %45 = vector.shape_cast %44 : vector<2x8xf32> to vector<2x8x1xf32>
    %46 = vector.broadcast %45 : vector<2x8x1xf32> to vector<2x8x8xf32>
    %47 = arith.subf %43, %46 : vector<2x8x8xf32>
    %48 = math.exp %47 : vector<2x8x8xf32>
    %cst_18 = arith.constant dense<0.000000e+00> : vector<2x8xf32>
    %49 = vector.multi_reduction <add>, %48, %cst_18 [2] : vector<2x8x8xf32> to vector<2x8xf32>
    %50 = vector.shape_cast %49 : vector<2x8xf32> to vector<2x8x1xf32>
    %51 = tpu.reciprocal %50 {approx = true} : vector<2x8x1xf32> -> vector<2x8x1xf32>
    %52 = vector.broadcast %51 : vector<2x8x1xf32> to vector<2x8x8xf32>
    %53 = arith.mulf %48, %52 : vector<2x8x8xf32>
    %54 = arith.truncf %53 : vector<2x8x8xf32> to vector<2x8x8xbf16>
    %cst_19 = arith.constant dense<0.000000e+00> : vector<2x8x256xf32>
    %55 = tpu.matmul %54, %40, %cst_19 {dimension_numbers = #tpu.dot_dimension_numbers<[2], [1], [1], [2], [0, 0, 0, 1, 1, 2], [0], [0]>} : vector<2x8x8xbf16>, vector<2x8x256xbf16>, vector<2x8x256xf32> -> vector<2x8x256xf32>
    %56 = vector.shape_cast %55 : vector<2x8x256xf32> to vector<16x256xf32>
    %57 = arith.truncf %56 : vector<16x256xf32> to vector<16x256xbf16>
    %c0_20 = arith.constant 0 : index
    %c0_21 = arith.constant 0 : index
    %58 = vector.load %arg6[%c0_20, %c0_21] : memref<256x256xbf16, #tpu.memory_space<vmem>>, vector<256x256xbf16>
    %cst_22 = arith.constant dense<0.000000e+00> : vector<16x256xf32>
    %59 = tpu.matmul %57, %58, %cst_22 {dimension_numbers = #tpu.dot_dimension_numbers<[1], [0], [0], [1], [0, 0, 1, 1], [], []>} : vector<16x256xbf16>, vector<256x256xbf16>, vector<16x256xf32> -> vector<16x256xf32>
    %c0_23 = arith.constant 0 : index
    %c0_24 = arith.constant 0 : index
    %60 = vector.load %arg7[%c0_23, %c0_24] : memref<1x256xf32, #tpu.memory_space<vmem>>, vector<1x256xf32>
    %61 = vector.broadcast %60 : vector<1x256xf32> to vector<16x256xf32>
    %62 = arith.addf %59, %61 : vector<16x256xf32>
    %63 = arith.addf %1, %62 : vector<16x256xf32>
    %cst_25 = arith.constant dense<0.000000e+00> : vector<16xf32>
    %64 = vector.multi_reduction <add>, %63, %cst_25 [1] : vector<16x256xf32> to vector<16xf32>
    %65 = vector.shape_cast %64 : vector<16xf32> to vector<16x1xf32>
    %cst_26 = arith.constant 2.560000e+02 : f32
    %66 = vector.broadcast %cst_26 : f32 to vector<16x1xf32>
    %67 = arith.divf %65, %66 : vector<16x1xf32>
    %68 = vector.broadcast %67 : vector<16x1xf32> to vector<16x256xf32>
    %69 = arith.subf %63, %68 : vector<16x256xf32>
    %70 = arith.mulf %69, %69 : vector<16x256xf32>
    %cst_27 = arith.constant dense<0.000000e+00> : vector<16xf32>
    %71 = vector.multi_reduction <add>, %70, %cst_27 [1] : vector<16x256xf32> to vector<16xf32>
    %72 = vector.shape_cast %71 : vector<16xf32> to vector<16x1xf32>
    %cst_28 = arith.constant 2.560000e+02 : f32
    %73 = vector.broadcast %cst_28 : f32 to vector<16x1xf32>
    %74 = arith.divf %72, %73 : vector<16x1xf32>
    %75 = vector.broadcast %67 : vector<16x1xf32> to vector<16x256xf32>
    %76 = arith.subf %63, %75 : vector<16x256xf32>
    %cst_29 = arith.constant 9.99999974E-6 : f32
    %77 = vector.broadcast %cst_29 : f32 to vector<16x1xf32>
    %78 = arith.addf %74, %77 : vector<16x1xf32>
    %79 = math.rsqrt %78 : vector<16x1xf32>
    %80 = vector.broadcast %79 : vector<16x1xf32> to vector<16x256xf32>
    %81 = arith.mulf %76, %80 : vector<16x256xf32>
    %c0_30 = arith.constant 0 : index
    %c0_31 = arith.constant 0 : index
    %82 = vector.load %arg8[%c0_30, %c0_31] : memref<1x256xf32, #tpu.memory_space<vmem>>, vector<1x256xf32>
    %83 = vector.broadcast %82 : vector<1x256xf32> to vector<16x256xf32>
    %84 = arith.mulf %81, %83 : vector<16x256xf32>
    %c0_32 = arith.constant 0 : index
    %c0_33 = arith.constant 0 : index
    %85 = vector.load %arg9[%c0_32, %c0_33] : memref<1x256xf32, #tpu.memory_space<vmem>>, vector<1x256xf32>
    %86 = vector.broadcast %85 : vector<1x256xf32> to vector<16x256xf32>
    %87 = arith.addf %84, %86 : vector<16x256xf32>
    %88 = arith.truncf %87 : vector<16x256xf32> to vector<16x256xbf16>
    %c0_34 = arith.constant 0 : index
    %c0_35 = arith.constant 0 : index
    %89 = vector.load %arg10[%c0_34, %c0_35] : memref<256x1024xbf16, #tpu.memory_space<vmem>>, vector<256x1024xbf16>
    %cst_36 = arith.constant dense<0.000000e+00> : vector<16x1024xf32>
    %90 = tpu.matmul %88, %89, %cst_36 {dimension_numbers = #tpu.dot_dimension_numbers<[1], [0], [0], [1], [0, 0, 1, 1], [], []>} : vector<16x256xbf16>, vector<256x1024xbf16>, vector<16x1024xf32> -> vector<16x1024xf32>
    %c0_37 = arith.constant 0 : index
    %c0_38 = arith.constant 0 : index
    %91 = vector.load %arg11[%c0_37, %c0_38] : memref<1x1024xf32, #tpu.memory_space<vmem>>, vector<1x1024xf32>
    %92 = vector.broadcast %91 : vector<1x1024xf32> to vector<16x1024xf32>
    %93 = arith.addf %90, %92 : vector<16x1024xf32>
    %cst_39 = arith.constant 0.000000e+00 : f32
    %94 = vector.broadcast %cst_39 : f32 to vector<16x1024xf32>
    %95 = arith.maximumf %93, %94 : vector<16x1024xf32>
    %96 = arith.truncf %95 : vector<16x1024xf32> to vector<16x1024xbf16>
    %c0_40 = arith.constant 0 : index
    %c0_41 = arith.constant 0 : index
    %97 = vector.load %arg12[%c0_40, %c0_41] : memref<1024x256xbf16, #tpu.memory_space<vmem>>, vector<1024x256xbf16>
    %cst_42 = arith.constant dense<0.000000e+00> : vector<16x256xf32>
    %98 = tpu.matmul %96, %97, %cst_42 {dimension_numbers = #tpu.dot_dimension_numbers<[1], [0], [0], [1], [0, 0, 1, 1], [], []>} : vector<16x1024xbf16>, vector<1024x256xbf16>, vector<16x256xf32> -> vector<16x256xf32>
    %c0_43 = arith.constant 0 : index
    %c0_44 = arith.constant 0 : index
    %99 = vector.load %arg13[%c0_43, %c0_44] : memref<1x256xf32, #tpu.memory_space<vmem>>, vector<1x256xf32>
    %100 = vector.broadcast %99 : vector<1x256xf32> to vector<16x256xf32>
    %101 = arith.addf %98, %100 : vector<16x256xf32>
    %102 = arith.addf %63, %101 : vector<16x256xf32>
    %103 = vector.shape_cast %102 : vector<16x256xf32> to vector<2x8x256xf32>
    %c0_45 = arith.constant 0 : index
    %c0_46 = arith.constant 0 : index
    %c0_47 = arith.constant 0 : index
    %104 = vector.load %arg14[%c0_45, %c0_46, %c0_47] : memref<2x8x256xf32, #tpu.memory_space<vmem>>, vector<2x8x256xf32>
    tpu.vector_store %arg14[%c0_45, %c0_46, %c0_47], %103 {strides = array<i32>} : memref<2x8x256xf32, #tpu.memory_space<vmem>>, vector<2x8x256xf32>,
    return
  }
  func.func @transform_0(%arg0: i32) -> (i32, i32, i32) {
    %c0_i32 = arith.constant 0 : i32
    %c0_i32_0 = arith.constant 0 : i32
    %c0_i32_1 = arith.constant 0 : i32
    return %arg0, %c0_i32, %c0_i32_0 : i32, i32, i32
  }
  func.func @transform_1(%arg0: i32) -> (i32, i32) {
    %c0_i32 = arith.constant 0 : i32
    %c0_i32_0 = arith.constant 0 : i32
    %c0_i32_1 = arith.constant 0 : i32
    return %c0_i32, %c0_i32_0 : i32, i32
  }
  func.func @transform_2(%arg0: i32) -> (i32, i32) {
    %c0_i32 = arith.constant 0 : i32
    %c0_i32_0 = arith.constant 0 : i32
    %c0_i32_1 = arith.constant 0 : i32
    return %c0_i32, %c0_i32_0 : i32, i32
  }
  func.func @transform_3(%arg0: i32) -> (i32, i32) {
    %c0_i32 = arith.constant 0 : i32
    %c0_i32_0 = arith.constant 0 : i32
    %c0_i32_1 = arith.constant 0 : i32
    return %c0_i32, %c0_i32_0 : i32, i32
  }
  func.func @transform_4(%arg0: i32) -> (i32, i32) {
    %c0_i32 = arith.constant 0 : i32
    %c0_i32_0 = arith.constant 0 : i32
    %c0_i32_1 = arith.constant 0 : i32
    return %c0_i32, %c0_i32_0 : i32, i32
  }
  func.func @transform_5(%arg0: i32) -> (i32, i32) {
    %c0_i32 = arith.constant 0 : i32
    %c0_i32_0 = arith.constant 0 : i32
    %c0_i32_1 = arith.constant 0 : i32
    return %c0_i32, %c0_i32_0 : i32, i32
  }
  func.func @transform_6(%arg0: i32) -> (i32, i32) {
    %c0_i32 = arith.constant 0 : i32
    %c0_i32_0 = arith.constant 0 : i32
    %c0_i32_1 = arith.constant 0 : i32
    return %c0_i32, %c0_i32_0 : i32, i32
  }
  func.func @transform_7(%arg0: i32) -> (i32, i32) {
    %c0_i32 = arith.constant 0 : i32
    %c0_i32_0 = arith.constant 0 : i32
    %c0_i32_1 = arith.constant 0 : i32
    return %c0_i32, %c0_i32_0 : i32, i32
  }
  func.func @transform_8(%arg0: i32) -> (i32, i32) {
    %c0_i32 = arith.constant 0 : i32
    %c0_i32_0 = arith.constant 0 : i32
    %c0_i32_1 = arith.constant 0 : i32
    return %c0_i32, %c0_i32_0 : i32, i32
  }
  func.func @transform_9(%arg0: i32) -> (i32, i32) {
    %c0_i32 = arith.constant 0 : i32
    %c0_i32_0 = arith.constant 0 : i32
    %c0_i32_1 = arith.constant 0 : i32
    return %c0_i32, %c0_i32_0 : i32, i32
  }
  func.func @transform_10(%arg0: i32) -> (i32, i32) {
    %c0_i32 = arith.constant 0 : i32
    %c0_i32_0 = arith.constant 0 : i32
    %c0_i32_1 = arith.constant 0 : i32
    return %c0_i32, %c0_i32_0 : i32, i32
  }
  func.func @transform_11(%arg0: i32) -> (i32, i32) {
    %c0_i32 = arith.constant 0 : i32
    %c0_i32_0 = arith.constant 0 : i32
    %c0_i32_1 = arith.constant 0 : i32
    return %c0_i32, %c0_i32_0 : i32, i32
  }
  func.func @transform_12(%arg0: i32) -> (i32, i32) {
    %c0_i32 = arith.constant 0 : i32
    %c0_i32_0 = arith.constant 0 : i32
    %c0_i32_1 = arith.constant 0 : i32
    return %c0_i32, %c0_i32_0 : i32, i32
  }
  func.func @transform_13(%arg0: i32) -> (i32, i32, i32) {
    %c0_i32 = arith.constant 0 : i32
    %c0_i32_0 = arith.constant 0 : i32
    %c0_i32_1 = arith.constant 0 : i32
    return %arg0, %c0_i32, %c0_i32_0 : i32, i32, i32
  }
}

</mosaic_0001>

<llo_original>
// kernel: tpu_custom_call.1
$region0: #{tpu_custom_call.1}
  #allocation0 [shape = 'u32[]', space=smem, size = 0x4, offset = 0x4, fixed_abs, tag = 'smem constant byte address 0x4 - core index']
  #allocation1 [shape = 'u32[144,128]{1,0:T(1,128)}', space=vmem, size = 0x12000, scoped, tag = 'internal scratch']
  %s0 = inlined_call_operand.hbm [shape: f32[2,8,256], index: 0, kind: input, shape index: {}]
  %s1 = inlined_call_operand.hbm [shape: f32[1,256], index: 1, kind: input, shape index: {}]
  %s2 = inlined_call_operand.hbm [shape: f32[1,256], index: 2, kind: input, shape index: {}]
  %s3 = inlined_call_operand.hbm [shape: bf16[256,768], index: 3, kind: input, shape index: {}]
  %s4 = inlined_call_operand.vmem [shape: f32[1,768], index: 4, kind: input, shape index: {}]
  %s5 = inlined_call_operand.hbm [shape: bf16[256,256], index: 5, kind: input, shape index: {}]
  %s6 = inlined_call_operand.vmem [shape: f32[1,256], index: 6, kind: input, shape index: {}]
  %s7 = inlined_call_operand.vmem [shape: f32[1,256], index: 7, kind: input, shape index: {}]
  %s8 = inlined_call_operand.vmem [shape: f32[1,256], index: 8, kind: input, shape index: {}]
  %s9 = inlined_call_operand.hbm [shape: bf16[256,1024], index: 9, kind: input, shape index: {}]
  %s10 = inlined_call_operand.vmem [shape: f32[1,1024], index: 10, kind: input, shape index: {}]
  %s11 = inlined_call_operand.hbm [shape: bf16[1024,256], index: 11, kind: input, shape index: {}]
  %s12 = inlined_call_operand.vmem [shape: f32[1,256], index: 12, kind: input, shape index: {}]
  %s13 = inlined_call_operand.hbm [shape: f32[2,8,256], index: 13, kind: output, shape index: {}]
  %s14 = sld [smem:[#allocation0]]
  $region90: #{tpu_custom_call.1} parent=0
    _
  %s16 = ssub.s32 1, %s14
  %s17 = scalar_select 0, %s16, %s14
  $region1: #{tpu_custom_call.1} parent=0
    #allocation2 [shape = 'u8[16384]{0}', space=vmem, size = 0x4000, scoped, tag = 'input window, operand 0, single buffered']
    #allocation3 [shape = 's32[1]{0}', space=sflag, size = 0x4, scoped, tag = 'scoped memory for tpu_custom_call.1']
    #allocation4 [shape = 's32[1]{0}', space=sflag, size = 0x4, scoped, tag = 'scoped memory for tpu_custom_call.1']
    #allocation5 [shape = 'u8[1024]{0}', space=vmem, size = 0x400, scoped, tag = 'input window, operand 1, single buffered']
    #allocation6 [shape = 's32[1]{0}', space=sflag, size = 0x4, scoped, tag = 'scoped memory for tpu_custom_call.1']
    #allocation7 [shape = 'u8[1024]{0}', space=vmem, size = 0x400, scoped, tag = 'input window, operand 2, single buffered']
    #allocation8 [shape = 'u8[393216]{0}', space=vmem, size = 0x60000, scoped, tag = 'input window, operand 3, single buffered']
    #allocation9 [shape = 's32[1]{0}', space=sflag, size = 0x4, scoped, tag = 'scoped memory for tpu_custom_call.1']
    #allocation10 [shape = 'u8[131072]{0}', space=vmem, size = 0x20000, scoped, tag = 'input window, operand 5, single buffered']
    #allocation11 [shape = 'u8[524288]{0}', space=vmem, size = 0x80000, scoped, tag = 'input window, operand 9, single buffered']
    #allocation12 [shape = 's32[1]{0}', space=sflag, size = 0x4, scoped, tag = 'scoped memory for tpu_custom_call.1']
    #allocation13 [shape = 'u8[524288]{0}', space=vmem, size = 0x80000, scoped, tag = 'input window, operand 11, single buffered']
    #allocation14 [shape = 'u8[16384]{0}', space=vmem, size = 0x4000, scoped, tag = 'output window, operand 0, single buffered']
    %18 = vsyncpa [#allocation3], 0
    %19 = vsyncpa [#allocation6], 0
    %20 = vsyncpa [#allocation9], 0
    %21 = vsyncpa [#allocation12], 0
    %22 = vsyncpa [#allocation4], 0
    // Predicated region
    $region2: #{tpu_custom_call.1} parent=1 // pred_check
      _
    $region3: #{tpu_custom_call.1} parent=1 // pred_check_branch
      %24 = sbr.rel (0) target = $region5
    $region4: #{tpu_custom_call.1} parent=1 // pred_region
      %s26 = ssub.s32 512, 512
      %27 = vsyncadd [#allocation3], %s26
      %s28 = sshll.u32 [#allocation2], 4
      %s29 = int_to_ptr.vmem [resolvable:$true] %s28
      %34 = dma.hbm_to_vmem [thread:$0]  %s0, 512, %s29, [#allocation3], 256, 256, 16
    $region5: #{tpu_custom_call.1} parent=1 // pred_fallthru
      _
    // Predicated region
    $region6: #{tpu_custom_call.1} parent=1 // pred_check
      _
    $region7: #{tpu_custom_call.1} parent=1 // pred_check_branch
      %36 = sbr.rel (0) target = $region9
    $region8: #{tpu_custom_call.1} parent=1 // pred_region
      %s38 = ssub.s32 32, 32
      %39 = vsyncadd [#allocation6], %s38
      %s41 = sshll.u32 [#allocation5], 4
      %s42 = int_to_ptr.vmem [resolvable:$true] %s41
      %44 = dma.hbm_to_vmem [thread:$0]  %s1, 32, %s42, [#allocation6]
    $region9: #{tpu_custom_call.1} parent=1 // pred_fallthru
      _
    // Predicated region
    $region10: #{tpu_custom_call.1} parent=1 // pred_check
      _
    $region11: #{tpu_custom_call.1} parent=1 // pred_check_branch
      %46 = sbr.rel (0) target = $region13
    $region12: #{tpu_custom_call.1} parent=1 // pred_region
      %s48 = ssub.s32 32, 32
      %49 = vsyncadd [#allocation6], %s48
      %s51 = sshll.u32 [#allocation7], 4
      %s52 = int_to_ptr.vmem [resolvable:$true] %s51
      %54 = dma.hbm_to_vmem [thread:$0]  %s2, 32, %s52, [#allocation6]
    $region13: #{tpu_custom_call.1} parent=1 // pred_fallthru
      _
    // Predicated region
    $region14: #{tpu_custom_call.1} parent=1 // pred_check
      _
    $region15: #{tpu_custom_call.1} parent=1 // pred_check_branch
      %56 = sbr.rel (0) target = $region17
    $region16: #{tpu_custom_call.1} parent=1 // pred_region
      %s58 = ssub.s32 12288, 12288
      %59 = vsyncadd [#allocation9], %s58
      %s60 = sshll.u32 [#allocation8], 4
      %s61 = int_to_ptr.vmem [resolvable:$true] %s60
      %66 = dma.hbm_to_vmem [thread:$0]  %s3, 12288, %s61, [#allocation9], 384, 384, 24
    $region17: #{tpu_custom_call.1} parent=1 // pred_fallthru
      _
    // Predicated region
    $region18: #{tpu_custom_call.1} parent=1 // pred_check
      _
    $region19: #{tpu_custom_call.1} parent=1 // pred_check_branch
      %68 = sbr.rel (0) target = $region21
    $region20: #{tpu_custom_call.1} parent=1 // pred_region
      _
    $region21: #{tpu_custom_call.1} parent=1 // pred_fallthru
      _
    // Predicated region
    $region22: #{tpu_custom_call.1} parent=1 // pred_check
      _
    $region23: #{tpu_custom_call.1} parent=1 // pred_check_branch
      %70 = sbr.rel (0) target = $region25
    $region24: #{tpu_custom_call.1} parent=1 // pred_region
      %s72 = ssub.s32 4096, 4096
      %73 = vsyncadd [#allocation9], %s72
      %s74 = sshll.u32 [#allocation10], 4
      %s75 = int_to_ptr.vmem [resolvable:$true] %s74
      %80 = dma.hbm_to_vmem [thread:$0]  %s5, 4096, %s75, [#allocation9], 128, 128, 8
    $region25: #{tpu_custom_call.1} parent=1 // pred_fallthru
      _
    // Predicated region
    $region26: #{tpu_custom_call.1} parent=1 // pred_check
      _
    $region27: #{tpu_custom_call.1} parent=1 // pred_check_branch
      %82 = sbr.rel (0) target = $region29
    $region28: #{tpu_custom_call.1} parent=1 // pred_region
      _
    $region29: #{tpu_custom_call.1} parent=1 // pred_fallthru
      _
    // Predicated region
    $region30: #{tpu_custom_call.1} parent=1 // pred_check
      _
    $region31: #{tpu_custom_call.1} parent=1 // pred_check_branch
      %84 = sbr.rel (0) target = $region33
    $region32: #{tpu_custom_call.1} parent=1 // pred_region
      _
    $region33: #{tpu_custom_call.1} parent=1 // pred_fallthru
      _
    // Predicated region
    $region34: #{tpu_custom_call.1} parent=1 // pred_check
      _
    $region35: #{tpu_custom_call.1} parent=1 // pred_check_branch
      %86 = sbr.rel (0) target = $region37
    $region36: #{tpu_custom_call.1} parent=1 // pred_region
      _
    $region37: #{tpu_custom_call.1} parent=1 // pred_fallthru
      _
    // Predicated region
    $region38: #{tpu_custom_call.1} parent=1 // pred_check
      _
    $region39: #{tpu_custom_call.1} parent=1 // pred_check_branch
      %88 = sbr.rel (0) target = $region41
    $region40: #{tpu_custom_call.1} parent=1 // pred_region
      %s90 = ssub.s32 16384, 16384
      %91 = vsyncadd [#allocation12], %s90
      %s92 = sshll.u32 [#allocation11], 4
      %s93 = int_to_ptr.vmem [resolvable:$true] %s92
      %98 = dma.hbm_to_vmem [thread:$0]  %s9, 16384, %s93, [#allocation12], 512, 512, 32
    $region41: #{tpu_custom_call.1} parent=1 // pred_fallthru
      _
    // Predicated region
    $region42: #{tpu_custom_call.1} parent=1 // pred_check
      _
    $region43: #{tpu_custom_call.1} parent=1 // pred_check_branch
      %100 = sbr.rel (0) target = $region45
    $region44: #{tpu_custom_call.1} parent=1 // pred_region
      _
    $region45: #{tpu_custom_call.1} parent=1 // pred_fallthru
      _
    // Predicated region
    $region46: #{tpu_custom_call.1} parent=1 // pred_check
      _
    $region47: #{tpu_custom_call.1} parent=1 // pred_check_branch
      %102 = sbr.rel (0) target = $region49
    $region48: #{tpu_custom_call.1} parent=1 // pred_region
      %s104 = ssub.s32 16384, 16384
      %105 = vsyncadd [#allocation12], %s104
      %s106 = sshll.u32 [#allocation13], 4
      %s107 = int_to_ptr.vmem [resolvable:$true] %s106
      %112 = dma.hbm_to_vmem [thread:$0]  %s11, 16384, %s107, [#allocation12], 128, 128, 8
    $region49: #{tpu_custom_call.1} parent=1 // pred_fallthru
      _
    // Predicated region
    $region50: #{tpu_custom_call.1} parent=1 // pred_check
      _
    $region51: #{tpu_custom_call.1} parent=1 // pred_check_branch
      %114 = sbr.rel (0) target = $region53
    $region52: #{tpu_custom_call.1} parent=1 // pred_region
      _
    $region53: #{tpu_custom_call.1} parent=1 // pred_fallthru
      _
    // Predicated region
    $region54: #{tpu_custom_call.1} parent=1 // pred_check
      _
    $region55: #{tpu_custom_call.1} parent=1 // pred_check_branch
      %116 = sbr.rel (0) target = $region57
    $region56: #{tpu_custom_call.1} parent=1 // pred_region
      %117 = dma.done [#allocation3], 512
    $region57: #{tpu_custom_call.1} parent=1 // pred_fallthru
      _
    // Predicated region
    $region58: #{tpu_custom_call.1} parent=1 // pred_check
      _
    $region59: #{tpu_custom_call.1} parent=1 // pred_check_branch
      %119 = sbr.rel (0) target = $region61
    $region60: #{tpu_custom_call.1} parent=1 // pred_region
      %120 = dma.done [#allocation6], 32
    $region61: #{tpu_custom_call.1} parent=1 // pred_fallthru
      _
    // Predicated region
    $region62: #{tpu_custom_call.1} parent=1 // pred_check
      _
    $region63: #{tpu_custom_call.1} parent=1 // pred_check_branch
      %122 = sbr.rel (0) target = $region65
    $region64: #{tpu_custom_call.1} parent=1 // pred_region
      %123 = dma.done [#allocation6], 32
    $region65: #{tpu_custom_call.1} parent=1 // pred_fallthru
      _
    // Predicated region
    $region66: #{tpu_custom_call.1} parent=1 // pred_check
      _
    $region67: #{tpu_custom_call.1} parent=1 // pred_check_branch
      %125 = sbr.rel (0) target = $region69
    $region68: #{tpu_custom_call.1} parent=1 // pred_region
      %126 = dma.done [#allocation9], 12288
    $region69: #{tpu_custom_call.1} parent=1 // pred_fallthru
      _
    // Predicated region
    $region70: #{tpu_custom_call.1} parent=1 // pred_check
      _
    $region71: #{tpu_custom_call.1} parent=1 // pred_check_branch
      %128 = sbr.rel (0) target = $region73
    $region72: #{tpu_custom_call.1} parent=1 // pred_region
      %129 = dma.done [#allocation9], 4096
    $region73: #{tpu_custom_call.1} parent=1 // pred_fallthru
      _
    // Predicated region
    $region74: #{tpu_custom_call.1} parent=1 // pred_check
      _
    $region75: #{tpu_custom_call.1} parent=1 // pred_check_branch
      %131 = sbr.rel (0) target = $region77
    $region76: #{tpu_custom_call.1} parent=1 // pred_region
      %132 = dma.done [#allocation12], 16384
    $region77: #{tpu_custom_call.1} parent=1 // pred_fallthru
      _
    // Predicated region
    $region78: #{tpu_custom_call.1} parent=1 // pred_check
      _
    $region79: #{tpu_custom_call.1} parent=1 // pred_check_branch
      %134 = sbr.rel (0) target = $region81
    $region80: #{tpu_custom_call.1} parent=1 // pred_region
      %135 = dma.done [#allocation12], 16384
    $region81: #{tpu_custom_call.1} parent=1 // pred_fallthru
      _
    %v137 = vld [vmem:[#allocation2] sm:$0xff]
    %v138 = vld [vmem:[#allocation2 + $0x8] sm:$0xff]
    %v139 = vld [vmem:[#allocation2 + $0x10] sm:$0xff]
    %v140 = vld [vmem:[#allocation2 + $0x18] sm:$0xff]
    %v141 = vadd.f32 %v137, %v138
    %142 = vadd.xlane.f32.xlu0 %v141
    %v143 = vpop.xlane.xlu0 %142
    %v144 = vadd.f32 %v139, %v140
    %145 = vadd.xlane.f32.xlu0 %v144
    %v146 = vpop.xlane.xlu0 %145
    %v147 = vrcp.pop 256.0
    %v148 = vmul.f32 %v143, %v147
    %v149 = vmul.f32 %v146, %v147
    %v150 = vsub.f32 %v137, %v148
    %v151 = vsub.f32 %v138, %v148
    %v152 = vsub.f32 %v139, %v149
    %v153 = vsub.f32 %v140, %v149
    %v154 = vmul.f32 %v150, %v150
    %v155 = vmul.f32 %v151, %v151
    %v156 = vmul.f32 %v152, %v152
    %v157 = vmul.f32 %v153, %v153
    %v158 = vadd.f32 %v154, %v155
    %159 = vadd.xlane.f32.xlu0 %v158
    %v160 = vpop.xlane.xlu0 %159
    %v161 = vadd.f32 %v156, %v157
    %162 = vadd.xlane.f32.xlu0 %v161
    %v163 = vpop.xlane.xlu0 %162
    %v164 = vmul.f32 %v160, %v147
    %v165 = vmul.f32 %v163, %v147
    %v166 = vadd.f32 %v164, 1e-05
    %v167 = vadd.f32 %v165, 1e-05
    %v168 = vrsqrt.pop %v166
    %v169 = vrsqrt.pop %v167
    %v170 = vmul.f32 %v150, %v168
    %v171 = vmul.f32 %v151, %v168
    %v172 = vmul.f32 %v152, %v169
    %v173 = vmul.f32 %v153, %v169
    %v174 = vld [vmem:[#allocation5] sm:$0x3]
    %v176 = vlaneseq
    %v177 = vshrl.u32 %v176, 7
    %v178 = vsub.s32 0, %v177
    %v179 = vrot.slane %v174, %v178
    %v180 = vlaneseq
    %v181 = vshrl.u32 %v180, 7
    %v182 = vsub.s32 1, %v181
    %v183 = vrot.slane %v174, %v182
    %v186 = vmul.f32 %v170, %v179
    %v187 = vmul.f32 %v171, %v183
    %v188 = vmul.f32 %v172, %v179
    %v189 = vmul.f32 %v173, %v183
    %v190 = vld [vmem:[#allocation7] sm:$0x3]
    %v192 = vlaneseq
    %v193 = vshrl.u32 %v192, 7
    %v194 = vsub.s32 0, %v193
    %v195 = vrot.slane %v190, %v194
    %v196 = vlaneseq
    %v197 = vshrl.u32 %v196, 7
    %v198 = vsub.s32 1, %v197
    %v199 = vrot.slane %v190, %v198
    %v202 = vadd.f32 %v186, %v195
    %v203 = vadd.f32 %v187, %v199
    %v204 = vadd.f32 %v188, %v195
    %v205 = vadd.f32 %v189, %v199
    %v206 = vpack.c.bf16 %v204, %v202
    %v207 = vpack.c.bf16 %v205, %v203
    %v208 = vld [vmem:[#allocation8] sm:$0xff]
    %v209 = vld [vmem:[#allocation8 + $0x8] sm:$0xff]
    %v210 = vld [vmem:[#allocation8 + $0x10] sm:$0xff]
    %v211 = vld [vmem:[#allocation8 + $0x18] sm:$0xff]
    %v212 = vld [vmem:[#allocation8 + $0x20] sm:$0xff]
    %v213 = vld [vmem:[#allocation8 + $0x28] sm:$0xff]
    %v214 = vld [vmem:[#allocation8 + $0x30] sm:$0xff]
    %v215 = vld [vmem:[#allocation8 + $0x38] sm:$0xff]
    %v216 = vld [vmem:[#allocation8 + $0x40] sm:$0xff]
    %v217 = vld [vmem:[#allocation8 + $0x48] sm:$0xff]
    %v218 = vld [vmem:[#allocation8 + $0x50] sm:$0xff]
    %v219 = vld [vmem:[#allocation8 + $0x58] sm:$0xff]
    %v220 = vld [vmem:[#allocation8 + $0x60] sm:$0xff]
    %v221 = vld [vmem:[#allocation8 + $0x68] sm:$0xff]
    %v222 = vld [vmem:[#allocation8 + $0x70] sm:$0xff]
    %v223 = vld [vmem:[#allocation8 + $0x78] sm:$0xff]
    %v224 = vld [vmem:[#allocation8 + $0x80] sm:$0xff]
    %v225 = vld [vmem:[#allocation8 + $0x88] sm:$0xff]
    %v226 = vld [vmem:[#allocation8 + $0x90] sm:$0xff]
    %v227 = vld [vmem:[#allocation8 + $0x98] sm:$0xff]
    %v228 = vld [vmem:[#allocation8 + $0xa0] sm:$0xff]
    %v229 = vld [vmem:[#allocation8 + $0xa8] sm:$0xff]
    %v230 = vld [vmem:[#allocation8 + $0xb0] sm:$0xff]
    %v231 = vld [vmem:[#allocation8 + $0xb8] sm:$0xff]
    %v232 = vld [vmem:[#allocation8 + $0xc0] sm:$0xff]
    %v233 = vld [vmem:[#allocation8 + $0xc8] sm:$0xff]
    %v234 = vld [vmem:[#allocation8 + $0xd0] sm:$0xff]
    %v235 = vld [vmem:[#allocation8 + $0xd8] sm:$0xff]
    %v236 = vld [vmem:[#allocation8 + $0xe0] sm:$0xff]
    %v237 = vld [vmem:[#allocation8 + $0xe8] sm:$0xff]
    %v238 = vld [vmem:[#allocation8 + $0xf0] sm:$0xff]
    %v239 = vld [vmem:[#allocation8 + $0xf8] sm:$0xff]
    %v240 = vld [vmem:[#allocation8 + $0x100] sm:$0xff]
    %v241 = vld [vmem:[#allocation8 + $0x108] sm:$0xff]
    %v242 = vld [vmem:[#allocation8 + $0x110] sm:$0xff]
    %v243 = vld [vmem:[#allocation8 + $0x118] sm:$0xff]
    %v244 = vld [vmem:[#allocation8 + $0x120] sm:$0xff]
    %v245 = vld [vmem:[#allocation8 + $0x128] sm:$0xff]
    %v246 = vld [vmem:[#allocation8 + $0x130] sm:$0xff]
    %v247 = vld [vmem:[#allocation8 + $0x138] sm:$0xff]
    %v248 = vld [vmem:[#allocation8 + $0x140] sm:$0xff]
    %v249 = vld [vmem:[#allocation8 + $0x148] sm:$0xff]
    %v250 = vld [vmem:[#allocation8 + $0x150] sm:$0xff]
    %v251 = vld [vmem:[#allocation8 + $0x158] sm:$0xff]
    %v252 = vld [vmem:[#allocation8 + $0x160] sm:$0xff]
    %v253 = vld [vmem:[#allocation8 + $0x168] sm:$0xff]
    %v254 = vld [vmem:[#allocation8 + $0x170] sm:$0xff]
    %v255 = vld [vmem:[#allocation8 + $0x178] sm:$0xff]
    %v256 = vld [vmem:[#allocation8 + $0x180] sm:$0xff]
    %v257 = vld [vmem:[#allocation8 + $0x188] sm:$0xff]
    %v258 = vld [vmem:[#allocation8 + $0x190] sm:$0xff]
    %v259 = vld [vmem:[#allocation8 + $0x198] sm:$0xff]
    %v260 = vld [vmem:[#allocation8 + $0x1a0] sm:$0xff]
    %v261 = vld [vmem:[#allocation8 + $0x1a8] sm:$0xff]
    %v262 = vld [vmem:[#allocation8 + $0x1b0] sm:$0xff]
    %v263 = vld [vmem:[#allocation8 + $0x1b8] sm:$0xff]
    %v264 = vld [vmem:[#allocation8 + $0x1c0] sm:$0xff]
    %v265 = vld [vmem:[#allocation8 + $0x1c8] sm:$0xff]
    %v266 = vld [vmem:[#allocation8 + $0x1d0] sm:$0xff]
    %v267 = vld [vmem:[#allocation8 + $0x1d8] sm:$0xff]
    %v268 = vld [vmem:[#allocation8 + $0x1e0] sm:$0xff]
    %v269 = vld [vmem:[#allocation8 + $0x1e8] sm:$0xff]
    %v270 = vld [vmem:[#allocation8 + $0x1f0] sm:$0xff]
    %v271 = vld [vmem:[#allocation8 + $0x1f8] sm:$0xff]
    %v272 = vld [vmem:[#allocation8 + $0x200] sm:$0xff]
    %v273 = vld [vmem:[#allocation8 + $0x208] sm:$0xff]
    %v274 = vld [vmem:[#allocation8 + $0x210] sm:$0xff]
    %v275 = vld [vmem:[#allocation8 + $0x218] sm:$0xff]
    %v276 = vld [vmem:[#allocation8 + $0x220] sm:$0xff]
    %v277 = vld [vmem:[#allocation8 + $0x228] sm:$0xff]
    %v278 = vld [vmem:[#allocation8 + $0x230] sm:$0xff]
    %v279 = vld [vmem:[#allocation8 + $0x238] sm:$0xff]
    %v280 = vld [vmem:[#allocation8 + $0x240] sm:$0xff]
    %v281 = vld [vmem:[#allocation8 + $0x248] sm:$0xff]
    %v282 = vld [vmem:[#allocation8 + $0x250] sm:$0xff]
    %v283 = vld [vmem:[#allocation8 + $0x258] sm:$0xff]
    %v284 = vld [vmem:[#allocation8 + $0x260] sm:$0xff]
    %v285 = vld [vmem:[#allocation8 + $0x268] sm:$0xff]
    %v286 = vld [vmem:[#allocation8 + $0x270] sm:$0xff]
    %v287 = vld [vmem:[#allocation8 + $0x278] sm:$0xff]
    %v288 = vld [vmem:[#allocation8 + $0x280] sm:$0xff]
    %v289 = vld [vmem:[#allocation8 + $0x288] sm:$0xff]
    %v290 = vld [vmem:[#allocation8 + $0x290] sm:$0xff]
    %v291 = vld [vmem:[#allocation8 + $0x298] sm:$0xff]
    %v292 = vld [vmem:[#allocation8 + $0x2a0] sm:$0xff]
    %v293 = vld [vmem:[#allocation8 + $0x2a8] sm:$0xff]
    %v294 = vld [vmem:[#allocation8 + $0x2b0] sm:$0xff]
    %v295 = vld [vmem:[#allocation8 + $0x2b8] sm:$0xff]
    %v296 = vld [vmem:[#allocation8 + $0x2c0] sm:$0xff]
    %v297 = vld [vmem:[#allocation8 + $0x2c8] sm:$0xff]
    %v298 = vld [vmem:[#allocation8 + $0x2d0] sm:$0xff]
    %v299 = vld [vmem:[#allocation8 + $0x2d8] sm:$0xff]
    %v300 = vld [vmem:[#allocation8 + $0x2e0] sm:$0xff]
    %v301 = vld [vmem:[#allocation8 + $0x2e8] sm:$0xff]
    %v302 = vld [vmem:[#allocation8 + $0x2f0] sm:$0xff]
    %v303 = vld [vmem:[#allocation8 + $0x2f8] sm:$0xff]
    %v304 = vld [vmem:[%s4] sm:$0x3f]
    %v306 = vlaneseq
    %v307 = vshrl.u32 %v306, 7
    %v308 = vsub.s32 0, %v307
    %v309 = vrot.slane %v304, %v308
    %v310 = vlaneseq
    %v311 = vshrl.u32 %v310, 7
    %v312 = vsub.s32 1, %v311
    %v313 = vrot.slane %v304, %v312
    %v314 = vlaneseq
    %v315 = vshrl.u32 %v314, 7
    %v316 = vsub.s32 2, %v315
    %v317 = vrot.slane %v304, %v316
    %v318 = vlaneseq
    %v319 = vshrl.u32 %v318, 7
    %v320 = vsub.s32 3, %v319
    %v321 = vrot.slane %v304, %v320
    %v322 = vlaneseq
    %v323 = vshrl.u32 %v322, 7
    %v324 = vsub.s32 4, %v323
    %v325 = vrot.slane %v304, %v324
    %v326 = vlaneseq
    %v327 = vshrl.u32 %v326, 7
    %v328 = vsub.s32 5, %v327
    %v329 = vrot.slane %v304, %v328
    %v432 = vunpack.c.l.b16 %v208
    %v433 = vunpack.c.h.b16 %v208
    %v434 = vunpack.c.l.b16 %v209
    %v435 = vunpack.c.h.b16 %v209
    %v436 = vunpack.c.l.b16 %v210
    %v437 = vunpack.c.h.b16 %v210
    %v438 = vunpack.c.l.b16 %v211
    %v439 = vunpack.c.h.b16 %v211
    %v440 = vunpack.c.l.b16 %v212
    %v441 = vunpack.c.h.b16 %v212
    %v442 = vunpack.c.l.b16 %v213
    %v443 = vunpack.c.h.b16 %v213
    %v444 = vunpack.c.l.b16 %v214
    %v445 = vunpack.c.h.b16 %v214
    %v446 = vunpack.c.l.b16 %v215
    %v447 = vunpack.c.h.b16 %v215
    %v448 = vunpack.c.l.b16 %v216
    %v449 = vunpack.c.h.b16 %v216
    %v450 = vunpack.c.l.b16 %v217
    %v451 = vunpack.c.h.b16 %v217
    %v452 = vunpack.c.l.b16 %v218
    %v453 = vunpack.c.h.b16 %v218
    %v454 = vunpack.c.l.b16 %v219
    %v455 = vunpack.c.h.b16 %v219
    %v456 = vunpack.c.l.b16 %v220
    %v457 = vunpack.c.h.b16 %v220
    %v458 = vunpack.c.l.b16 %v221
    %v459 = vunpack.c.h.b16 %v221
    %v460 = vunpack.c.l.b16 %v222
    %v461 = vunpack.c.h.b16 %v222
    %v462 = vunpack.c.l.b16 %v223
    %v463 = vunpack.c.h.b16 %v223
    %v464 = vunpack.c.l.b16 %v224
    %v465 = vunpack.c.h.b16 %v224
    %v466 = vunpack.c.l.b16 %v225
    %v467 = vunpack.c.h.b16 %v225
    %v468 = vunpack.c.l.b16 %v226
    %v469 = vunpack.c.h.b16 %v226
    %v470 = vunpack.c.l.b16 %v227
    %v471 = vunpack.c.h.b16 %v227
    %v472 = vunpack.c.l.b16 %v228
    %v473 = vunpack.c.h.b16 %v228
    %v474 = vunpack.c.l.b16 %v229
    %v475 = vunpack.c.h.b16 %v229
    %v476 = vunpack.c.l.b16 %v230
    %v477 = vunpack.c.h.b16 %v230
    %v478 = vunpack.c.l.b16 %v231
    %v479 = vunpack.c.h.b16 %v231
    %v480 = vunpack.c.l.b16 %v232
    %v481 = vunpack.c.h.b16 %v232
    %v482 = vunpack.c.l.b16 %v233
    %v483 = vunpack.c.h.b16 %v233
    %v484 = vunpack.c.l.b16 %v234
    %v485 = vunpack.c.h.b16 %v234
    %v486 = vunpack.c.l.b16 %v235
    %v487 = vunpack.c.h.b16 %v235
    %v488 = vunpack.c.l.b16 %v236
    %v489 = vunpack.c.h.b16 %v236
    %v490 = vunpack.c.l.b16 %v237
    %v491 = vunpack.c.h.b16 %v237
    %v492 = vunpack.c.l.b16 %v238
    %v493 = vunpack.c.h.b16 %v238
    %v494 = vunpack.c.l.b16 %v239
    %v495 = vunpack.c.h.b16 %v239
    %v496 = vunpack.c.l.b16 %v240
    %v497 = vunpack.c.h.b16 %v240
    %v498 = vunpack.c.l.b16 %v241
    %v499 = vunpack.c.h.b16 %v241
    %v500 = vunpack.c.l.b16 %v242
    %v501 = vunpack.c.h.b16 %v242
    %v502 = vunpack.c.l.b16 %v243
    %v503 = vunpack.c.h.b16 %v243
    %v504 = vunpack.c.l.b16 %v244
    %v505 = vunpack.c.h.b16 %v244
    %v506 = vunpack.c.l.b16 %v245
    %v507 = vunpack.c.h.b16 %v245
    %v508 = vunpack.c.l.b16 %v246
    %v509 = vunpack.c.h.b16 %v246
    %v510 = vunpack.c.l.b16 %v247
    %v511 = vunpack.c.h.b16 %v247
    %v512 = vunpack.c.l.b16 %v248
    %v513 = vunpack.c.h.b16 %v248
    %v514 = vunpack.c.l.b16 %v249
    %v515 = vunpack.c.h.b16 %v249
    %v516 = vunpack.c.l.b16 %v250
    %v517 = vunpack.c.h.b16 %v250
    %v518 = vunpack.c.l.b16 %v251
    %v519 = vunpack.c.h.b16 %v251
    %v520 = vunpack.c.l.b16 %v252
    %v521 = vunpack.c.h.b16 %v252
    %v522 = vunpack.c.l.b16 %v253
    %v523 = vunpack.c.h.b16 %v253
    %v524 = vunpack.c.l.b16 %v254
    %v525 = vunpack.c.h.b16 %v254
    %v526 = vunpack.c.l.b16 %v255
    %v527 = vunpack.c.h.b16 %v255
    %v528 = vunpack.c.l.b16 %v256
    %v529 = vunpack.c.h.b16 %v256
    %v530 = vunpack.c.l.b16 %v257
    %v531 = vunpack.c.h.b16 %v257
    %v532 = vunpack.c.l.b16 %v258
    %v533 = vunpack.c.h.b16 %v258
    %v534 = vunpack.c.l.b16 %v259
    %v535 = vunpack.c.h.b16 %v259
    %v536 = vunpack.c.l.b16 %v260
    %v537 = vunpack.c.h.b16 %v260
    %v538 = vunpack.c.l.b16 %v261
    %v539 = vunpack.c.h.b16 %v261
    %v540 = vunpack.c.l.b16 %v262
    %v541 = vunpack.c.h.b16 %v262
    %v542 = vunpack.c.l.b16 %v263
    %v543 = vunpack.c.h.b16 %v263
    %v544 = vunpack.c.l.b16 %v264
    %v545 = vunpack.c.h.b16 %v264
    %v546 = vunpack.c.l.b16 %v265
    %v547 = vunpack.c.h.b16 %v265
    %v548 = vunpack.c.l.b16 %v266
    %v549 = vunpack.c.h.b16 %v266
    %v550 = vunpack.c.l.b16 %v267
    %v551 = vunpack.c.h.b16 %v267
    %v552 = vunpack.c.l.b16 %v268
    %v553 = vunpack.c.h.b16 %v268
    %v554 = vunpack.c.l.b16 %v269
    %v555 = vunpack.c.h.b16 %v269
    %v556 = vunpack.c.l.b16 %v270
    %v557 = vunpack.c.h.b16 %v270
    %v558 = vunpack.c.l.b16 %v271
    %v559 = vunpack.c.h.b16 %v271
    %v560 = vunpack.c.l.b16 %v272
    %v561 = vunpack.c.h.b16 %v272
    %v562 = vunpack.c.l.b16 %v273
    %v563 = vunpack.c.h.b16 %v273
    %v564 = vunpack.c.l.b16 %v274
    %v565 = vunpack.c.h.b16 %v274
    %v566 = vunpack.c.l.b16 %v275
    %v567 = vunpack.c.h.b16 %v275
    %v568 = vunpack.c.l.b16 %v276
    %v569 = vunpack.c.h.b16 %v276
    %v570 = vunpack.c.l.b16 %v277
    %v571 = vunpack.c.h.b16 %v277
    %v572 = vunpack.c.l.b16 %v278
    %v573 = vunpack.c.h.b16 %v278
    %v574 = vunpack.c.l.b16 %v279
    %v575 = vunpack.c.h.b16 %v279
    %v576 = vunpack.c.l.b16 %v280
    %v577 = vunpack.c.h.b16 %v280
    %v578 = vunpack.c.l.b16 %v281
    %v579 = vunpack.c.h.b16 %v281
    %v580 = vunpack.c.l.b16 %v282
    %v581 = vunpack.c.h.b16 %v282
    %v582 = vunpack.c.l.b16 %v283
    %v583 = vunpack.c.h.b16 %v283
    %v584 = vunpack.c.l.b16 %v284
    %v585 = vunpack.c.h.b16 %v284
    %v586 = vunpack.c.l.b16 %v285
    %v587 = vunpack.c.h.b16 %v285
    %v588 = vunpack.c.l.b16 %v286
    %v589 = vunpack.c.h.b16 %v286
    %v590 = vunpack.c.l.b16 %v287
    %v591 = vunpack.c.h.b16 %v287
    %v592 = vunpack.c.l.b16 %v288
    %v593 = vunpack.c.h.b16 %v288
    %v594 = vunpack.c.l.b16 %v289
    %v595 = vunpack.c.h.b16 %v289
    %v596 = vunpack.c.l.b16 %v290
    %v597 = vunpack.c.h.b16 %v290
    %v598 = vunpack.c.l.b16 %v291
    %v599 = vunpack.c.h.b16 %v291
    %v600 = vunpack.c.l.b16 %v292
    %v601 = vunpack.c.h.b16 %v292
    %v602 = vunpack.c.l.b16 %v293
    %v603 = vunpack.c.h.b16 %v293
    %v604 = vunpack.c.l.b16 %v294
    %v605 = vunpack.c.h.b16 %v294
    %v606 = vunpack.c.l.b16 %v295
    %v607 = vunpack.c.h.b16 %v295
    %v608 = vunpack.c.l.b16 %v296
    %v609 = vunpack.c.h.b16 %v296
    %v610 = vunpack.c.l.b16 %v297
    %v611 = vunpack.c.h.b16 %v297
    %v612 = vunpack.c.l.b16 %v298
    %v613 = vunpack.c.h.b16 %v298
    %v614 = vunpack.c.l.b16 %v299
    %v615 = vunpack.c.h.b16 %v299
    %v616 = vunpack.c.l.b16 %v300
    %v617 = vunpack.c.h.b16 %v300
    %v618 = vunpack.c.l.b16 %v301
    %v619 = vunpack.c.h.b16 %v301
    %v620 = vunpack.c.l.b16 %v302
    %v621 = vunpack.c.h.b16 %v302
    %v622 = vunpack.c.l.b16 %v303
    %v623 = vunpack.c.h.b16 %v303
    %v624 = vpack.c.b16 %v438, %v432
    %v625 = vpack.c.b16 %v439, %v433
    %v626 = vpack.c.b16 %v440, %v434
    %v627 = vpack.c.b16 %v441, %v435
    %v628 = vpack.c.b16 %v442, %v436
    %v629 = vpack.c.b16 %v443, %v437
    %v630 = vpack.c.b16 %v450, %v444
    %v631 = vpack.c.b16 %v451, %v445
    %v632 = vpack.c.b16 %v452, %v446
    %v633 = vpack.c.b16 %v453, %v447
    %v634 = vpack.c.b16 %v454, %v448
    %v635 = vpack.c.b16 %v455, %v449
    %v636 = vpack.c.b16 %v462, %v456
    %v637 = vpack.c.b16 %v463, %v457
    %v638 = vpack.c.b16 %v464, %v458
    %v639 = vpack.c.b16 %v465, %v459
    %v640 = vpack.c.b16 %v466, %v460
    %v641 = vpack.c.b16 %v467, %v461
    %v642 = vpack.c.b16 %v474, %v468
    %v643 = vpack.c.b16 %v475, %v469
    %v644 = vpack.c.b16 %v476, %v470
    %v645 = vpack.c.b16 %v477, %v471
    %v646 = vpack.c.b16 %v478, %v472
    %v647 = vpack.c.b16 %v479, %v473
    %v648 = vpack.c.b16 %v486, %v480
    %v649 = vpack.c.b16 %v487, %v481
    %v650 = vpack.c.b16 %v488, %v482
    %v651 = vpack.c.b16 %v489, %v483
    %v652 = vpack.c.b16 %v490, %v484
    %v653 = vpack.c.b16 %v491, %v485
    %v654 = vpack.c.b16 %v498, %v492
    %v655 = vpack.c.b16 %v499, %v493
    %v656 = vpack.c.b16 %v500, %v494
    %v657 = vpack.c.b16 %v501, %v495
    %v658 = vpack.c.b16 %v502, %v496
    %v659 = vpack.c.b16 %v503, %v497
    %v660 = vpack.c.b16 %v510, %v504
    %v661 = vpack.c.b16 %v511, %v505
    %v662 = vpack.c.b16 %v512, %v506
    %v663 = vpack.c.b16 %v513, %v507
    %v664 = vpack.c.b16 %v514, %v508
    %v665 = vpack.c.b16 %v515, %v509
    %v666 = vpack.c.b16 %v522, %v516
    %v667 = vpack.c.b16 %v523, %v517
    %v668 = vpack.c.b16 %v524, %v518
    %v669 = vpack.c.b16 %v525, %v519
    %v670 = vpack.c.b16 %v526, %v520
    %v671 = vpack.c.b16 %v527, %v521
    %v672 = vpack.c.b16 %v534, %v528
    %v673 = vpack.c.b16 %v535, %v529
    %v674 = vpack.c.b16 %v536, %v530
    %v675 = vpack.c.b16 %v537, %v531
    %v676 = vpack.c.b16 %v538, %v532
    %v677 = vpack.c.b16 %v539, %v533
    %v678 = vpack.c.b16 %v546, %v540
    %v679 = vpack.c.b16 %v547, %v541
    %v680 = vpack.c.b16 %v548, %v542
    %v681 = vpack.c.b16 %v549, %v543
    %v682 = vpack.c.b16 %v550, %v544
    %v683 = vpack.c.b16 %v551, %v545
    %v684 = vpack.c.b16 %v558, %v552
    %v685 = vpack.c.b16 %v559, %v553
    %v686 = vpack.c.b16 %v560, %v554
    %v687 = vpack.c.b16 %v561, %v555
    %v688 = vpack.c.b16 %v562, %v556
    %v689 = vpack.c.b16 %v563, %v557
    %v690 = vpack.c.b16 %v570, %v564
    %v691 = vpack.c.b16 %v571, %v565
    %v692 = vpack.c.b16 %v572, %v566
    %v693 = vpack.c.b16 %v573, %v567
    %v694 = vpack.c.b16 %v574, %v568
    %v695 = vpack.c.b16 %v575, %v569
    %v696 = vpack.c.b16 %v582, %v576
    %v697 = vpack.c.b16 %v583, %v577
    %v698 = vpack.c.b16 %v584, %v578
    %v699 = vpack.c.b16 %v585, %v579
    %v700 = vpack.c.b16 %v586, %v580
    %v701 = vpack.c.b16 %v587, %v581
    %v702 = vpack.c.b16 %v594, %v588
    %v703 = vpack.c.b16 %v595, %v589
    %v704 = vpack.c.b16 %v596, %v590
    %v705 = vpack.c.b16 %v597, %v591
    %v706 = vpack.c.b16 %v598, %v592
    %v707 = vpack.c.b16 %v599, %v593
    %v708 = vpack.c.b16 %v606, %v600
    %v709 = vpack.c.b16 %v607, %v601
    %v710 = vpack.c.b16 %v608, %v602
    %v711 = vpack.c.b16 %v609, %v603
    %v712 = vpack.c.b16 %v610, %v604
    %v713 = vpack.c.b16 %v611, %v605
    %v714 = vpack.c.b16 %v618, %v612
    %v715 = vpack.c.b16 %v619, %v613
    %v716 = vpack.c.b16 %v620, %v614
    %v717 = vpack.c.b16 %v621, %v615
    %v718 = vpack.c.b16 %v622, %v616
    %v719 = vpack.c.b16 %v623, %v617
    %816 = vmatprep.subr.bf16.mxu0 %v625
    %817 = vmatpush1.bf16.msra.mxu0 %v624
    %818 = vmatprep.subr.bf16.mxu0 %v631
    %819 = vmatpush1.bf16.msra.mxu0 %v630
    %820 = vmatprep.subr.bf16.mxu0 %v637
    %821 = vmatpush1.bf16.msra.mxu0 %v636
    %822 = vmatprep.subr.bf16.mxu0 %v643
    %823 = vmatpush1.bf16.msra.mxu0 %v642
    %824 = vmatprep.subr.bf16.mxu0 %v649
    %825 = vmatpush1.bf16.msra.mxu0 %v648
    %826 = vmatprep.subr.bf16.mxu0 %v655
    %827 = vmatpush1.bf16.msra.mxu0 %v654
    %828 = vmatprep.subr.bf16.mxu0 %v661
    %829 = vmatpush1.bf16.msra.mxu0 %v660
    %830 = vmatprep.subr.bf16.mxu0 %v667
    %831 = vmatpush1.bf16.msra.mxu0 %v666
    %832 = vmatprep.subr.bf16.mxu0 %v673
    %833 = vmatpush1.bf16.msra.mxu0 %v672
    %834 = vmatprep.subr.bf16.mxu0 %v679
    %835 = vmatpush1.bf16.msra.mxu0 %v678
    %836 = vmatprep.subr.bf16.mxu0 %v685
    %837 = vmatpush1.bf16.msra.mxu0 %v684
    %838 = vmatprep.subr.bf16.mxu0 %v691
    %839 = vmatpush1.bf16.msra.mxu0 %v690
    %840 = vmatprep.subr.bf16.mxu0 %v697
    %841 = vmatpush1.bf16.msra.mxu0 %v696
    %842 = vmatprep.subr.bf16.mxu0 %v703
    %843 = vmatpush1.bf16.msra.mxu0 %v702
    %844 = vmatprep.subr.bf16.mxu0 %v709
    %845 = vmatpush1.bf16.msra.mxu0 %v708
    %846 = vmatprep.subr.bf16.mxu0 %v715
    %847 = vmatpush1.bf16.msra.mxu0 %v714
    %848 = vmatprep.mubr.bf16.mxu0 %v207
    %849 = vmatmul.mubr.bf16.gmra.mrb[0].mxu0 %v206
    %v850 = vpop.f32.mrb[0].mxu0
    %v851 = vadd.f32 %v309, %v850
    %v852 = vpop.f32.mrb[0].mxu0
    %v853 = vadd.f32 %v313, %v852
    %v854 = vpop.f32.mrb[0].mxu0
    %v855 = vadd.f32 %v309, %v854
    %v856 = vpop.f32.mrb[0].mxu0
    %v857 = vadd.f32 %v313, %v856
    %858 = vdwg.mxu0
    %859 = vmatprep.subr.bf16.mxu0 %v627
    %860 = vmatpush1.bf16.msra.mxu0 %v626
    %861 = vmatprep.subr.bf16.mxu0 %v633
    %862 = vmatpush1.bf16.msra.mxu0 %v632
    %863 = vmatprep.subr.bf16.mxu0 %v639
    %864 = vmatpush1.bf16.msra.mxu0 %v638
    %865 = vmatprep.subr.bf16.mxu0 %v645
    %866 = vmatpush1.bf16.msra.mxu0 %v644
    %867 = vmatprep.subr.bf16.mxu0 %v651
    %868 = vmatpush1.bf16.msra.mxu0 %v650
    %869 = vmatprep.subr.bf16.mxu0 %v657
    %870 = vmatpush1.bf16.msra.mxu0 %v656
    %871 = vmatprep.subr.bf16.mxu0 %v663
    %872 = vmatpush1.bf16.msra.mxu0 %v662
    %873 = vmatprep.subr.bf16.mxu0 %v669
    %874 = vmatpush1.bf16.msra.mxu0 %v668
    %875 = vmatprep.subr.bf16.mxu0 %v675
    %876 = vmatpush1.bf16.msra.mxu0 %v674
    %877 = vmatprep.subr.bf16.mxu0 %v681
    %878 = vmatpush1.bf16.msra.mxu0 %v680
    %879 = vmatprep.subr.bf16.mxu0 %v687
    %880 = vmatpush1.bf16.msra.mxu0 %v686
    %881 = vmatprep.subr.bf16.mxu0 %v693
    %882 = vmatpush1.bf16.msra.mxu0 %v692
    %883 = vmatprep.subr.bf16.mxu0 %v699
    %884 = vmatpush1.bf16.msra.mxu0 %v698
    %885 = vmatprep.subr.bf16.mxu0 %v705
    %886 = vmatpush1.bf16.msra.mxu0 %v704
    %887 = vmatprep.subr.bf16.mxu0 %v711
    %888 = vmatpush1.bf16.msra.mxu0 %v710
    %889 = vmatprep.subr.bf16.mxu0 %v717
    %890 = vmatpush1.bf16.msra.mxu0 %v716
    %891 = vmatprep.mubr.bf16.mxu0 %v207
    %892 = vmatmul.mubr.bf16.gmra.mrb[0].mxu0 %v206
    %v893 = vpop.f32.mrb[0].mxu0
    %v894 = vadd.f32 %v317, %v893
    %v895 = vpop.f32.mrb[0].mxu0
    %v896 = vadd.f32 %v321, %v895
    %v897 = vpop.f32.mrb[0].mxu0
    %v898 = vadd.f32 %v317, %v897
    %v899 = vpop.f32.mrb[0].mxu0
    %v900 = vadd.f32 %v321, %v899
    %901 = vdwg.mxu0
    %902 = vmatprep.subr.bf16.mxu0 %v629
    %903 = vmatpush1.bf16.msra.mxu0 %v628
    %904 = vmatprep.subr.bf16.mxu0 %v635
    %905 = vmatpush1.bf16.msra.mxu0 %v634
    %906 = vmatprep.subr.bf16.mxu0 %v641
    %907 = vmatpush1.bf16.msra.mxu0 %v640
    %908 = vmatprep.subr.bf16.mxu0 %v647
    %909 = vmatpush1.bf16.msra.mxu0 %v646
    %910 = vmatprep.subr.bf16.mxu0 %v653
    %911 = vmatpush1.bf16.msra.mxu0 %v652
    %912 = vmatprep.subr.bf16.mxu0 %v659
    %913 = vmatpush1.bf16.msra.mxu0 %v658
    %914 = vmatprep.subr.bf16.mxu0 %v665
    %915 = vmatpush1.bf16.msra.mxu0 %v664
    %916 = vmatprep.subr.bf16.mxu0 %v671
    %917 = vmatpush1.bf16.msra.mxu0 %v670
    %918 = vmatprep.subr.bf16.mxu0 %v677
    %919 = vmatpush1.bf16.msra.mxu0 %v676
    %920 = vmatprep.subr.bf16.mxu0 %v683
    %921 = vmatpush1.bf16.msra.mxu0 %v682
    %922 = vmatprep.subr.bf16.mxu0 %v689
    %923 = vmatpush1.bf16.msra.mxu0 %v688
    %924 = vmatprep.subr.bf16.mxu0 %v695
    %925 = vmatpush1.bf16.msra.mxu0 %v694
    %926 = vmatprep.subr.bf16.mxu0 %v701
    %927 = vmatpush1.bf16.msra.mxu0 %v700
    %928 = vmatprep.subr.bf16.mxu0 %v707
    %929 = vmatpush1.bf16.msra.mxu0 %v706
    %930 = vmatprep.subr.bf16.mxu0 %v713
    %931 = vmatpush1.bf16.msra.mxu0 %v712
    %932 = vmatprep.subr.bf16.mxu0 %v719
    %933 = vmatpush1.bf16.msra.mxu0 %v718
    %934 = vmatprep.mubr.bf16.mxu0 %v207
    %935 = vmatmul.mubr.bf16.gmra.mrb[0].mxu0 %v206
    %v936 = vpop.f32.mrb[0].mxu0
    %v937 = vadd.f32 %v325, %v936
    %v938 = vpop.f32.mrb[0].mxu0
    %v939 = vadd.f32 %v329, %v938
    %v940 = vpop.f32.mrb[0].mxu0
    %v941 = vadd.f32 %v325, %v940
    %v942 = vpop.f32.mrb[0].mxu0
    %v943 = vadd.f32 %v329, %v942
    %944 = vdwg.mxu0
    %v945 = vpack.c.bf16 %v851, %v851
    %v946 = vpack.c.bf16 %v853, %v853
    %v947 = vpack.c.bf16 %v855, %v855
    %v948 = vpack.c.bf16 %v857, %v857
    %v949 = vpack.c.bf16 %v894, %v894
    %v950 = vpack.c.bf16 %v896, %v896
    %v951 = vpack.c.bf16 %v898, %v898
    %v952 = vpack.c.bf16 %v900, %v900
    %v953 = vpack.c.bf16 %v937, %v937
    %v954 = vpack.c.bf16 %v939, %v939
    %v955 = vpack.c.bf16 %v941, %v941
    %v956 = vpack.c.bf16 %v943, %v943
    %957 = vmatprep.subr.bf16.mxu0 %v950
    %958 = vmatpush1.bf16.xpose.msra.mxu0 %v949
    %959 = vmatprep.subr.bf16.mxu0 0
    %960 = vmatpush1.bf16.xpose.msra.mxu0 0
    %961 = vmatprep.subr.bf16.mxu0 0
    %962 = vmatpush1.bf16.xpose.msra.mxu0 0
    %963 = vmatprep.subr.bf16.mxu0 0
    %964 = vmatpush1.bf16.xpose.msra.mxu0 0
    %965 = vmatprep.subr.bf16.mxu0 0
    %966 = vmatpush1.bf16.xpose.msra.mxu0 0
    %967 = vmatprep.subr.bf16.mxu0 0
    %968 = vmatpush1.bf16.xpose.msra.mxu0 0
    %969 = vmatprep.subr.bf16.mxu0 0
    %970 = vmatpush1.bf16.xpose.msra.mxu0 0
    %971 = vmatprep.subr.bf16.mxu0 0
    %972 = vmatpush1.bf16.xpose.msra.mxu0 0
    %973 = vmatprep.subr.bf16.mxu0 0
    %974 = vmatpush1.bf16.xpose.msra.mxu0 0
    %975 = vmatprep.subr.bf16.mxu0 0
    %976 = vmatpush1.bf16.xpose.msra.mxu0 0
    %977 = vmatprep.subr.bf16.mxu0 0
    %978 = vmatpush1.bf16.xpose.msra.mxu0 0
    %979 = vmatprep.subr.bf16.mxu0 0
    %980 = vmatpush1.bf16.xpose.msra.mxu0 0
    %981 = vmatprep.subr.bf16.mxu0 0
    %982 = vmatpush1.bf16.xpose.msra.mxu0 0
    %983 = vmatprep.subr.bf16.mxu0 0
    %984 = vmatpush1.bf16.xpose.msra.mxu0 0
    %985 = vmatprep.subr.bf16.mxu0 0
    %986 = vmatpush1.bf16.xpose.msra.mxu0 0
    %987 = vmatprep.subr.bf16.mxu0 0
    %988 = vmatpush1.bf16.xpose.msra.mxu0 0
    %989 = vmatprep.mubr.bf16.mxu0 %v946
    %990 = vmatmul.mubr.bf16.gmra.mrb[0].mxu0 %v945
    %v991 = vpop.f32.mrb[0].mxu0
    %v992 = vadd.f32 0.0, %v991
    %v993 = vpop.f32.mrb[0].mxu0
    %v994 = vpop.f32.mrb[0].mxu0
    %v995 = vpop.f32.mrb[0].mxu0
    %996 = vdwg.mxu0
    %997 = vmatprep.subr.bf16.mxu0 %v952
    %998 = vmatpush1.bf16.xpose.msra.mxu0 %v951
    %999 = vmatprep.subr.bf16.mxu0 0
    %1000 = vmatpush1.bf16.xpose.msra.mxu0 0
    %1001 = vmatprep.subr.bf16.mxu0 0
    %1002 = vmatpush1.bf16.xpose.msra.mxu0 0
    %1003 = vmatprep.subr.bf16.mxu0 0
    %1004 = vmatpush1.bf16.xpose.msra.mxu0 0
    %1005 = vmatprep.subr.bf16.mxu0 0
    %1006 = vmatpush1.bf16.xpose.msra.mxu0 0
    %1007 = vmatprep.subr.bf16.mxu0 0
    %1008 = vmatpush1.bf16.xpose.msra.mxu0 0
    %1009 = vmatprep.subr.bf16.mxu0 0
    %1010 = vmatpush1.bf16.xpose.msra.mxu0 0
    %1011 = vmatprep.subr.bf16.mxu0 0
    %1012 = vmatpush1.bf16.xpose.msra.mxu0 0
    %1013 = vmatprep.subr.bf16.mxu0 0
    %1014 = vmatpush1.bf16.xpose.msra.mxu0 0
    %1015 = vmatprep.subr.bf16.mxu0 0
    %1016 = vmatpush1.bf16.xpose.msra.mxu0 0
    %1017 = vmatprep.subr.bf16.mxu0 0
    %1018 = vmatpush1.bf16.xpose.msra.mxu0 0
    %1019 = vmatprep.subr.bf16.mxu0 0
    %1020 = vmatpush1.bf16.xpose.msra.mxu0 0
    %1021 = vmatprep.subr.bf16.mxu0 0
    %1022 = vmatpush1.bf16.xpose.msra.mxu0 0
    %1023 = vmatprep.subr.bf16.mxu0 0
    %1024 = vmatpush1.bf16.xpose.msra.mxu0 0
    %1025 = vmatprep.subr.bf16.mxu0 0
    %1026 = vmatpush1.bf16.xpose.msra.mxu0 0
    %1027 = vmatprep.subr.bf16.mxu0 0
    %1028 = vmatpush1.bf16.xpose.msra.mxu0 0
    %1029 = vmatprep.mubr.bf16.mxu0 %v948
    %1030 = vmatmul.mubr.bf16.gmra.mrb[0].mxu0 %v947
    %v1031 = vpop.f32.mrb[0].mxu0
    %v1032 = vadd.f32 0.0, %v1031
    %v1033 = vpop.f32.mrb[0].mxu0
    %v1034 = vpop.f32.mrb[0].mxu0
    %v1035 = vpop.f32.mrb[0].mxu0
    %1036 = vdwg.mxu0
    %v1037 = vmul.f32 %v992, 0.0625
    %v1038 = vmul.f32 %v1032, 0.0625
    %vm1039 = vcmask 64512
    %v1040 = vsel %vm1039, %v1037, -inf
    %1041 = vmax.xlane.f32.xlu0 %v1040
    %v1042 = vpop.xlane.xlu0 %1041
    %v1043 = vsel %vm1039, %v1038, -inf
    %1044 = vmax.xlane.f32.xlu0 %v1043
    %v1045 = vpop.xlane.xlu0 %1044
    %v1046 = vsub.f32 %v1037, %v1042
    %v1047 = vsub.f32 %v1038, %v1045
    %v1048 = vmul.f32 %v1046, 1.442695
    %v1049 = vpow.pop %v1048
    %v1050 = vmul.f32 %v1047, 1.442695
    %v1051 = vpow.pop %v1050
    %v1052 = vsel %vm1039, %v1049, 0.0
    %1053 = vadd.xlane.f32.xlu0 %v1052
    %v1054 = vpop.xlane.xlu0 %1053
    %v1055 = vsel %vm1039, %v1051, 0.0
    %1056 = vadd.xlane.f32.xlu0 %v1055
    %v1057 = vpop.xlane.xlu0 %1056
    %v1058 = vrcp.pop %v1054
    %v1059 = vrcp.pop %v1057
    %v1060 = vmul.f32 %v1049, %v1058
    %v1061 = vmul.f32 %v1051, %v1059
    %v1062 = vpack.c.bf16 %v1060, %v1060
    %v1063 = vpack.c.bf16 %v1061, %v1061
    %v1065 = vsel %vm1039, %v1062, 0
    %vm1067 = vcmask 1043456
    %v1069 = vsel %vm1067, %v953, 0
    %v1072 = vsel %vm1067, %v954, 0
    %1074 = vmatprep.subr.bf16.mxu0 %v1072
    %1075 = vmatpush1.bf16.msra.mxu0 %v1069
    %1076 = vmatprep.subr.bf16.mxu0 0
    %1077 = vmatpush1.bf16.msra.mxu0 0
    %1078 = vmatprep.subr.bf16.mxu0 0
    %1079 = vmatpush1.bf16.msra.mxu0 0
    %1080 = vmatprep.subr.bf16.mxu0 0
    %1081 = vmatpush1.bf16.msra.mxu0 0
    %1082 = vmatprep.subr.bf16.mxu0 0
    %1083 = vmatpush1.bf16.msra.mxu0 0
    %1084 = vmatprep.subr.bf16.mxu0 0
    %1085 = vmatpush1.bf16.msra.mxu0 0
    %1086 = vmatprep.subr.bf16.mxu0 0
    %1087 = vmatpush1.bf16.msra.mxu0 0
    %1088 = vmatprep.subr.bf16.mxu0 0
    %1089 = vmatpush1.bf16.msra.mxu0 0
    %1090 = vmatprep.subr.bf16.mxu0 0
    %1091 = vmatpush1.bf16.msra.mxu0 0
    %1092 = vmatprep.subr.bf16.mxu0 0
    %1093 = vmatpush1.bf16.msra.mxu0 0
    %1094 = vmatprep.subr.bf16.mxu0 0
    %1095 = vmatpush1.bf16.msra.mxu0 0
    %1096 = vmatprep.subr.bf16.mxu0 0
    %1097 = vmatpush1.bf16.msra.mxu0 0
    %1098 = vmatprep.subr.bf16.mxu0 0
    %1099 = vmatpush1.bf16.msra.mxu0 0
    %1100 = vmatprep.subr.bf16.mxu0 0
    %1101 = vmatpush1.bf16.msra.mxu0 0
    %1102 = vmatprep.subr.bf16.mxu0 0
    %1103 = vmatpush1.bf16.msra.mxu0 0
    %1104 = vmatprep.subr.bf16.mxu0 0
    %1105 = vmatpush1.bf16.msra.mxu0 0
    %1106 = vmatprep.mubr.bf16.mxu0 0
    %1107 = vmatmul.mubr.bf16.gmra.mrb[0].mxu0 %v1065
    %v1108 = vpop.f32.mrb[0].mxu0
    %v1109 = vadd.f32 0.0, %v1108
    %v1110 = vpop.f32.mrb[0].mxu0
    %v1111 = vadd.f32 0.0, %v1110
    %v1112 = vpop.f32.mrb[0].mxu0
    %v1113 = vpop.f32.mrb[0].mxu0
    %1114 = vdwg.mxu0
    %v1116 = vsel %vm1039, %v1063, 0
    %v1119 = vsel %vm1067, %v955, 0
    %v1122 = vsel %vm1067, %v956, 0
    %1124 = vmatprep.subr.bf16.mxu0 %v1122
    %1125 = vmatpush1.bf16.msra.mxu0 %v1119
    %1126 = vmatprep.subr.bf16.mxu0 0
    %1127 = vmatpush1.bf16.msra.mxu0 0
    %1128 = vmatprep.subr.bf16.mxu0 0
    %1129 = vmatpush1.bf16.msra.mxu0 0
    %1130 = vmatprep.subr.bf16.mxu0 0
    %1131 = vmatpush1.bf16.msra.mxu0 0
    %1132 = vmatprep.subr.bf16.mxu0 0
    %1133 = vmatpush1.bf16.msra.mxu0 0
    %1134 = vmatprep.subr.bf16.mxu0 0
    %1135 = vmatpush1.bf16.msra.mxu0 0
    %1136 = vmatprep.subr.bf16.mxu0 0
    %1137 = vmatpush1.bf16.msra.mxu0 0
    %1138 = vmatprep.subr.bf16.mxu0 0
    %1139 = vmatpush1.bf16.msra.mxu0 0
    %1140 = vmatprep.subr.bf16.mxu0 0
    %1141 = vmatpush1.bf16.msra.mxu0 0
    %1142 = vmatprep.subr.bf16.mxu0 0
    %1143 = vmatpush1.bf16.msra.mxu0 0
    %1144 = vmatprep.subr.bf16.mxu0 0
    %1145 = vmatpush1.bf16.msra.mxu0 0
    %1146 = vmatprep.subr.bf16.mxu0 0
    %1147 = vmatpush1.bf16.msra.mxu0 0
    %1148 = vmatprep.subr.bf16.mxu0 0
    %1149 = vmatpush1.bf16.msra.mxu0 0
    %1150 = vmatprep.subr.bf16.mxu0 0
    %1151 = vmatpush1.bf16.msra.mxu0 0
    %1152 = vmatprep.subr.bf16.mxu0 0
    %1153 = vmatpush1.bf16.msra.mxu0 0
    %1154 = vmatprep.subr.bf16.mxu0 0
    %1155 = vmatpush1.bf16.msra.mxu0 0
    %1156 = vmatprep.mubr.bf16.mxu0 0
    %1157 = vmatmul.mubr.bf16.gmra.mrb[0].mxu0 %v1116
    %v1158 = vpop.f32.mrb[0].mxu0
    %v1159 = vadd.f32 0.0, %v1158
    %v1160 = vpop.f32.mrb[0].mxu0
    %v1161 = vadd.f32 0.0, %v1160
    %v1162 = vpop.f32.mrb[0].mxu0
    %v1163 = vpop.f32.mrb[0].mxu0
    %1164 = vdwg.mxu0
    %v1165 = vpack.c.bf16 %v1159, %v1109
    %v1166 = vpack.c.bf16 %v1161, %v1111
    %v1167 = vld [vmem:[#allocation10] sm:$0xff]
    %v1168 = vld [vmem:[#allocation10 + $0x8] sm:$0xff]
    %v1169 = vld [vmem:[#allocation10 + $0x10] sm:$0xff]
    %v1170 = vld [vmem:[#allocation10 + $0x18] sm:$0xff]
    %v1171 = vld [vmem:[#allocation10 + $0x20] sm:$0xff]
    %v1172 = vld [vmem:[#allocation10 + $0x28] sm:$0xff]
    %v1173 = vld [vmem:[#allocation10 + $0x30] sm:$0xff]
    %v1174 = vld [vmem:[#allocation10 + $0x38] sm:$0xff]
    %v1175 = vld [vmem:[#allocation10 + $0x40] sm:$0xff]
    %v1176 = vld [vmem:[#allocation10 + $0x48] sm:$0xff]
    %v1177 = vld [vmem:[#allocation10 + $0x50] sm:$0xff]
    %v1178 = vld [vmem:[#allocation10 + $0x58] sm:$0xff]
    %v1179 = vld [vmem:[#allocation10 + $0x60] sm:$0xff]
    %v1180 = vld [vmem:[#allocation10 + $0x68] sm:$0xff]
    %v1181 = vld [vmem:[#allocation10 + $0x70] sm:$0xff]
    %v1182 = vld [vmem:[#allocation10 + $0x78] sm:$0xff]
    %v1183 = vld [vmem:[#allocation10 + $0x80] sm:$0xff]
    %v1184 = vld [vmem:[#allocation10 + $0x88] sm:$0xff]
    %v1185 = vld [vmem:[#allocation10 + $0x90] sm:$0xff]
    %v1186 = vld [vmem:[#allocation10 + $0x98] sm:$0xff]
    %v1187 = vld [vmem:[#allocation10 + $0xa0] sm:$0xff]
    %v1188 = vld [vmem:[#allocation10 + $0xa8] sm:$0xff]
    %v1189 = vld [vmem:[#allocation10 + $0xb0] sm:$0xff]
    %v1190 = vld [vmem:[#allocation10 + $0xb8] sm:$0xff]
    %v1191 = vld [vmem:[#allocation10 + $0xc0] sm:$0xff]
    %v1192 = vld [vmem:[#allocation10 + $0xc8] sm:$0xff]
    %v1193 = vld [vmem:[#allocation10 + $0xd0] sm:$0xff]
    %v1194 = vld [vmem:[#allocation10 + $0xd8] sm:$0xff]
    %v1195 = vld [vmem:[#allocation10 + $0xe0] sm:$0xff]
    %v1196 = vld [vmem:[#allocation10 + $0xe8] sm:$0xff]
    %v1197 = vld [vmem:[#allocation10 + $0xf0] sm:$0xff]
    %v1198 = vld [vmem:[#allocation10 + $0xf8] sm:$0xff]
    %v1199 = vld [vmem:[%s6] sm:$0x3]
    %v1201 = vlaneseq
    %v1202 = vshrl.u32 %v1201, 7
    %v1203 = vsub.s32 0, %v1202
    %v1204 = vrot.slane %v1199, %v1203
    %v1205 = vlaneseq
    %v1206 = vshrl.u32 %v1205, 7
    %v1207 = vsub.s32 1, %v1206
    %v1208 = vrot.slane %v1199, %v1207
    %v1243 = vunpack.c.l.b16 %v1167
    %v1244 = vunpack.c.h.b16 %v1167
    %v1245 = vunpack.c.l.b16 %v1168
    %v1246 = vunpack.c.h.b16 %v1168
    %v1247 = vunpack.c.l.b16 %v1169
    %v1248 = vunpack.c.h.b16 %v1169
    %v1249 = vunpack.c.l.b16 %v1170
    %v1250 = vunpack.c.h.b16 %v1170
    %v1251 = vunpack.c.l.b16 %v1171
    %v1252 = vunpack.c.h.b16 %v1171
    %v1253 = vunpack.c.l.b16 %v1172
    %v1254 = vunpack.c.h.b16 %v1172
    %v1255 = vunpack.c.l.b16 %v1173
    %v1256 = vunpack.c.h.b16 %v1173
    %v1257 = vunpack.c.l.b16 %v1174
    %v1258 = vunpack.c.h.b16 %v1174
    %v1259 = vunpack.c.l.b16 %v1175
    %v1260 = vunpack.c.h.b16 %v1175
    %v1261 = vunpack.c.l.b16 %v1176
    %v1262 = vunpack.c.h.b16 %v1176
    %v1263 = vunpack.c.l.b16 %v1177
    %v1264 = vunpack.c.h.b16 %v1177
    %v1265 = vunpack.c.l.b16 %v1178
    %v1266 = vunpack.c.h.b16 %v1178
    %v1267 = vunpack.c.l.b16 %v1179
    %v1268 = vunpack.c.h.b16 %v1179
    %v1269 = vunpack.c.l.b16 %v1180
    %v1270 = vunpack.c.h.b16 %v1180
    %v1271 = vunpack.c.l.b16 %v1181
    %v1272 = vunpack.c.h.b16 %v1181
    %v1273 = vunpack.c.l.b16 %v1182
    %v1274 = vunpack.c.h.b16 %v1182
    %v1275 = vunpack.c.l.b16 %v1183
    %v1276 = vunpack.c.h.b16 %v1183
    %v1277 = vunpack.c.l.b16 %v1184
    %v1278 = vunpack.c.h.b16 %v1184
    %v1279 = vunpack.c.l.b16 %v1185
    %v1280 = vunpack.c.h.b16 %v1185
    %v1281 = vunpack.c.l.b16 %v1186
    %v1282 = vunpack.c.h.b16 %v1186
    %v1283 = vunpack.c.l.b16 %v1187
    %v1284 = vunpack.c.h.b16 %v1187
    %v1285 = vunpack.c.l.b16 %v1188
    %v1286 = vunpack.c.h.b16 %v1188
    %v1287 = vunpack.c.l.b16 %v1189
    %v1288 = vunpack.c.h.b16 %v1189
    %v1289 = vunpack.c.l.b16 %v1190
    %v1290 = vunpack.c.h.b16 %v1190
    %v1291 = vunpack.c.l.b16 %v1191
    %v1292 = vunpack.c.h.b16 %v1191
    %v1293 = vunpack.c.l.b16 %v1192
    %v1294 = vunpack.c.h.b16 %v1192
    %v1295 = vunpack.c.l.b16 %v1193
    %v1296 = vunpack.c.h.b16 %v1193
    %v1297 = vunpack.c.l.b16 %v1194
    %v1298 = vunpack.c.h.b16 %v1194
    %v1299 = vunpack.c.l.b16 %v1195
    %v1300 = vunpack.c.h.b16 %v1195
    %v1301 = vunpack.c.l.b16 %v1196
    %v1302 = vunpack.c.h.b16 %v1196
    %v1303 = vunpack.c.l.b16 %v1197
    %v1304 = vunpack.c.h.b16 %v1197
    %v1305 = vunpack.c.l.b16 %v1198
    %v1306 = vunpack.c.h.b16 %v1198
    %v1307 = vpack.c.b16 %v1245, %v1243
    %v1308 = vpack.c.b16 %v1246, %v1244
    %v1309 = vpack.c.b16 %v1249, %v1247
    %v1310 = vpack.c.b16 %v1250, %v1248
    %v1311 = vpack.c.b16 %v1253, %v1251
    %v1312 = vpack.c.b16 %v1254, %v1252
    %v1313 = vpack.c.b16 %v1257, %v1255
    %v1314 = vpack.c.b16 %v1258, %v1256
    %v1315 = vpack.c.b16 %v1261, %v1259
    %v1316 = vpack.c.b16 %v1262, %v1260
    %v1317 = vpack.c.b16 %v1265, %v1263
    %v1318 = vpack.c.b16 %v1266, %v1264
    %v1319 = vpack.c.b16 %v1269, %v1267
    %v1320 = vpack.c.b16 %v1270, %v1268
    %v1321 = vpack.c.b16 %v1273, %v1271
    %v1322 = vpack.c.b16 %v1274, %v1272
    %v1323 = vpack.c.b16 %v1277, %v1275
    %v1324 = vpack.c.b16 %v1278, %v1276
    %v1325 = vpack.c.b16 %v1281, %v1279
    %v1326 = vpack.c.b16 %v1282, %v1280
    %v1327 = vpack.c.b16 %v1285, %v1283
    %v1328 = vpack.c.b16 %v1286, %v1284
    %v1329 = vpack.c.b16 %v1289, %v1287
    %v1330 = vpack.c.b16 %v1290, %v1288
    %v1331 = vpack.c.b16 %v1293, %v1291
    %v1332 = vpack.c.b16 %v1294, %v1292
    %v1333 = vpack.c.b16 %v1297, %v1295
    %v1334 = vpack.c.b16 %v1298, %v1296
    %v1335 = vpack.c.b16 %v1301, %v1299
    %v1336 = vpack.c.b16 %v1302, %v1300
    %v1337 = vpack.c.b16 %v1305, %v1303
    %v1338 = vpack.c.b16 %v1306, %v1304
    %1371 = vmatprep.subr.bf16.mxu0 %v1308
    %1372 = vmatpush1.bf16.msra.mxu0 %v1307
    %1373 = vmatprep.subr.bf16.mxu0 %v1310
    %1374 = vmatpush1.bf16.msra.mxu0 %v1309
    %1375 = vmatprep.subr.bf16.mxu0 %v1312
    %1376 = vmatpush1.bf16.msra.mxu0 %v1311
    %1377 = vmatprep.subr.bf16.mxu0 %v1314
    %1378 = vmatpush1.bf16.msra.mxu0 %v1313
    %1379 = vmatprep.subr.bf16.mxu0 %v1316
    %1380 = vmatpush1.bf16.msra.mxu0 %v1315
    %1381 = vmatprep.subr.bf16.mxu0 %v1318
    %1382 = vmatpush1.bf16.msra.mxu0 %v1317
    %1383 = vmatprep.subr.bf16.mxu0 %v1320
    %1384 = vmatpush1.bf16.msra.mxu0 %v1319
    %1385 = vmatprep.subr.bf16.mxu0 %v1322
    %1386 = vmatpush1.bf16.msra.mxu0 %v1321
    %1387 = vmatprep.subr.bf16.mxu0 %v1324
    %1388 = vmatpush1.bf16.msra.mxu0 %v1323
    %1389 = vmatprep.subr.bf16.mxu0 %v1326
    %1390 = vmatpush1.bf16.msra.mxu0 %v1325
    %1391 = vmatprep.subr.bf16.mxu0 %v1328
    %1392 = vmatpush1.bf16.msra.mxu0 %v1327
    %1393 = vmatprep.subr.bf16.mxu0 %v1330
    %1394 = vmatpush1.bf16.msra.mxu0 %v1329
    %1395 = vmatprep.subr.bf16.mxu0 %v1332
    %1396 = vmatpush1.bf16.msra.mxu0 %v1331
    %1397 = vmatprep.subr.bf16.mxu0 %v1334
    %1398 = vmatpush1.bf16.msra.mxu0 %v1333
    %1399 = vmatprep.subr.bf16.mxu0 %v1336
    %1400 = vmatpush1.bf16.msra.mxu0 %v1335
    %1401 = vmatprep.subr.bf16.mxu0 %v1338
    %1402 = vmatpush1.bf16.msra.mxu0 %v1337
    %1403 = vmatprep.mubr.bf16.mxu0 %v1166
    %1404 = vmatmul.mubr.bf16.gmra.mrb[0].mxu0 %v1165
    %v1405 = vpop.f32.mrb[0].mxu0
    %v1406 = vadd.f32 %v1204, %v1405
    %v1407 = vpop.f32.mrb[0].mxu0
    %v1408 = vadd.f32 %v1208, %v1407
    %v1409 = vpop.f32.mrb[0].mxu0
    %v1410 = vadd.f32 %v1204, %v1409
    %v1411 = vpop.f32.mrb[0].mxu0
    %v1412 = vadd.f32 %v1208, %v1411
    %1413 = vdwg.mxu0
    %v1414 = vadd.f32 %v137, %v1406
    %v1415 = vadd.f32 %v138, %v1408
    %v1416 = vadd.f32 %v139, %v1410
    %v1417 = vadd.f32 %v140, %v1412
    %v1418 = vadd.f32 %v1414, %v1415
    %1419 = vadd.xlane.f32.xlu0 %v1418
    %v1420 = vpop.xlane.xlu0 %1419
    %v1421 = vadd.f32 %v1416, %v1417
    %1422 = vadd.xlane.f32.xlu0 %v1421
    %v1423 = vpop.xlane.xlu0 %1422
    %v1424 = vmul.f32 %v1420, %v147
    %v1425 = vmul.f32 %v1423, %v147
    %v1426 = vsub.f32 %v1414, %v1424
    %v1427 = vsub.f32 %v1415, %v1424
    %v1428 = vsub.f32 %v1416, %v1425
    %v1429 = vsub.f32 %v1417, %v1425
    %v1430 = vmul.f32 %v1426, %v1426
    %v1431 = vmul.f32 %v1427, %v1427
    %v1432 = vmul.f32 %v1428, %v1428
    %v1433 = vmul.f32 %v1429, %v1429
    %v1434 = vadd.f32 %v1430, %v1431
    %1435 = vadd.xlane.f32.xlu0 %v1434
    %v1436 = vpop.xlane.xlu0 %1435
    %v1437 = vadd.f32 %v1432, %v1433
    %1438 = vadd.xlane.f32.xlu0 %v1437
    %v1439 = vpop.xlane.xlu0 %1438
    %v1440 = vmul.f32 %v1436, %v147
    %v1441 = vmul.f32 %v1439, %v147
    %v1442 = vadd.f32 %v1440, 1e-05
    %v1443 = vadd.f32 %v1441, 1e-05
    %v1444 = vrsqrt.pop %v1442
    %v1445 = vrsqrt.pop %v1443
    %v1446 = vmul.f32 %v1426, %v1444
    %v1447 = vmul.f32 %v1427, %v1444
    %v1448 = vmul.f32 %v1428, %v1445
    %v1449 = vmul.f32 %v1429, %v1445
    %v1450 = vld [vmem:[%s7] sm:$0x3]
    %v1452 = vlaneseq
    %v1453 = vshrl.u32 %v1452, 7
    %v1454 = vsub.s32 0, %v1453
    %v1455 = vrot.slane %v1450, %v1454
    %v1456 = vlaneseq
    %v1457 = vshrl.u32 %v1456, 7
    %v1458 = vsub.s32 1, %v1457
    %v1459 = vrot.slane %v1450, %v1458
    %v1462 = vmul.f32 %v1446, %v1455
    %v1463 = vmul.f32 %v1447, %v1459
    %v1464 = vmul.f32 %v1448, %v1455
    %v1465 = vmul.f32 %v1449, %v1459
    %v1466 = vld [vmem:[%s8] sm:$0x3]
    %v1468 = vlaneseq
    %v1469 = vshrl.u32 %v1468, 7
    %v1470 = vsub.s32 0, %v1469
    %v1471 = vrot.slane %v1466, %v1470
    %v1472 = vlaneseq
    %v1473 = vshrl.u32 %v1472, 7
    %v1474 = vsub.s32 1, %v1473
    %v1475 = vrot.slane %v1466, %v1474
    %v1478 = vadd.f32 %v1462, %v1471
    %v1479 = vadd.f32 %v1463, %v1475
    %v1480 = vadd.f32 %v1464, %v1471
    %v1481 = vadd.f32 %v1465, %v1475
    %v1482 = vpack.c.bf16 %v1480, %v1478
    %v1483 = vpack.c.bf16 %v1481, %v1479
    %v1484 = vld [vmem:[#allocation11] sm:$0xff]
    %v1485 = vld [vmem:[#allocation11 + $0x8] sm:$0xff]
    %v1486 = vld [vmem:[#allocation11 + $0x10] sm:$0xff]
    %v1487 = vld [vmem:[#allocation11 + $0x18] sm:$0xff]
    %v1488 = vld [vmem:[#allocation11 + $0x20] sm:$0xff]
    %v1489 = vld [vmem:[#allocation11 + $0x28] sm:$0xff]
    %v1490 = vld [vmem:[#allocation11 + $0x30] sm:$0xff]
    %v1491 = vld [vmem:[#allocation11 + $0x38] sm:$0xff]
    %v1492 = vld [vmem:[#allocation11 + $0x40] sm:$0xff]
    %v1493 = vld [vmem:[#allocation11 + $0x48] sm:$0xff]
    %v1494 = vld [vmem:[#allocation11 + $0x50] sm:$0xff]
    %v1495 = vld [vmem:[#allocation11 + $0x58] sm:$0xff]
    %v1496 = vld [vmem:[#allocation11 + $0x60] sm:$0xff]
    %v1497 = vld [vmem:[#allocation11 + $0x68] sm:$0xff]
    %v1498 = vld [vmem:[#allocation11 + $0x70] sm:$0xff]
    %v1499 = vld [vmem:[#allocation11 + $0x78] sm:$0xff]
    %v1500 = vld [vmem:[#allocation11 + $0x80] sm:$0xff]
    %v1501 = vld [vmem:[#allocation11 + $0x88] sm:$0xff]
    %v1502 = vld [vmem:[#allocation11 + $0x90] sm:$0xff]
    %v1503 = vld [vmem:[#allocation11 + $0x98] sm:$0xff]
    %v1504 = vld [vmem:[#allocation11 + $0xa0] sm:$0xff]
    %v1505 = vld [vmem:[#allocation11 + $0xa8] sm:$0xff]
    %v1506 = vld [vmem:[#allocation11 + $0xb0] sm:$0xff]
    %v1507 = vld [vmem:[#allocation11 + $0xb8] sm:$0xff]
    %v1508 = vld [vmem:[#allocation11 + $0xc0] sm:$0xff]
    %v1509 = vld [vmem:[#allocation11 + $0xc8] sm:$0xff]
    %v1510 = vld [vmem:[#allocation11 + $0xd0] sm:$0xff]
    %v1511 = vld [vmem:[#allocation11 + $0xd8] sm:$0xff]
    %v1512 = vld [vmem:[#allocation11 + $0xe0] sm:$0xff]
    %v1513 = vld [vmem:[#allocation11 + $0xe8] sm:$0xff]
    %v1514 = vld [vmem:[#allocation11 + $0xf0] sm:$0xff]
    %v1515 = vld [vmem:[#allocation11 + $0xf8] sm:$0xff]
    %v1516 = vld [vmem:[#allocation11 + $0x100] sm:$0xff]
    %v1517 = vld [vmem:[#allocation11 + $0x108] sm:$0xff]
    %v1518 = vld [vmem:[#allocation11 + $0x110] sm:$0xff]
    %v1519 = vld [vmem:[#allocation11 + $0x118] sm:$0xff]
    %v1520 = vld [vmem:[#allocation11 + $0x120] sm:$0xff]
    %v1521 = vld [vmem:[#allocation11 + $0x128] sm:$0xff]
    %v1522 = vld [vmem:[#allocation11 + $0x130] sm:$0xff]
    %v1523 = vld [vmem:[#allocation11 + $0x138] sm:$0xff]
    %v1524 = vld [vmem:[#allocation11 + $0x140] sm:$0xff]
    %v1525 = vld [vmem:[#allocation11 + $0x148] sm:$0xff]
    %v1526 = vld [vmem:[#allocation11 + $0x150] sm:$0xff]
    %v1527 = vld [vmem:[#allocation11 + $0x158] sm:$0xff]
    %v1528 = vld [vmem:[#allocation11 + $0x160] sm:$0xff]
    %v1529 = vld [vmem:[#allocation11 + $0x168] sm:$0xff]
    %v1530 = vld [vmem:[#allocation11 + $0x170] sm:$0xff]
    %v1531 = vld [vmem:[#allocation11 + $0x178] sm:$0xff]
    %v1532 = vld [vmem:[#allocation11 + $0x180] sm:$0xff]
    %v1533 = vld [vmem:[#allocation11 + $0x188] sm:$0xff]
    %v1534 = vld [vmem:[#allocation11 + $0x190] sm:$0xff]
    %v1535 = vld [vmem:[#allocation11 + $0x198] sm:$0xff]
    %v1536 = vld [vmem:[#allocation11 + $0x1a0] sm:$0xff]
    %v1537 = vld [vmem:[#allocation11 + $0x1a8] sm:$0xff]
    %v1538 = vld [vmem:[#allocation11 + $0x1b0] sm:$0xff]
    %v1539 = vld [vmem:[#allocation11 + $0x1b8] sm:$0xff]
    %v1540 = vld [vmem:[#allocation11 + $0x1c0] sm:$0xff]
    %v1541 = vld [vmem:[#allocation11 + $0x1c8] sm:$0xff]
    %v1542 = vld [vmem:[#allocation11 + $0x1d0] sm:$0xff]
    %v1543 = vld [vmem:[#allocation11 + $0x1d8] sm:$0xff]
    %v1544 = vld [vmem:[#allocation11 + $0x1e0] sm:$0xff]
    %v1545 = vld [vmem:[#allocation11 + $0x1e8] sm:$0xff]
    %v1546 = vld [vmem:[#allocation11 + $0x1f0] sm:$0xff]
    %v1547 = vld [vmem:[#allocation11 + $0x1f8] sm:$0xff]
    %v1548 = vld [vmem:[#allocation11 + $0x200] sm:$0xff]
    %v1549 = vld [vmem:[#allocation11 + $0x208] sm:$0xff]
    %v1550 = vld [vmem:[#allocation11 + $0x210] sm:$0xff]
    %v1551 = vld [vmem:[#allocation11 + $0x218] sm:$0xff]
    %v1552 = vld [vmem:[#allocation11 + $0x220] sm:$0xff]
    %v1553 = vld [vmem:[#allocation11 + $0x228] sm:$0xff]
    %v1554 = vld [vmem:[#allocation11 + $0x230] sm:$0xff]
    %v1555 = vld [vmem:[#allocation11 + $0x238] sm:$0xff]
    %v1556 = vld [vmem:[#allocation11 + $0x240] sm:$0xff]
    %v1557 = vld [vmem:[#allocation11 + $0x248] sm:$0xff]
    %v1558 = vld [vmem:[#allocation11 + $0x250] sm:$0xff]
    %v1559 = vld [vmem:[#allocation11 + $0x258] sm:$0xff]
    %v1560 = vld [vmem:[#allocation11 + $0x260] sm:$0xff]
    %v1561 = vld [vmem:[#allocation11 + $0x268] sm:$0xff]
    %v1562 = vld [vmem:[#allocation11 + $0x270] sm:$0xff]
    %v1563 = vld [vmem:[#allocation11 + $0x278] sm:$0xff]
    %v1564 = vld [vmem:[#allocation11 + $0x280] sm:$0xff]
    %v1565 = vld [vmem:[#allocation11 + $0x288] sm:$0xff]
    %v1566 = vld [vmem:[#allocation11 + $0x290] sm:$0xff]
    %v1567 = vld [vmem:[#allocation11 + $0x298] sm:$0xff]
    %v1568 = vld [vmem:[#allocation11 + $0x2a0] sm:$0xff]
    %v1569 = vld [vmem:[#allocation11 + $0x2a8] sm:$0xff]
    %v1570 = vld [vmem:[#allocation11 + $0x2b0] sm:$0xff]
    %v1571 = vld [vmem:[#allocation11 + $0x2b8] sm:$0xff]
    %v1572 = vld [vmem:[#allocation11 + $0x2c0] sm:$0xff]
    %v1573 = vld [vmem:[#allocation11 + $0x2c8] sm:$0xff]
    %v1574 = vld [vmem:[#allocation11 + $0x2d0] sm:$0xff]
    %v1575 = vld [vmem:[#allocation11 + $0x2d8] sm:$0xff]
    %v1576 = vld [vmem:[#allocation11 + $0x2e0] sm:$0xff]
    %v1577 = vld [vmem:[#allocation11 + $0x2e8] sm:$0xff]
    %v1578 = vld [vmem:[#allocation11 + $0x2f0] sm:$0xff]
    %v1579 = vld [vmem:[#allocation11 + $0x2f8] sm:$0xff]
    %v1580 = vld [vmem:[#allocation11 + $0x300] sm:$0xff]
    %v1581 = vld [vmem:[#allocation11 + $0x308] sm:$0xff]
    %v1582 = vld [vmem:[#allocation11 + $0x310] sm:$0xff]
    %v1583 = vld [vmem:[#allocation11 + $0x318] sm:$0xff]
    %v1584 = vld [vmem:[#allocation11 + $0x320] sm:$0xff]
    %v1585 = vld [vmem:[#allocation11 + $0x328] sm:$0xff]
    %v1586 = vld [vmem:[#allocation11 + $0x330] sm:$0xff]
    %v1587 = vld [vmem:[#allocation11 + $0x338] sm:$0xff]
    %v1588 = vld [vmem:[#allocation11 + $0x340] sm:$0xff]
    %v1589 = vld [vmem:[#allocation11 + $0x348] sm:$0xff]
    %v1590 = vld [vmem:[#allocation11 + $0x350] sm:$0xff]
    %v1591 = vld [vmem:[#allocation11 + $0x358] sm:$0xff]
    %v1592 = vld [vmem:[#allocation11 + $0x360] sm:$0xff]
    %v1593 = vld [vmem:[#allocation11 + $0x368] sm:$0xff]
    %v1594 = vld [vmem:[#allocation11 + $0x370] sm:$0xff]
    %v1595 = vld [vmem:[#allocation11 + $0x378] sm:$0xff]
    %v1596 = vld [vmem:[#allocation11 + $0x380] sm:$0xff]
    %v1597 = vld [vmem:[#allocation11 + $0x388] sm:$0xff]
    %v1598 = vld [vmem:[#allocation11 + $0x390] sm:$0xff]
    %v1599 = vld [vmem:[#allocation11 + $0x398] sm:$0xff]
    %v1600 = vld [vmem:[#allocation11 + $0x3a0] sm:$0xff]
    %v1601 = vld [vmem:[#allocation11 + $0x3a8] sm:$0xff]
    %v1602 = vld [vmem:[#allocation11 + $0x3b0] sm:$0xff]
    %v1603 = vld [vmem:[#allocation11 + $0x3b8] sm:$0xff]
    %v1604 = vld [vmem:[#allocation11 + $0x3c0] sm:$0xff]
    %v1605 = vld [vmem:[#allocation11 + $0x3c8] sm:$0xff]
    %v1606 = vld [vmem:[#allocation11 + $0x3d0] sm:$0xff]
    %v1607 = vld [vmem:[#allocation11 + $0x3d8] sm:$0xff]
    %v1608 = vld [vmem:[#allocation11 + $0x3e0] sm:$0xff]
    %v1609 = vld [vmem:[#allocation11 + $0x3e8] sm:$0xff]
    %v1610 = vld [vmem:[#allocation11 + $0x3f0] sm:$0xff]
    %v1611 = vld [vmem:[#allocation11 + $0x3f8] sm:$0xff]
    %v1612 = vld [vmem:[%s10] sm:$0xff]
    %v1614 = vlaneseq
    %v1615 = vshrl.u32 %v1614, 7
    %v1616 = vsub.s32 0, %v1615
    %v1617 = vrot.slane %v1612, %v1616
    %v1618 = vlaneseq
    %v1619 = vshrl.u32 %v1618, 7
    %v1620 = vsub.s32 1, %v1619
    %v1621 = vrot.slane %v1612, %v1620
    %v1622 = vlaneseq
    %v1623 = vshrl.u32 %v1622, 7
    %v1624 = vsub.s32 2, %v1623
    %v1625 = vrot.slane %v1612, %v1624
    %v1626 = vlaneseq
    %v1627 = vshrl.u32 %v1626, 7
    %v1628 = vsub.s32 3, %v1627
    %v1629 = vrot.slane %v1612, %v1628
    %v1630 = vlaneseq
    %v1631 = vshrl.u32 %v1630, 7
    %v1632 = vsub.s32 4, %v1631
    %v1633 = vrot.slane %v1612, %v1632
    %v1634 = vlaneseq
    %v1635 = vshrl.u32 %v1634, 7
    %v1636 = vsub.s32 5, %v1635
    %v1637 = vrot.slane %v1612, %v1636
    %v1638 = vlaneseq
    %v1639 = vshrl.u32 %v1638, 7
    %v1640 = vsub.s32 6, %v1639
    %v1641 = vrot.slane %v1612, %v1640
    %v1642 = vlaneseq
    %v1643 = vshrl.u32 %v1642, 7
    %v1644 = vsub.s32 7, %v1643
    %v1645 = vrot.slane %v1612, %v1644
    %v1782 = vunpack.c.l.b16 %v1484
    %v1783 = vunpack.c.h.b16 %v1484
    %v1784 = vunpack.c.l.b16 %v1485
    %v1785 = vunpack.c.h.b16 %v1485
    %v1786 = vunpack.c.l.b16 %v1486
    %v1787 = vunpack.c.h.b16 %v1486
    %v1788 = vunpack.c.l.b16 %v1487
    %v1789 = vunpack.c.h.b16 %v1487
    %v1790 = vunpack.c.l.b16 %v1488
    %v1791 = vunpack.c.h.b16 %v1488
    %v1792 = vunpack.c.l.b16 %v1489
    %v1793 = vunpack.c.h.b16 %v1489
    %v1794 = vunpack.c.l.b16 %v1490
    %v1795 = vunpack.c.h.b16 %v1490
    %v1796 = vunpack.c.l.b16 %v1491
    %v1797 = vunpack.c.h.b16 %v1491
    %v1798 = vunpack.c.l.b16 %v1492
    %v1799 = vunpack.c.h.b16 %v1492
    %v1800 = vunpack.c.l.b16 %v1493
    %v1801 = vunpack.c.h.b16 %v1493
    %v1802 = vunpack.c.l.b16 %v1494
    %v1803 = vunpack.c.h.b16 %v1494
    %v1804 = vunpack.c.l.b16 %v1495
    %v1805 = vunpack.c.h.b16 %v1495
    %v1806 = vunpack.c.l.b16 %v1496
    %v1807 = vunpack.c.h.b16 %v1496
    %v1808 = vunpack.c.l.b16 %v1497
    %v1809 = vunpack.c.h.b16 %v1497
    %v1810 = vunpack.c.l.b16 %v1498
    %v1811 = vunpack.c.h.b16 %v1498
    %v1812 = vunpack.c.l.b16 %v1499
    %v1813 = vunpack.c.h.b16 %v1499
    %v1814 = vunpack.c.l.b16 %v1500
    %v1815 = vunpack.c.h.b16 %v1500
    %v1816 = vunpack.c.l.b16 %v1501
    %v1817 = vunpack.c.h.b16 %v1501
    %v1818 = vunpack.c.l.b16 %v1502
    %v1819 = vunpack.c.h.b16 %v1502
    %v1820 = vunpack.c.l.b16 %v1503
    %v1821 = vunpack.c.h.b16 %v1503
    %v1822 = vunpack.c.l.b16 %v1504
    %v1823 = vunpack.c.h.b16 %v1504
    %v1824 = vunpack.c.l.b16 %v1505
    %v1825 = vunpack.c.h.b16 %v1505
    %v1826 = vunpack.c.l.b16 %v1506
    %v1827 = vunpack.c.h.b16 %v1506
    %v1828 = vunpack.c.l.b16 %v1507
    %v1829 = vunpack.c.h.b16 %v1507
    %v1830 = vunpack.c.l.b16 %v1508
    %v1831 = vunpack.c.h.b16 %v1508
    %v1832 = vunpack.c.l.b16 %v1509
    %v1833 = vunpack.c.h.b16 %v1509
    %v1834 = vunpack.c.l.b16 %v1510
    %v1835 = vunpack.c.h.b16 %v1510
    %v1836 = vunpack.c.l.b16 %v1511
    %v1837 = vunpack.c.h.b16 %v1511
    %v1838 = vunpack.c.l.b16 %v1512
    %v1839 = vunpack.c.h.b16 %v1512
    %v1840 = vunpack.c.l.b16 %v1513
    %v1841 = vunpack.c.h.b16 %v1513
    %v1842 = vunpack.c.l.b16 %v1514
    %v1843 = vunpack.c.h.b16 %v1514
    %v1844 = vunpack.c.l.b16 %v1515
    %v1845 = vunpack.c.h.b16 %v1515
    %v1846 = vunpack.c.l.b16 %v1516
    %v1847 = vunpack.c.h.b16 %v1516
    %v1848 = vunpack.c.l.b16 %v1517
    %v1849 = vunpack.c.h.b16 %v1517
    %v1850 = vunpack.c.l.b16 %v1518
    %v1851 = vunpack.c.h.b16 %v1518
    %v1852 = vunpack.c.l.b16 %v1519
    %v1853 = vunpack.c.h.b16 %v1519
    %v1854 = vunpack.c.l.b16 %v1520
    %v1855 = vunpack.c.h.b16 %v1520
    %v1856 = vunpack.c.l.b16 %v1521
    %v1857 = vunpack.c.h.b16 %v1521
    %v1858 = vunpack.c.l.b16 %v1522
    %v1859 = vunpack.c.h.b16 %v1522
    %v1860 = vunpack.c.l.b16 %v1523
    %v1861 = vunpack.c.h.b16 %v1523
    %v1862 = vunpack.c.l.b16 %v1524
    %v1863 = vunpack.c.h.b16 %v1524
    %v1864 = vunpack.c.l.b16 %v1525
    %v1865 = vunpack.c.h.b16 %v1525
    %v1866 = vunpack.c.l.b16 %v1526
    %v1867 = vunpack.c.h.b16 %v1526
    %v1868 = vunpack.c.l.b16 %v1527
    %v1869 = vunpack.c.h.b16 %v1527
    %v1870 = vunpack.c.l.b16 %v1528
    %v1871 = vunpack.c.h.b16 %v1528
    %v1872 = vunpack.c.l.b16 %v1529
    %v1873 = vunpack.c.h.b16 %v1529
    %v1874 = vunpack.c.l.b16 %v1530
    %v1875 = vunpack.c.h.b16 %v1530
    %v1876 = vunpack.c.l.b16 %v1531
    %v1877 = vunpack.c.h.b16 %v1531
    %v1878 = vunpack.c.l.b16 %v1532
    %v1879 = vunpack.c.h.b16 %v1532
    %v1880 = vunpack.c.l.b16 %v1533
    %v1881 = vunpack.c.h.b16 %v1533
    %v1882 = vunpack.c.l.b16 %v1534
    %v1883 = vunpack.c.h.b16 %v1534
    %v1884 = vunpack.c.l.b16 %v1535
    %v1885 = vunpack.c.h.b16 %v1535
    %v1886 = vunpack.c.l.b16 %v1536
    %v1887 = vunpack.c.h.b16 %v1536
    %v1888 = vunpack.c.l.b16 %v1537
    %v1889 = vunpack.c.h.b16 %v1537
    %v1890 = vunpack.c.l.b16 %v1538
    %v1891 = vunpack.c.h.b16 %v1538
    %v1892 = vunpack.c.l.b16 %v1539
    %v1893 = vunpack.c.h.b16 %v1539
    %v1894 = vunpack.c.l.b16 %v1540
    %v1895 = vunpack.c.h.b16 %v1540
    %v1896 = vunpack.c.l.b16 %v1541
    %v1897 = vunpack.c.h.b16 %v1541
    %v1898 = vunpack.c.l.b16 %v1542
    %v1899 = vunpack.c.h.b16 %v1542
    %v1900 = vunpack.c.l.b16 %v1543
    %v1901 = vunpack.c.h.b16 %v1543
    %v1902 = vunpack.c.l.b16 %v1544
    %v1903 = vunpack.c.h.b16 %v1544
    %v1904 = vunpack.c.l.b16 %v1545
    %v1905 = vunpack.c.h.b16 %v1545
    %v1906 = vunpack.c.l.b16 %v1546
    %v1907 = vunpack.c.h.b16 %v1546
    %v1908 = vunpack.c.l.b16 %v1547
    %v1909 = vunpack.c.h.b16 %v1547
    %v1910 = vunpack.c.l.b16 %v1548
    %v1911 = vunpack.c.h.b16 %v1548
    %v1912 = vunpack.c.l.b16 %v1549
    %v1913 = vunpack.c.h.b16 %v1549
    %v1914 = vunpack.c.l.b16 %v1550
    %v1915 = vunpack.c.h.b16 %v1550
    %v1916 = vunpack.c.l.b16 %v1551
    %v1917 = vunpack.c.h.b16 %v1551
    %v1918 = vunpack.c.l.b16 %v1552
    %v1919 = vunpack.c.h.b16 %v1552
    %v1920 = vunpack.c.l.b16 %v1553
    %v1921 = vunpack.c.h.b16 %v1553
    %v1922 = vunpack.c.l.b16 %v1554
    %v1923 = vunpack.c.h.b16 %v1554
    %v1924 = vunpack.c.l.b16 %v1555
    %v1925 = vunpack.c.h.b16 %v1555
    %v1926 = vunpack.c.l.b16 %v1556
    %v1927 = vunpack.c.h.b16 %v1556
    %v1928 = vunpack.c.l.b16 %v1557
    %v1929 = vunpack.c.h.b16 %v1557
    %v1930 = vunpack.c.l.b16 %v1558
    %v1931 = vunpack.c.h.b16 %v1558
    %v1932 = vunpack.c.l.b16 %v1559
    %v1933 = vunpack.c.h.b16 %v1559
    %v1934 = vunpack.c.l.b16 %v1560
    %v1935 = vunpack.c.h.b16 %v1560
    %v1936 = vunpack.c.l.b16 %v1561
    %v1937 = vunpack.c.h.b16 %v1561
    %v1938 = vunpack.c.l.b16 %v1562
    %v1939 = vunpack.c.h.b16 %v1562
    %v1940 = vunpack.c.l.b16 %v1563
    %v1941 = vunpack.c.h.b16 %v1563
    %v1942 = vunpack.c.l.b16 %v1564
    %v1943 = vunpack.c.h.b16 %v1564
    %v1944 = vunpack.c.l.b16 %v1565
    %v1945 = vunpack.c.h.b16 %v1565
    %v1946 = vunpack.c.l.b16 %v1566
    %v1947 = vunpack.c.h.b16 %v1566
    %v1948 = vunpack.c.l.b16 %v1567
    %v1949 = vunpack.c.h.b16 %v1567
    %v1950 = vunpack.c.l.b16 %v1568
    %v1951 = vunpack.c.h.b16 %v1568
    %v1952 = vunpack.c.l.b16 %v1569
    %v1953 = vunpack.c.h.b16 %v1569
    %v1954 = vunpack.c.l.b16 %v1570
    %v1955 = vunpack.c.h.b16 %v1570
    %v1956 = vunpack.c.l.b16 %v1571
    %v1957 = vunpack.c.h.b16 %v1571
    %v1958 = vunpack.c.l.b16 %v1572
    %v1959 = vunpack.c.h.b16 %v1572
    %v1960 = vunpack.c.l.b16 %v1573
    %v1961 = vunpack.c.h.b16 %v1573
    %v1962 = vunpack.c.l.b16 %v1574
    %v1963 = vunpack.c.h.b16 %v1574
    %v1964 = vunpack.c.l.b16 %v1575
    %v1965 = vunpack.c.h.b16 %v1575
    %v1966 = vunpack.c.l.b16 %v1576
    %v1967 = vunpack.c.h.b16 %v1576
    %v1968 = vunpack.c.l.b16 %v1577
    %v1969 = vunpack.c.h.b16 %v1577
    %v1970 = vunpack.c.l.b16 %v1578
    %v1971 = vunpack.c.h.b16 %v1578
    %v1972 = vunpack.c.l.b16 %v1579
    %v1973 = vunpack.c.h.b16 %v1579
    %v1974 = vunpack.c.l.b16 %v1580
    %v1975 = vunpack.c.h.b16 %v1580
    %v1976 = vunpack.c.l.b16 %v1581
    %v1977 = vunpack.c.h.b16 %v1581
    %v1978 = vunpack.c.l.b16 %v1582
    %v1979 = vunpack.c.h.b16 %v1582
    %v1980 = vunpack.c.l.b16 %v1583
    %v1981 = vunpack.c.h.b16 %v1583
    %v1982 = vunpack.c.l.b16 %v1584
    %v1983 = vunpack.c.h.b16 %v1584
    %v1984 = vunpack.c.l.b16 %v1585
    %v1985 = vunpack.c.h.b16 %v1585
    %v1986 = vunpack.c.l.b16 %v1586
    %v1987 = vunpack.c.h.b16 %v1586
    %v1988 = vunpack.c.l.b16 %v1587
    %v1989 = vunpack.c.h.b16 %v1587
    %v1990 = vunpack.c.l.b16 %v1588
    %v1991 = vunpack.c.h.b16 %v1588
    %v1992 = vunpack.c.l.b16 %v1589
    %v1993 = vunpack.c.h.b16 %v1589
    %v1994 = vunpack.c.l.b16 %v1590
    %v1995 = vunpack.c.h.b16 %v1590
    %v1996 = vunpack.c.l.b16 %v1591
    %v1997 = vunpack.c.h.b16 %v1591
    %v1998 = vunpack.c.l.b16 %v1592
    %v1999 = vunpack.c.h.b16 %v1592
    %v2000 = vunpack.c.l.b16 %v1593
    %v2001 = vunpack.c.h.b16 %v1593
    %v2002 = vunpack.c.l.b16 %v1594
    %v2003 = vunpack.c.h.b16 %v1594
    %v2004 = vunpack.c.l.b16 %v1595
    %v2005 = vunpack.c.h.b16 %v1595
    %v2006 = vunpack.c.l.b16 %v1596
    %v2007 = vunpack.c.h.b16 %v1596
    %v2008 = vunpack.c.l.b16 %v1597
    %v2009 = vunpack.c.h.b16 %v1597
    %v2010 = vunpack.c.l.b16 %v1598
    %v2011 = vunpack.c.h.b16 %v1598
    %v2012 = vunpack.c.l.b16 %v1599
    %v2013 = vunpack.c.h.b16 %v1599
    %v2014 = vunpack.c.l.b16 %v1600
    %v2015 = vunpack.c.h.b16 %v1600
    %v2016 = vunpack.c.l.b16 %v1601
    %v2017 = vunpack.c.h.b16 %v1601
    %v2018 = vunpack.c.l.b16 %v1602
    %v2019 = vunpack.c.h.b16 %v1602
    %v2020 = vunpack.c.l.b16 %v1603
    %v2021 = vunpack.c.h.b16 %v1603
    %v2022 = vunpack.c.l.b16 %v1604
    %v2023 = vunpack.c.h.b16 %v1604
    %v2024 = vunpack.c.l.b16 %v1605
    %v2025 = vunpack.c.h.b16 %v1605
    %v2026 = vunpack.c.l.b16 %v1606
    %v2027 = vunpack.c.h.b16 %v1606
    %v2028 = vunpack.c.l.b16 %v1607
    %v2029 = vunpack.c.h.b16 %v1607
    %v2030 = vunpack.c.l.b16 %v1608
    %v2031 = vunpack.c.h.b16 %v1608
    %v2032 = vunpack.c.l.b16 %v1609
    %v2033 = vunpack.c.h.b16 %v1609
    %v2034 = vunpack.c.l.b16 %v1610
    %v2035 = vunpack.c.h.b16 %v1610
    %v2036 = vunpack.c.l.b16 %v1611
    %v2037 = vunpack.c.h.b16 %v1611
    %v2038 = vpack.c.b16 %v1790, %v1782
    %v2039 = vpack.c.b16 %v1791, %v1783
    %v2040 = vpack.c.b16 %v1792, %v1784
    %v2041 = vpack.c.b16 %v1793, %v1785
    %v2042 = vpack.c.b16 %v1794, %v1786
    %v2043 = vpack.c.b16 %v1795, %v1787
    %v2044 = vpack.c.b16 %v1796, %v1788
    %v2045 = vpack.c.b16 %v1797, %v1789
    %v2046 = vpack.c.b16 %v1806, %v1798
    %v2047 = vpack.c.b16 %v1807, %v1799
    %v2048 = vpack.c.b16 %v1808, %v1800
    %v2049 = vpack.c.b16 %v1809, %v1801
    %v2050 = vpack.c.b16 %v1810, %v1802
    %v2051 = vpack.c.b16 %v1811, %v1803
    %v2052 = vpack.c.b16 %v1812, %v1804
    %v2053 = vpack.c.b16 %v1813, %v1805
    %v2054 = vpack.c.b16 %v1822, %v1814
    %v2055 = vpack.c.b16 %v1823, %v1815
    %v2056 = vpack.c.b16 %v1824, %v1816
    %v2057 = vpack.c.b16 %v1825, %v1817
    %v2058 = vpack.c.b16 %v1826, %v1818
    %v2059 = vpack.c.b16 %v1827, %v1819
    %v2060 = vpack.c.b16 %v1828, %v1820
    %v2061 = vpack.c.b16 %v1829, %v1821
    %v2062 = vpack.c.b16 %v1838, %v1830
    %v2063 = vpack.c.b16 %v1839, %v1831
    %v2064 = vpack.c.b16 %v1840, %v1832
    %v2065 = vpack.c.b16 %v1841, %v1833
    %v2066 = vpack.c.b16 %v1842, %v1834
    %v2067 = vpack.c.b16 %v1843, %v1835
    %v2068 = vpack.c.b16 %v1844, %v1836
    %v2069 = vpack.c.b16 %v1845, %v1837
    %v2070 = vpack.c.b16 %v1854, %v1846
    %v2071 = vpack.c.b16 %v1855, %v1847
    %v2072 = vpack.c.b16 %v1856, %v1848
    %v2073 = vpack.c.b16 %v1857, %v1849
    %v2074 = vpack.c.b16 %v1858, %v1850
    %v2075 = vpack.c.b16 %v1859, %v1851
    %v2076 = vpack.c.b16 %v1860, %v1852
    %v2077 = vpack.c.b16 %v1861, %v1853
    %v2078 = vpack.c.b16 %v1870, %v1862
    %v2079 = vpack.c.b16 %v1871, %v1863
    %v2080 = vpack.c.b16 %v1872, %v1864
    %v2081 = vpack.c.b16 %v1873, %v1865
    %v2082 = vpack.c.b16 %v1874, %v1866
    %v2083 = vpack.c.b16 %v1875, %v1867
    %v2084 = vpack.c.b16 %v1876, %v1868
    %v2085 = vpack.c.b16 %v1877, %v1869
    %v2086 = vpack.c.b16 %v1886, %v1878
    %v2087 = vpack.c.b16 %v1887, %v1879
    %v2088 = vpack.c.b16 %v1888, %v1880
    %v2089 = vpack.c.b16 %v1889, %v1881
    %v2090 = vpack.c.b16 %v1890, %v1882
    %v2091 = vpack.c.b16 %v1891, %v1883
    %v2092 = vpack.c.b16 %v1892, %v1884
    %v2093 = vpack.c.b16 %v1893, %v1885
    %v2094 = vpack.c.b16 %v1902, %v1894
    %v2095 = vpack.c.b16 %v1903, %v1895
    %v2096 = vpack.c.b16 %v1904, %v1896
    %v2097 = vpack.c.b16 %v1905, %v1897
    %v2098 = vpack.c.b16 %v1906, %v1898
    %v2099 = vpack.c.b16 %v1907, %v1899
    %v2100 = vpack.c.b16 %v1908, %v1900
    %v2101 = vpack.c.b16 %v1909, %v1901
    %v2102 = vpack.c.b16 %v1918, %v1910
    %v2103 = vpack.c.b16 %v1919, %v1911
    %v2104 = vpack.c.b16 %v1920, %v1912
    %v2105 = vpack.c.b16 %v1921, %v1913
    %v2106 = vpack.c.b16 %v1922, %v1914
    %v2107 = vpack.c.b16 %v1923, %v1915
    %v2108 = vpack.c.b16 %v1924, %v1916
    %v2109 = vpack.c.b16 %v1925, %v1917
    %v2110 = vpack.c.b16 %v1934, %v1926
    %v2111 = vpack.c.b16 %v1935, %v1927
    %v2112 = vpack.c.b16 %v1936, %v1928
    %v2113 = vpack.c.b16 %v1937, %v1929
    %v2114 = vpack.c.b16 %v1938, %v1930
    %v2115 = vpack.c.b16 %v1939, %v1931
    %v2116 = vpack.c.b16 %v1940, %v1932
    %v2117 = vpack.c.b16 %v1941, %v1933
    %v2118 = vpack.c.b16 %v1950, %v1942
    %v2119 = vpack.c.b16 %v1951, %v1943
    %v2120 = vpack.c.b16 %v1952, %v1944
    %v2121 = vpack.c.b16 %v1953, %v1945
    %v2122 = vpack.c.b16 %v1954, %v1946
    %v2123 = vpack.c.b16 %v1955, %v1947
    %v2124 = vpack.c.b16 %v1956, %v1948
    %v2125 = vpack.c.b16 %v1957, %v1949
    %v2126 = vpack.c.b16 %v1966, %v1958
    %v2127 = vpack.c.b16 %v1967, %v1959
    %v2128 = vpack.c.b16 %v1968, %v1960
    %v2129 = vpack.c.b16 %v1969, %v1961
    %v2130 = vpack.c.b16 %v1970, %v1962
    %v2131 = vpack.c.b16 %v1971, %v1963
    %v2132 = vpack.c.b16 %v1972, %v1964
    %v2133 = vpack.c.b16 %v1973, %v1965
    %v2134 = vpack.c.b16 %v1982, %v1974
    %v2135 = vpack.c.b16 %v1983, %v1975
    %v2136 = vpack.c.b16 %v1984, %v1976
    %v2137 = vpack.c.b16 %v1985, %v1977
    %v2138 = vpack.c.b16 %v1986, %v1978
    %v2139 = vpack.c.b16 %v1987, %v1979
    %v2140 = vpack.c.b16 %v1988, %v1980
    %v2141 = vpack.c.b16 %v1989, %v1981
    %v2142 = vpack.c.b16 %v1998, %v1990
    %v2143 = vpack.c.b16 %v1999, %v1991
    %v2144 = vpack.c.b16 %v2000, %v1992
    %v2145 = vpack.c.b16 %v2001, %v1993
    %v2146 = vpack.c.b16 %v2002, %v1994
    %v2147 = vpack.c.b16 %v2003, %v1995
    %v2148 = vpack.c.b16 %v2004, %v1996
    %v2149 = vpack.c.b16 %v2005, %v1997
    %v2150 = vpack.c.b16 %v2014, %v2006
    %v2151 = vpack.c.b16 %v2015, %v2007
    %v2152 = vpack.c.b16 %v2016, %v2008
    %v2153 = vpack.c.b16 %v2017, %v2009
    %v2154 = vpack.c.b16 %v2018, %v2010
    %v2155 = vpack.c.b16 %v2019, %v2011
    %v2156 = vpack.c.b16 %v2020, %v2012
    %v2157 = vpack.c.b16 %v2021, %v2013
    %v2158 = vpack.c.b16 %v2030, %v2022
    %v2159 = vpack.c.b16 %v2031, %v2023
    %v2160 = vpack.c.b16 %v2032, %v2024
    %v2161 = vpack.c.b16 %v2033, %v2025
    %v2162 = vpack.c.b16 %v2034, %v2026
    %v2163 = vpack.c.b16 %v2035, %v2027
    %v2164 = vpack.c.b16 %v2036, %v2028
    %v2165 = vpack.c.b16 %v2037, %v2029
    %2294 = vmatprep.subr.bf16.mxu0 %v2039
    %2295 = vmatpush1.bf16.msra.mxu0 %v2038
    %2296 = vmatprep.subr.bf16.mxu0 %v2047
    %2297 = vmatpush1.bf16.msra.mxu0 %v2046
    %2298 = vmatprep.subr.bf16.mxu0 %v2055
    %2299 = vmatpush1.bf16.msra.mxu0 %v2054
    %2300 = vmatprep.subr.bf16.mxu0 %v2063
    %2301 = vmatpush1.bf16.msra.mxu0 %v2062
    %2302 = vmatprep.subr.bf16.mxu0 %v2071
    %2303 = vmatpush1.bf16.msra.mxu0 %v2070
    %2304 = vmatprep.subr.bf16.mxu0 %v2079
    %2305 = vmatpush1.bf16.msra.mxu0 %v2078
    %2306 = vmatprep.subr.bf16.mxu0 %v2087
    %2307 = vmatpush1.bf16.msra.mxu0 %v2086
    %2308 = vmatprep.subr.bf16.mxu0 %v2095
    %2309 = vmatpush1.bf16.msra.mxu0 %v2094
    %2310 = vmatprep.subr.bf16.mxu0 %v2103
    %2311 = vmatpush1.bf16.msra.mxu0 %v2102
    %2312 = vmatprep.subr.bf16.mxu0 %v2111
    %2313 = vmatpush1.bf16.msra.mxu0 %v2110
    %2314 = vmatprep.subr.bf16.mxu0 %v2119
    %2315 = vmatpush1.bf16.msra.mxu0 %v2118
    %2316 = vmatprep.subr.bf16.mxu0 %v2127
    %2317 = vmatpush1.bf16.msra.mxu0 %v2126
    %2318 = vmatprep.subr.bf16.mxu0 %v2135
    %2319 = vmatpush1.bf16.msra.mxu0 %v2134
    %2320 = vmatprep.subr.bf16.mxu0 %v2143
    %2321 = vmatpush1.bf16.msra.mxu0 %v2142
    %2322 = vmatprep.subr.bf16.mxu0 %v2151
    %2323 = vmatpush1.bf16.msra.mxu0 %v2150
    %2324 = vmatprep.subr.bf16.mxu0 %v2159
    %2325 = vmatpush1.bf16.msra.mxu0 %v2158
    %2326 = vmatprep.mubr.bf16.mxu0 %v1483
    %2327 = vmatmul.mubr.bf16.gmra.mrb[0].mxu0 %v1482
    %v2328 = vpop.f32.mrb[0].mxu0
    %v2329 = vadd.f32 %v1617, %v2328
    %v2330 = vpop.f32.mrb[0].mxu0
    %v2331 = vadd.f32 %v1621, %v2330
    %v2332 = vpop.f32.mrb[0].mxu0
    %v2333 = vadd.f32 %v1617, %v2332
    %v2334 = vpop.f32.mrb[0].mxu0
    %v2335 = vadd.f32 %v1621, %v2334
    %2336 = vdwg.mxu0
    %2337 = vmatprep.subr.bf16.mxu0 %v2041
    %2338 = vmatpush1.bf16.msra.mxu0 %v2040
    %2339 = vmatprep.subr.bf16.mxu0 %v2049
    %2340 = vmatpush1.bf16.msra.mxu0 %v2048
    %2341 = vmatprep.subr.bf16.mxu0 %v2057
    %2342 = vmatpush1.bf16.msra.mxu0 %v2056
    %2343 = vmatprep.subr.bf16.mxu0 %v2065
    %2344 = vmatpush1.bf16.msra.mxu0 %v2064
    %2345 = vmatprep.subr.bf16.mxu0 %v2073
    %2346 = vmatpush1.bf16.msra.mxu0 %v2072
    %2347 = vmatprep.subr.bf16.mxu0 %v2081
    %2348 = vmatpush1.bf16.msra.mxu0 %v2080
    %2349 = vmatprep.subr.bf16.mxu0 %v2089
    %2350 = vmatpush1.bf16.msra.mxu0 %v2088
    %2351 = vmatprep.subr.bf16.mxu0 %v2097
    %2352 = vmatpush1.bf16.msra.mxu0 %v2096
    %2353 = vmatprep.subr.bf16.mxu0 %v2105
    %2354 = vmatpush1.bf16.msra.mxu0 %v2104
    %2355 = vmatprep.subr.bf16.mxu0 %v2113
    %2356 = vmatpush1.bf16.msra.mxu0 %v2112
    %2357 = vmatprep.subr.bf16.mxu0 %v2121
    %2358 = vmatpush1.bf16.msra.mxu0 %v2120
    %2359 = vmatprep.subr.bf16.mxu0 %v2129
    %2360 = vmatpush1.bf16.msra.mxu0 %v2128
    %2361 = vmatprep.subr.bf16.mxu0 %v2137
    %2362 = vmatpush1.bf16.msra.mxu0 %v2136
    %2363 = vmatprep.subr.bf16.mxu0 %v2145
    %2364 = vmatpush1.bf16.msra.mxu0 %v2144
    %2365 = vmatprep.subr.bf16.mxu0 %v2153
    %2366 = vmatpush1.bf16.msra.mxu0 %v2152
    %2367 = vmatprep.subr.bf16.mxu0 %v2161
    %2368 = vmatpush1.bf16.msra.mxu0 %v2160
    %2369 = vmatprep.mubr.bf16.mxu0 %v1483
    %2370 = vmatmul.mubr.bf16.gmra.mrb[0].mxu0 %v1482
    %v2371 = vpop.f32.mrb[0].mxu0
    %v2372 = vadd.f32 %v1625, %v2371
    %v2373 = vpop.f32.mrb[0].mxu0
    %v2374 = vadd.f32 %v1629, %v2373
    %v2375 = vpop.f32.mrb[0].mxu0
    %v2376 = vadd.f32 %v1625, %v2375
    %v2377 = vpop.f32.mrb[0].mxu0
    %v2378 = vadd.f32 %v1629, %v2377
    %2379 = vdwg.mxu0
    %2380 = vmatprep.subr.bf16.mxu0 %v2043
    %2381 = vmatpush1.bf16.msra.mxu0 %v2042
    %2382 = vmatprep.subr.bf16.mxu0 %v2051
    %2383 = vmatpush1.bf16.msra.mxu0 %v2050
    %2384 = vmatprep.subr.bf16.mxu0 %v2059
    %2385 = vmatpush1.bf16.msra.mxu0 %v2058
    %2386 = vmatprep.subr.bf16.mxu0 %v2067
    %2387 = vmatpush1.bf16.msra.mxu0 %v2066
    %2388 = vmatprep.subr.bf16.mxu0 %v2075
    %2389 = vmatpush1.bf16.msra.mxu0 %v2074
    %2390 = vmatprep.subr.bf16.mxu0 %v2083
    %2391 = vmatpush1.bf16.msra.mxu0 %v2082
    %2392 = vmatprep.subr.bf16.mxu0 %v2091
    %2393 = vmatpush1.bf16.msra.mxu0 %v2090
    %2394 = vmatprep.subr.bf16.mxu0 %v2099
    %2395 = vmatpush1.bf16.msra.mxu0 %v2098
    %2396 = vmatprep.subr.bf16.mxu0 %v2107
    %2397 = vmatpush1.bf16.msra.mxu0 %v2106
    %2398 = vmatprep.subr.bf16.mxu0 %v2115
    %2399 = vmatpush1.bf16.msra.mxu0 %v2114
    %2400 = vmatprep.subr.bf16.mxu0 %v2123
    %2401 = vmatpush1.bf16.msra.mxu0 %v2122
    %2402 = vmatprep.subr.bf16.mxu0 %v2131
    %2403 = vmatpush1.bf16.msra.mxu0 %v2130
    %2404 = vmatprep.subr.bf16.mxu0 %v2139
    %2405 = vmatpush1.bf16.msra.mxu0 %v2138
    %2406 = vmatprep.subr.bf16.mxu0 %v2147
    %2407 = vmatpush1.bf16.msra.mxu0 %v2146
    %2408 = vmatprep.subr.bf16.mxu0 %v2155
    %2409 = vmatpush1.bf16.msra.mxu0 %v2154
    %2410 = vmatprep.subr.bf16.mxu0 %v2163
    %2411 = vmatpush1.bf16.msra.mxu0 %v2162
    %2412 = vmatprep.mubr.bf16.mxu0 %v1483
    %2413 = vmatmul.mubr.bf16.gmra.mrb[0].mxu0 %v1482
    %v2414 = vpop.f32.mrb[0].mxu0
    %v2415 = vadd.f32 %v1633, %v2414
    %v2416 = vpop.f32.mrb[0].mxu0
    %v2417 = vadd.f32 %v1637, %v2416
    %v2418 = vpop.f32.mrb[0].mxu0
    %v2419 = vadd.f32 %v1633, %v2418
    %v2420 = vpop.f32.mrb[0].mxu0
    %v2421 = vadd.f32 %v1637, %v2420
    %2422 = vdwg.mxu0
    %2423 = vmatprep.subr.bf16.mxu0 %v2045
    %2424 = vmatpush1.bf16.msra.mxu0 %v2044
    %2425 = vmatprep.subr.bf16.mxu0 %v2053
    %2426 = vmatpush1.bf16.msra.mxu0 %v2052
    %2427 = vmatprep.subr.bf16.mxu0 %v2061
    %2428 = vmatpush1.bf16.msra.mxu0 %v2060
    %2429 = vmatprep.subr.bf16.mxu0 %v2069
    %2430 = vmatpush1.bf16.msra.mxu0 %v2068
    %2431 = vmatprep.subr.bf16.mxu0 %v2077
    %2432 = vmatpush1.bf16.msra.mxu0 %v2076
    %2433 = vmatprep.subr.bf16.mxu0 %v2085
    %2434 = vmatpush1.bf16.msra.mxu0 %v2084
    %2435 = vmatprep.subr.bf16.mxu0 %v2093
    %2436 = vmatpush1.bf16.msra.mxu0 %v2092
    %2437 = vmatprep.subr.bf16.mxu0 %v2101
    %2438 = vmatpush1.bf16.msra.mxu0 %v2100
    %2439 = vmatprep.subr.bf16.mxu0 %v2109
    %2440 = vmatpush1.bf16.msra.mxu0 %v2108
    %2441 = vmatprep.subr.bf16.mxu0 %v2117
    %2442 = vmatpush1.bf16.msra.mxu0 %v2116
    %2443 = vmatprep.subr.bf16.mxu0 %v2125
    %2444 = vmatpush1.bf16.msra.mxu0 %v2124
    %2445 = vmatprep.subr.bf16.mxu0 %v2133
    %2446 = vmatpush1.bf16.msra.mxu0 %v2132
    %2447 = vmatprep.subr.bf16.mxu0 %v2141
    %2448 = vmatpush1.bf16.msra.mxu0 %v2140
    %2449 = vmatprep.subr.bf16.mxu0 %v2149
    %2450 = vmatpush1.bf16.msra.mxu0 %v2148
    %2451 = vmatprep.subr.bf16.mxu0 %v2157
    %2452 = vmatpush1.bf16.msra.mxu0 %v2156
    %2453 = vmatprep.subr.bf16.mxu0 %v2165
    %2454 = vmatpush1.bf16.msra.mxu0 %v2164
    %2455 = vmatprep.mubr.bf16.mxu0 %v1483
    %2456 = vmatmul.mubr.bf16.gmra.mrb[0].mxu0 %v1482
    %v2457 = vpop.f32.mrb[0].mxu0
    %v2458 = vadd.f32 %v1641, %v2457
    %v2459 = vpop.f32.mrb[0].mxu0
    %v2460 = vadd.f32 %v1645, %v2459
    %v2461 = vpop.f32.mrb[0].mxu0
    %v2462 = vadd.f32 %v1641, %v2461
    %v2463 = vpop.f32.mrb[0].mxu0
    %v2464 = vadd.f32 %v1645, %v2463
    %2465 = vdwg.mxu0
    %v2466 = vmax.f32 %v2329, 0.0
    %v2467 = vmax.f32 %v2331, 0.0
    %v2468 = vmax.f32 %v2372, 0.0
    %v2469 = vmax.f32 %v2374, 0.0
    %v2470 = vmax.f32 %v2415, 0.0
    %v2471 = vmax.f32 %v2417, 0.0
    %v2472 = vmax.f32 %v2458, 0.0
    %v2473 = vmax.f32 %v2460, 0.0
    %v2474 = vmax.f32 %v2333, 0.0
    %v2475 = vmax.f32 %v2335, 0.0
    %v2476 = vmax.f32 %v2376, 0.0
    %v2477 = vmax.f32 %v2378, 0.0
    %v2478 = vmax.f32 %v2419, 0.0
    %v2479 = vmax.f32 %v2421, 0.0
    %v2480 = vmax.f32 %v2462, 0.0
    %v2481 = vmax.f32 %v2464, 0.0
    %v2482 = vpack.c.bf16 %v2474, %v2466
    %v2483 = vpack.c.bf16 %v2475, %v2467
    %v2484 = vpack.c.bf16 %v2476, %v2468
    %v2485 = vpack.c.bf16 %v2477, %v2469
    %v2486 = vpack.c.bf16 %v2478, %v2470
    %v2487 = vpack.c.bf16 %v2479, %v2471
    %v2488 = vpack.c.bf16 %v2480, %v2472
    %v2489 = vpack.c.bf16 %v2481, %v2473
    %v2490 = vld [vmem:[#allocation13] sm:$0xff]
    %v2491 = vld [vmem:[#allocation13 + $0x8] sm:$0xff]
    %v2492 = vld [vmem:[#allocation13 + $0x10] sm:$0xff]
    %v2493 = vld [vmem:[#allocation13 + $0x18] sm:$0xff]
    %v2494 = vld [vmem:[#allocation13 + $0x20] sm:$0xff]
    %v2495 = vld [vmem:[#allocation13 + $0x28] sm:$0xff]
    %v2496 = vld [vmem:[#allocation13 + $0x30] sm:$0xff]
    %v2497 = vld [vmem:[#allocation13 + $0x38] sm:$0xff]
    %v2498 = vld [vmem:[#allocation13 + $0x40] sm:$0xff]
    %v2499 = vld [vmem:[#allocation13 + $0x48] sm:$0xff]
    %v2500 = vld [vmem:[#allocation13 + $0x50] sm:$0xff]
    %v2501 = vld [vmem:[#allocation13 + $0x58] sm:$0xff]
    %v2502 = vld [vmem:[#allocation13 + $0x60] sm:$0xff]
    %v2503 = vld [vmem:[#allocation13 + $0x68] sm:$0xff]
    %v2504 = vld [vmem:[#allocation13 + $0x70] sm:$0xff]
    %v2505 = vld [vmem:[#allocation13 + $0x78] sm:$0xff]
    %v2506 = vld [vmem:[#allocation13 + $0x80] sm:$0xff]
    %v2507 = vld [vmem:[#allocation13 + $0x88] sm:$0xff]
    %v2508 = vld [vmem:[#allocation13 + $0x90] sm:$0xff]
    %v2509 = vld [vmem:[#allocation13 + $0x98] sm:$0xff]
    %v2510 = vld [vmem:[#allocation13 + $0xa0] sm:$0xff]
    %v2511 = vld [vmem:[#allocation13 + $0xa8] sm:$0xff]
    %v2512 = vld [vmem:[#allocation13 + $0xb0] sm:$0xff]
    %v2513 = vld [vmem:[#allocation13 + $0xb8] sm:$0xff]
    %v2514 = vld [vmem:[#allocation13 + $0xc0] sm:$0xff]
    %v2515 = vld [vmem:[#allocation13 + $0xc8] sm:$0xff]
    %v2516 = vld [vmem:[#allocation13 + $0xd0] sm:$0xff]
    %v2517 = vld [vmem:[#allocation13 + $0xd8] sm:$0xff]
    %v2518 = vld [vmem:[#allocation13 + $0xe0] sm:$0xff]
    %v2519 = vld [vmem:[#allocation13 + $0xe8] sm:$0xff]
    %v2520 = vld [vmem:[#allocation13 + $0xf0] sm:$0xff]
    %v2521 = vld [vmem:[#allocation13 + $0xf8] sm:$0xff]
    %v2522 = vld [vmem:[#allocation13 + $0x100] sm:$0xff]
    %v2523 = vld [vmem:[#allocation13 + $0x108] sm:$0xff]
    %v2524 = vld [vmem:[#allocation13 + $0x110] sm:$0xff]
    %v2525 = vld [vmem:[#allocation13 + $0x118] sm:$0xff]
    %v2526 = vld [vmem:[#allocation13 + $0x120] sm:$0xff]
    %v2527 = vld [vmem:[#allocation13 + $0x128] sm:$0xff]
    %v2528 = vld [vmem:[#allocation13 + $0x130] sm:$0xff]
    %v2529 = vld [vmem:[#allocation13 + $0x138] sm:$0xff]
    %v2530 = vld [vmem:[#allocation13 + $0x140] sm:$0xff]
    %v2531 = vld [vmem:[#allocation13 + $0x148] sm:$0xff]
    %v2532 = vld [vmem:[#allocation13 + $0x150] sm:$0xff]
    %v2533 = vld [vmem:[#allocation13 + $0x158] sm:$0xff]
    %v2534 = vld [vmem:[#allocation13 + $0x160] sm:$0xff]
    %v2535 = vld [vmem:[#allocation13 + $0x168] sm:$0xff]
    %v2536 = vld [vmem:[#allocation13 + $0x170] sm:$0xff]
    %v2537 = vld [vmem:[#allocation13 + $0x178] sm:$0xff]
    %v2538 = vld [vmem:[#allocation13 + $0x180] sm:$0xff]
    %v2539 = vld [vmem:[#allocation13 + $0x188] sm:$0xff]
    %v2540 = vld [vmem:[#allocation13 + $0x190] sm:$0xff]
    %v2541 = vld [vmem:[#allocation13 + $0x198] sm:$0xff]
    %v2542 = vld [vmem:[#allocation13 + $0x1a0] sm:$0xff]
    %v2543 = vld [vmem:[#allocation13 + $0x1a8] sm:$0xff]
    %v2544 = vld [vmem:[#allocation13 + $0x1b0] sm:$0xff]
    %v2545 = vld [vmem:[#allocation13 + $0x1b8] sm:$0xff]
    %v2546 = vld [vmem:[#allocation13 + $0x1c0] sm:$0xff]
    %v2547 = vld [vmem:[#allocation13 + $0x1c8] sm:$0xff]
    %v2548 = vld [vmem:[#allocation13 + $0x1d0] sm:$0xff]
    %v2549 = vld [vmem:[#allocation13 + $0x1d8] sm:$0xff]
    %v2550 = vld [vmem:[#allocation13 + $0x1e0] sm:$0xff]
    %v2551 = vld [vmem:[#allocation13 + $0x1e8] sm:$0xff]
    %v2552 = vld [vmem:[#allocation13 + $0x1f0] sm:$0xff]
    %v2553 = vld [vmem:[#allocation13 + $0x1f8] sm:$0xff]
    %v2554 = vld [vmem:[#allocation13 + $0x200] sm:$0xff]
    %v2555 = vld [vmem:[#allocation13 + $0x208] sm:$0xff]
    %v2556 = vld [vmem:[#allocation13 + $0x210] sm:$0xff]
    %v2557 = vld [vmem:[#allocation13 + $0x218] sm:$0xff]
    %v2558 = vld [vmem:[#allocation13 + $0x220] sm:$0xff]
    %v2559 = vld [vmem:[#allocation13 + $0x228] sm:$0xff]
    %v2560 = vld [vmem:[#allocation13 + $0x230] sm:$0xff]
    %v2561 = vld [vmem:[#allocation13 + $0x238] sm:$0xff]
    %v2562 = vld [vmem:[#allocation13 + $0x240] sm:$0xff]
    %v2563 = vld [vmem:[#allocation13 + $0x248] sm:$0xff]
    %v2564 = vld [vmem:[#allocation13 + $0x250] sm:$0xff]
    %v2565 = vld [vmem:[#allocation13 + $0x258] sm:$0xff]
    %v2566 = vld [vmem:[#allocation13 + $0x260] sm:$0xff]
    %v2567 = vld [vmem:[#allocation13 + $0x268] sm:$0xff]
    %v2568 = vld [vmem:[#allocation13 + $0x270] sm:$0xff]
    %v2569 = vld [vmem:[#allocation13 + $0x278] sm:$0xff]
    %v2570 = vld [vmem:[#allocation13 + $0x280] sm:$0xff]
    %v2571 = vld [vmem:[#allocation13 + $0x288] sm:$0xff]
    %v2572 = vld [vmem:[#allocation13 + $0x290] sm:$0xff]
    %v2573 = vld [vmem:[#allocation13 + $0x298] sm:$0xff]
    %v2574 = vld [vmem:[#allocation13 + $0x2a0] sm:$0xff]
    %v2575 = vld [vmem:[#allocation13 + $0x2a8] sm:$0xff]
    %v2576 = vld [vmem:[#allocation13 + $0x2b0] sm:$0xff]
    %v2577 = vld [vmem:[#allocation13 + $0x2b8] sm:$0xff]
    %v2578 = vld [vmem:[#allocation13 + $0x2c0] sm:$0xff]
    %v2579 = vld [vmem:[#allocation13 + $0x2c8] sm:$0xff]
    %v2580 = vld [vmem:[#allocation13 + $0x2d0] sm:$0xff]
    %v2581 = vld [vmem:[#allocation13 + $0x2d8] sm:$0xff]
    %v2582 = vld [vmem:[#allocation13 + $0x2e0] sm:$0xff]
    %v2583 = vld [vmem:[#allocation13 + $0x2e8] sm:$0xff]
    %v2584 = vld [vmem:[#allocation13 + $0x2f0] sm:$0xff]
    %v2585 = vld [vmem:[#allocation13 + $0x2f8] sm:$0xff]
    %v2586 = vld [vmem:[#allocation13 + $0x300] sm:$0xff]
    %v2587 = vld [vmem:[#allocation13 + $0x308] sm:$0xff]
    %v2588 = vld [vmem:[#allocation13 + $0x310] sm:$0xff]
    %v2589 = vld [vmem:[#allocation13 + $0x318] sm:$0xff]
    %v2590 = vld [vmem:[#allocation13 + $0x320] sm:$0xff]
    %v2591 = vld [vmem:[#allocation13 + $0x328] sm:$0xff]
    %v2592 = vld [vmem:[#allocation13 + $0x330] sm:$0xff]
    %v2593 = vld [vmem:[#allocation13 + $0x338] sm:$0xff]
    %v2594 = vld [vmem:[#allocation13 + $0x340] sm:$0xff]
    %v2595 = vld [vmem:[#allocation13 + $0x348] sm:$0xff]
    %v2596 = vld [vmem:[#allocation13 + $0x350] sm:$0xff]
    %v2597 = vld [vmem:[#allocation13 + $0x358] sm:$0xff]
    %v2598 = vld [vmem:[#allocation13 + $0x360] sm:$0xff]
    %v2599 = vld [vmem:[#allocation13 + $0x368] sm:$0xff]
    %v2600 = vld [vmem:[#allocation13 + $0x370] sm:$0xff]
    %v2601 = vld [vmem:[#allocation13 + $0x378] sm:$0xff]
    %v2602 = vld [vmem:[#allocation13 + $0x380] sm:$0xff]
    %v2603 = vld [vmem:[#allocation13 + $0x388] sm:$0xff]
    %v2604 = vld [vmem:[#allocation13 + $0x390] sm:$0xff]
    %v2605 = vld [vmem:[#allocation13 + $0x398] sm:$0xff]
    %v2606 = vld [vmem:[#allocation13 + $0x3a0] sm:$0xff]
    %v2607 = vld [vmem:[#allocation13 + $0x3a8] sm:$0xff]
    %v2608 = vld [vmem:[#allocation13 + $0x3b0] sm:$0xff]
    %v2609 = vld [vmem:[#allocation13 + $0x3b8] sm:$0xff]
    %v2610 = vld [vmem:[#allocation13 + $0x3c0] sm:$0xff]
    %v2611 = vld [vmem:[#allocation13 + $0x3c8] sm:$0xff]
    %v2612 = vld [vmem:[#allocation13 + $0x3d0] sm:$0xff]
    %v2613 = vld [vmem:[#allocation13 + $0x3d8] sm:$0xff]
    %v2614 = vld [vmem:[#allocation13 + $0x3e0] sm:$0xff]
    %v2615 = vld [vmem:[#allocation13 + $0x3e8] sm:$0xff]
    %v2616 = vld [vmem:[#allocation13 + $0x3f0] sm:$0xff]
    %v2617 = vld [vmem:[#allocation13 + $0x3f8] sm:$0xff]
    %v2618 = vld [vmem:[%s12] sm:$0x3]
    %v2620 = vlaneseq
    %v2621 = vshrl.u32 %v2620, 7
    %v2622 = vsub.s32 0, %v2621
    %v2623 = vrot.slane %v2618, %v2622
    %v2624 = vlaneseq
    %v2625 = vshrl.u32 %v2624, 7
    %v2626 = vsub.s32 1, %v2625
    %v2627 = vrot.slane %v2618, %v2626
    %v2758 = vunpack.c.l.b16 %v2490
    %v2759 = vunpack.c.h.b16 %v2490
    %v2760 = vunpack.c.l.b16 %v2491
    %v2761 = vunpack.c.h.b16 %v2491
    %v2762 = vunpack.c.l.b16 %v2492
    %v2763 = vunpack.c.h.b16 %v2492
    %v2764 = vunpack.c.l.b16 %v2493
    %v2765 = vunpack.c.h.b16 %v2493
    %v2766 = vunpack.c.l.b16 %v2494
    %v2767 = vunpack.c.h.b16 %v2494
    %v2768 = vunpack.c.l.b16 %v2495
    %v2769 = vunpack.c.h.b16 %v2495
    %v2770 = vunpack.c.l.b16 %v2496
    %v2771 = vunpack.c.h.b16 %v2496
    %v2772 = vunpack.c.l.b16 %v2497
    %v2773 = vunpack.c.h.b16 %v2497
    %v2774 = vunpack.c.l.b16 %v2498
    %v2775 = vunpack.c.h.b16 %v2498
    %v2776 = vunpack.c.l.b16 %v2499
    %v2777 = vunpack.c.h.b16 %v2499
    %v2778 = vunpack.c.l.b16 %v2500
    %v2779 = vunpack.c.h.b16 %v2500
    %v2780 = vunpack.c.l.b16 %v2501
    %v2781 = vunpack.c.h.b16 %v2501
    %v2782 = vunpack.c.l.b16 %v2502
    %v2783 = vunpack.c.h.b16 %v2502
    %v2784 = vunpack.c.l.b16 %v2503
    %v2785 = vunpack.c.h.b16 %v2503
    %v2786 = vunpack.c.l.b16 %v2504
    %v2787 = vunpack.c.h.b16 %v2504
    %v2788 = vunpack.c.l.b16 %v2505
    %v2789 = vunpack.c.h.b16 %v2505
    %v2790 = vunpack.c.l.b16 %v2506
    %v2791 = vunpack.c.h.b16 %v2506
    %v2792 = vunpack.c.l.b16 %v2507
    %v2793 = vunpack.c.h.b16 %v2507
    %v2794 = vunpack.c.l.b16 %v2508
    %v2795 = vunpack.c.h.b16 %v2508
    %v2796 = vunpack.c.l.b16 %v2509
    %v2797 = vunpack.c.h.b16 %v2509
    %v2798 = vunpack.c.l.b16 %v2510
    %v2799 = vunpack.c.h.b16 %v2510
    %v2800 = vunpack.c.l.b16 %v2511
    %v2801 = vunpack.c.h.b16 %v2511
    %v2802 = vunpack.c.l.b16 %v2512
    %v2803 = vunpack.c.h.b16 %v2512
    %v2804 = vunpack.c.l.b16 %v2513
    %v2805 = vunpack.c.h.b16 %v2513
    %v2806 = vunpack.c.l.b16 %v2514
    %v2807 = vunpack.c.h.b16 %v2514
    %v2808 = vunpack.c.l.b16 %v2515
    %v2809 = vunpack.c.h.b16 %v2515
    %v2810 = vunpack.c.l.b16 %v2516
    %v2811 = vunpack.c.h.b16 %v2516
    %v2812 = vunpack.c.l.b16 %v2517
    %v2813 = vunpack.c.h.b16 %v2517
    %v2814 = vunpack.c.l.b16 %v2518
    %v2815 = vunpack.c.h.b16 %v2518
    %v2816 = vunpack.c.l.b16 %v2519
    %v2817 = vunpack.c.h.b16 %v2519
    %v2818 = vunpack.c.l.b16 %v2520
    %v2819 = vunpack.c.h.b16 %v2520
    %v2820 = vunpack.c.l.b16 %v2521
    %v2821 = vunpack.c.h.b16 %v2521
    %v2822 = vunpack.c.l.b16 %v2522
    %v2823 = vunpack.c.h.b16 %v2522
    %v2824 = vunpack.c.l.b16 %v2523
    %v2825 = vunpack.c.h.b16 %v2523
    %v2826 = vunpack.c.l.b16 %v2524
    %v2827 = vunpack.c.h.b16 %v2524
    %v2828 = vunpack.c.l.b16 %v2525
    %v2829 = vunpack.c.h.b16 %v2525
    %v2830 = vunpack.c.l.b16 %v2526
    %v2831 = vunpack.c.h.b16 %v2526
    %v2832 = vunpack.c.l.b16 %v2527
    %v2833 = vunpack.c.h.b16 %v2527
    %v2834 = vunpack.c.l.b16 %v2528
    %v2835 = vunpack.c.h.b16 %v2528
    %v2836 = vunpack.c.l.b16 %v2529
    %v2837 = vunpack.c.h.b16 %v2529
    %v2838 = vunpack.c.l.b16 %v2530
    %v2839 = vunpack.c.h.b16 %v2530
    %v2840 = vunpack.c.l.b16 %v2531
    %v2841 = vunpack.c.h.b16 %v2531
    %v2842 = vunpack.c.l.b16 %v2532
    %v2843 = vunpack.c.h.b16 %v2532
    %v2844 = vunpack.c.l.b16 %v2533
    %v2845 = vunpack.c.h.b16 %v2533
    %v2846 = vunpack.c.l.b16 %v2534
    %v2847 = vunpack.c.h.b16 %v2534
    %v2848 = vunpack.c.l.b16 %v2535
    %v2849 = vunpack.c.h.b16 %v2535
    %v2850 = vunpack.c.l.b16 %v2536
    %v2851 = vunpack.c.h.b16 %v2536
    %v2852 = vunpack.c.l.b16 %v2537
    %v2853 = vunpack.c.h.b16 %v2537
    %v2854 = vunpack.c.l.b16 %v2538
    %v2855 = vunpack.c.h.b16 %v2538
    %v2856 = vunpack.c.l.b16 %v2539
    %v2857 = vunpack.c.h.b16 %v2539
    %v2858 = vunpack.c.l.b16 %v2540
    %v2859 = vunpack.c.h.b16 %v2540
    %v2860 = vunpack.c.l.b16 %v2541
    %v2861 = vunpack.c.h.b16 %v2541
    %v2862 = vunpack.c.l.b16 %v2542
    %v2863 = vunpack.c.h.b16 %v2542
    %v2864 = vunpack.c.l.b16 %v2543
    %v2865 = vunpack.c.h.b16 %v2543
    %v2866 = vunpack.c.l.b16 %v2544
    %v2867 = vunpack.c.h.b16 %v2544
    %v2868 = vunpack.c.l.b16 %v2545
    %v2869 = vunpack.c.h.b16 %v2545
    %v2870 = vunpack.c.l.b16 %v2546
    %v2871 = vunpack.c.h.b16 %v2546
    %v2872 = vunpack.c.l.b16 %v2547
    %v2873 = vunpack.c.h.b16 %v2547
    %v2874 = vunpack.c.l.b16 %v2548
    %v2875 = vunpack.c.h.b16 %v2548
    %v2876 = vunpack.c.l.b16 %v2549
    %v2877 = vunpack.c.h.b16 %v2549
    %v2878 = vunpack.c.l.b16 %v2550
    %v2879 = vunpack.c.h.b16 %v2550
    %v2880 = vunpack.c.l.b16 %v2551
    %v2881 = vunpack.c.h.b16 %v2551
    %v2882 = vunpack.c.l.b16 %v2552
    %v2883 = vunpack.c.h.b16 %v2552
    %v2884 = vunpack.c.l.b16 %v2553
    %v2885 = vunpack.c.h.b16 %v2553
    %v2886 = vunpack.c.l.b16 %v2554
    %v2887 = vunpack.c.h.b16 %v2554
    %v2888 = vunpack.c.l.b16 %v2555
    %v2889 = vunpack.c.h.b16 %v2555
    %v2890 = vunpack.c.l.b16 %v2556
    %v2891 = vunpack.c.h.b16 %v2556
    %v2892 = vunpack.c.l.b16 %v2557
    %v2893 = vunpack.c.h.b16 %v2557
    %v2894 = vunpack.c.l.b16 %v2558
    %v2895 = vunpack.c.h.b16 %v2558
    %v2896 = vunpack.c.l.b16 %v2559
    %v2897 = vunpack.c.h.b16 %v2559
    %v2898 = vunpack.c.l.b16 %v2560
    %v2899 = vunpack.c.h.b16 %v2560
    %v2900 = vunpack.c.l.b16 %v2561
    %v2901 = vunpack.c.h.b16 %v2561
    %v2902 = vunpack.c.l.b16 %v2562
    %v2903 = vunpack.c.h.b16 %v2562
    %v2904 = vunpack.c.l.b16 %v2563
    %v2905 = vunpack.c.h.b16 %v2563
    %v2906 = vunpack.c.l.b16 %v2564
    %v2907 = vunpack.c.h.b16 %v2564
    %v2908 = vunpack.c.l.b16 %v2565
    %v2909 = vunpack.c.h.b16 %v2565
    %v2910 = vunpack.c.l.b16 %v2566
    %v2911 = vunpack.c.h.b16 %v2566
    %v2912 = vunpack.c.l.b16 %v2567
    %v2913 = vunpack.c.h.b16 %v2567
    %v2914 = vunpack.c.l.b16 %v2568
    %v2915 = vunpack.c.h.b16 %v2568
    %v2916 = vunpack.c.l.b16 %v2569
    %v2917 = vunpack.c.h.b16 %v2569
    %v2918 = vunpack.c.l.b16 %v2570
    %v2919 = vunpack.c.h.b16 %v2570
    %v2920 = vunpack.c.l.b16 %v2571
    %v2921 = vunpack.c.h.b16 %v2571
    %v2922 = vunpack.c.l.b16 %v2572
    %v2923 = vunpack.c.h.b16 %v2572
    %v2924 = vunpack.c.l.b16 %v2573
    %v2925 = vunpack.c.h.b16 %v2573
    %v2926 = vunpack.c.l.b16 %v2574
    %v2927 = vunpack.c.h.b16 %v2574
    %v2928 = vunpack.c.l.b16 %v2575
    %v2929 = vunpack.c.h.b16 %v2575
    %v2930 = vunpack.c.l.b16 %v2576
    %v2931 = vunpack.c.h.b16 %v2576
    %v2932 = vunpack.c.l.b16 %v2577
    %v2933 = vunpack.c.h.b16 %v2577
    %v2934 = vunpack.c.l.b16 %v2578
    %v2935 = vunpack.c.h.b16 %v2578
    %v2936 = vunpack.c.l.b16 %v2579
    %v2937 = vunpack.c.h.b16 %v2579
    %v2938 = vunpack.c.l.b16 %v2580
    %v2939 = vunpack.c.h.b16 %v2580
    %v2940 = vunpack.c.l.b16 %v2581
    %v2941 = vunpack.c.h.b16 %v2581
    %v2942 = vunpack.c.l.b16 %v2582
    %v2943 = vunpack.c.h.b16 %v2582
    %v2944 = vunpack.c.l.b16 %v2583
    %v2945 = vunpack.c.h.b16 %v2583
    %v2946 = vunpack.c.l.b16 %v2584
    %v2947 = vunpack.c.h.b16 %v2584
    %v2948 = vunpack.c.l.b16 %v2585
    %v2949 = vunpack.c.h.b16 %v2585
    %v2950 = vunpack.c.l.b16 %v2586
    %v2951 = vunpack.c.h.b16 %v2586
    %v2952 = vunpack.c.l.b16 %v2587
    %v2953 = vunpack.c.h.b16 %v2587
    %v2954 = vunpack.c.l.b16 %v2588
    %v2955 = vunpack.c.h.b16 %v2588
    %v2956 = vunpack.c.l.b16 %v2589
    %v2957 = vunpack.c.h.b16 %v2589
    %v2958 = vunpack.c.l.b16 %v2590
    %v2959 = vunpack.c.h.b16 %v2590
    %v2960 = vunpack.c.l.b16 %v2591
    %v2961 = vunpack.c.h.b16 %v2591
    %v2962 = vunpack.c.l.b16 %v2592
    %v2963 = vunpack.c.h.b16 %v2592
    %v2964 = vunpack.c.l.b16 %v2593
    %v2965 = vunpack.c.h.b16 %v2593
    %v2966 = vunpack.c.l.b16 %v2594
    %v2967 = vunpack.c.h.b16 %v2594
    %v2968 = vunpack.c.l.b16 %v2595
    %v2969 = vunpack.c.h.b16 %v2595
    %v2970 = vunpack.c.l.b16 %v2596
    %v2971 = vunpack.c.h.b16 %v2596
    %v2972 = vunpack.c.l.b16 %v2597
    %v2973 = vunpack.c.h.b16 %v2597
    %v2974 = vunpack.c.l.b16 %v2598
    %v2975 = vunpack.c.h.b16 %v2598
    %v2976 = vunpack.c.l.b16 %v2599
    %v2977 = vunpack.c.h.b16 %v2599
    %v2978 = vunpack.c.l.b16 %v2600
    %v2979 = vunpack.c.h.b16 %v2600
    %v2980 = vunpack.c.l.b16 %v2601
    %v2981 = vunpack.c.h.b16 %v2601
    %v2982 = vunpack.c.l.b16 %v2602
    %v2983 = vunpack.c.h.b16 %v2602
    %v2984 = vunpack.c.l.b16 %v2603
    %v2985 = vunpack.c.h.b16 %v2603
    %v2986 = vunpack.c.l.b16 %v2604
    %v2987 = vunpack.c.h.b16 %v2604
    %v2988 = vunpack.c.l.b16 %v2605
    %v2989 = vunpack.c.h.b16 %v2605
    %v2990 = vunpack.c.l.b16 %v2606
    %v2991 = vunpack.c.h.b16 %v2606
    %v2992 = vunpack.c.l.b16 %v2607
    %v2993 = vunpack.c.h.b16 %v2607
    %v2994 = vunpack.c.l.b16 %v2608
    %v2995 = vunpack.c.h.b16 %v2608
    %v2996 = vunpack.c.l.b16 %v2609
    %v2997 = vunpack.c.h.b16 %v2609
    %v2998 = vunpack.c.l.b16 %v2610
    %v2999 = vunpack.c.h.b16 %v2610
    %v3000 = vunpack.c.l.b16 %v2611
    %v3001 = vunpack.c.h.b16 %v2611
    %v3002 = vunpack.c.l.b16 %v2612
    %v3003 = vunpack.c.h.b16 %v2612
    %v3004 = vunpack.c.l.b16 %v2613
    %v3005 = vunpack.c.h.b16 %v2613
    %v3006 = vunpack.c.l.b16 %v2614
    %v3007 = vunpack.c.h.b16 %v2614
    %v3008 = vunpack.c.l.b16 %v2615
    %v3009 = vunpack.c.h.b16 %v2615
    %v3010 = vunpack.c.l.b16 %v2616
    %v3011 = vunpack.c.h.b16 %v2616
    %v3012 = vunpack.c.l.b16 %v2617
    %v3013 = vunpack.c.h.b16 %v2617
    %v3014 = vpack.c.b16 %v2760, %v2758
    %v3015 = vpack.c.b16 %v2761, %v2759
    %v3016 = vpack.c.b16 %v2764, %v2762
    %v3017 = vpack.c.b16 %v2765, %v2763
    %v3018 = vpack.c.b16 %v2768, %v2766
    %v3019 = vpack.c.b16 %v2769, %v2767
    %v3020 = vpack.c.b16 %v2772, %v2770
    %v3021 = vpack.c.b16 %v2773, %v2771
    %v3022 = vpack.c.b16 %v2776, %v2774
    %v3023 = vpack.c.b16 %v2777, %v2775
    %v3024 = vpack.c.b16 %v2780, %v2778
    %v3025 = vpack.c.b16 %v2781, %v2779
    %v3026 = vpack.c.b16 %v2784, %v2782
    %v3027 = vpack.c.b16 %v2785, %v2783
    %v3028 = vpack.c.b16 %v2788, %v2786
    %v3029 = vpack.c.b16 %v2789, %v2787
    %v3030 = vpack.c.b16 %v2792, %v2790
    %v3031 = vpack.c.b16 %v2793, %v2791
    %v3032 = vpack.c.b16 %v2796, %v2794
    %v3033 = vpack.c.b16 %v2797, %v2795
    %v3034 = vpack.c.b16 %v2800, %v2798
    %v3035 = vpack.c.b16 %v2801, %v2799
    %v3036 = vpack.c.b16 %v2804, %v2802
    %v3037 = vpack.c.b16 %v2805, %v2803
    %v3038 = vpack.c.b16 %v2808, %v2806
    %v3039 = vpack.c.b16 %v2809, %v2807
    %v3040 = vpack.c.b16 %v2812, %v2810
    %v3041 = vpack.c.b16 %v2813, %v2811
    %v3042 = vpack.c.b16 %v2816, %v2814
    %v3043 = vpack.c.b16 %v2817, %v2815
    %v3044 = vpack.c.b16 %v2820, %v2818
    %v3045 = vpack.c.b16 %v2821, %v2819
    %v3046 = vpack.c.b16 %v2824, %v2822
    %v3047 = vpack.c.b16 %v2825, %v2823
    %v3048 = vpack.c.b16 %v2828, %v2826
    %v3049 = vpack.c.b16 %v2829, %v2827
    %v3050 = vpack.c.b16 %v2832, %v2830
    %v3051 = vpack.c.b16 %v2833, %v2831
    %v3052 = vpack.c.b16 %v2836, %v2834
    %v3053 = vpack.c.b16 %v2837, %v2835
    %v3054 = vpack.c.b16 %v2840, %v2838
    %v3055 = vpack.c.b16 %v2841, %v2839
    %v3056 = vpack.c.b16 %v2844, %v2842
    %v3057 = vpack.c.b16 %v2845, %v2843
    %v3058 = vpack.c.b16 %v2848, %v2846
    %v3059 = vpack.c.b16 %v2849, %v2847
    %v3060 = vpack.c.b16 %v2852, %v2850
    %v3061 = vpack.c.b16 %v2853, %v2851
    %v3062 = vpack.c.b16 %v2856, %v2854
    %v3063 = vpack.c.b16 %v2857, %v2855
    %v3064 = vpack.c.b16 %v2860, %v2858
    %v3065 = vpack.c.b16 %v2861, %v2859
    %v3066 = vpack.c.b16 %v2864, %v2862
    %v3067 = vpack.c.b16 %v2865, %v2863
    %v3068 = vpack.c.b16 %v2868, %v2866
    %v3069 = vpack.c.b16 %v2869, %v2867
    %v3070 = vpack.c.b16 %v2872, %v2870
    %v3071 = vpack.c.b16 %v2873, %v2871
    %v3072 = vpack.c.b16 %v2876, %v2874
    %v3073 = vpack.c.b16 %v2877, %v2875
    %v3074 = vpack.c.b16 %v2880, %v2878
    %v3075 = vpack.c.b16 %v2881, %v2879
    %v3076 = vpack.c.b16 %v2884, %v2882
    %v3077 = vpack.c.b16 %v2885, %v2883
    %v3078 = vpack.c.b16 %v2888, %v2886
    %v3079 = vpack.c.b16 %v2889, %v2887
    %v3080 = vpack.c.b16 %v2892, %v2890
    %v3081 = vpack.c.b16 %v2893, %v2891
    %v3082 = vpack.c.b16 %v2896, %v2894
    %v3083 = vpack.c.b16 %v2897, %v2895
    %v3084 = vpack.c.b16 %v2900, %v2898
    %v3085 = vpack.c.b16 %v2901, %v2899
    %v3086 = vpack.c.b16 %v2904, %v2902
    %v3087 = vpack.c.b16 %v2905, %v2903
    %v3088 = vpack.c.b16 %v2908, %v2906
    %v3089 = vpack.c.b16 %v2909, %v2907
    %v3090 = vpack.c.b16 %v2912, %v2910
    %v3091 = vpack.c.b16 %v2913, %v2911
    %v3092 = vpack.c.b16 %v2916, %v2914
    %v3093 = vpack.c.b16 %v2917, %v2915
    %v3094 = vpack.c.b16 %v2920, %v2918
    %v3095 = vpack.c.b16 %v2921, %v2919
    %v3096 = vpack.c.b16 %v2924, %v2922
    %v3097 = vpack.c.b16 %v2925, %v2923
    %v3098 = vpack.c.b16 %v2928, %v2926
    %v3099 = vpack.c.b16 %v2929, %v2927
    %v3100 = vpack.c.b16 %v2932, %v2930
    %v3101 = vpack.c.b16 %v2933, %v2931
    %v3102 = vpack.c.b16 %v2936, %v2934
    %v3103 = vpack.c.b16 %v2937, %v2935
    %v3104 = vpack.c.b16 %v2940, %v2938
    %v3105 = vpack.c.b16 %v2941, %v2939
    %v3106 = vpack.c.b16 %v2944, %v2942
    %v3107 = vpack.c.b16 %v2945, %v2943
    %v3108 = vpack.c.b16 %v2948, %v2946
    %v3109 = vpack.c.b16 %v2949, %v2947
    %v3110 = vpack.c.b16 %v2952, %v2950
    %v3111 = vpack.c.b16 %v2953, %v2951
    %v3112 = vpack.c.b16 %v2956, %v2954
    %v3113 = vpack.c.b16 %v2957, %v2955
    %v3114 = vpack.c.b16 %v2960, %v2958
    %v3115 = vpack.c.b16 %v2961, %v2959
    %v3116 = vpack.c.b16 %v2964, %v2962
    %v3117 = vpack.c.b16 %v2965, %v2963
    %v3118 = vpack.c.b16 %v2968, %v2966
    %v3119 = vpack.c.b16 %v2969, %v2967
    %v3120 = vpack.c.b16 %v2972, %v2970
    %v3121 = vpack.c.b16 %v2973, %v2971
    %v3122 = vpack.c.b16 %v2976, %v2974
    %v3123 = vpack.c.b16 %v2977, %v2975
    %v3124 = vpack.c.b16 %v2980, %v2978
    %v3125 = vpack.c.b16 %v2981, %v2979
    %v3126 = vpack.c.b16 %v2984, %v2982
    %v3127 = vpack.c.b16 %v2985, %v2983
    %v3128 = vpack.c.b16 %v2988, %v2986
    %v3129 = vpack.c.b16 %v2989, %v2987
    %v3130 = vpack.c.b16 %v2992, %v2990
    %v3131 = vpack.c.b16 %v2993, %v2991
    %v3132 = vpack.c.b16 %v2996, %v2994
    %v3133 = vpack.c.b16 %v2997, %v2995
    %v3134 = vpack.c.b16 %v3000, %v2998
    %v3135 = vpack.c.b16 %v3001, %v2999
    %v3136 = vpack.c.b16 %v3004, %v3002
    %v3137 = vpack.c.b16 %v3005, %v3003
    %v3138 = vpack.c.b16 %v3008, %v3006
    %v3139 = vpack.c.b16 %v3009, %v3007
    %v3140 = vpack.c.b16 %v3012, %v3010
    %v3141 = vpack.c.b16 %v3013, %v3011
    %3270 = vmatprep.subr.bf16.mxu0 %v3015
    %3271 = vmatpush1.bf16.msra.mxu0 %v3014
    %3272 = vmatprep.subr.bf16.mxu0 %v3017
    %3273 = vmatpush1.bf16.msra.mxu0 %v3016
    %3274 = vmatprep.subr.bf16.mxu0 %v3019
    %3275 = vmatpush1.bf16.msra.mxu0 %v3018
    %3276 = vmatprep.subr.bf16.mxu0 %v3021
    %3277 = vmatpush1.bf16.msra.mxu0 %v3020
    %3278 = vmatprep.subr.bf16.mxu0 %v3023
    %3279 = vmatpush1.bf16.msra.mxu0 %v3022
    %3280 = vmatprep.subr.bf16.mxu0 %v3025
    %3281 = vmatpush1.bf16.msra.mxu0 %v3024
    %3282 = vmatprep.subr.bf16.mxu0 %v3027
    %3283 = vmatpush1.bf16.msra.mxu0 %v3026
    %3284 = vmatprep.subr.bf16.mxu0 %v3029
    %3285 = vmatpush1.bf16.msra.mxu0 %v3028
    %3286 = vmatprep.subr.bf16.mxu0 %v3031
    %3287 = vmatpush1.bf16.msra.mxu0 %v3030
    %3288 = vmatprep.subr.bf16.mxu0 %v3033
    %3289 = vmatpush1.bf16.msra.mxu0 %v3032
    %3290 = vmatprep.subr.bf16.mxu0 %v3035
    %3291 = vmatpush1.bf16.msra.mxu0 %v3034
    %3292 = vmatprep.subr.bf16.mxu0 %v3037
    %3293 = vmatpush1.bf16.msra.mxu0 %v3036
    %3294 = vmatprep.subr.bf16.mxu0 %v3039
    %3295 = vmatpush1.bf16.msra.mxu0 %v3038
    %3296 = vmatprep.subr.bf16.mxu0 %v3041
    %3297 = vmatpush1.bf16.msra.mxu0 %v3040
    %3298 = vmatprep.subr.bf16.mxu0 %v3043
    %3299 = vmatpush1.bf16.msra.mxu0 %v3042
    %3300 = vmatprep.subr.bf16.mxu0 %v3045
    %3301 = vmatpush1.bf16.msra.mxu0 %v3044
    %3302 = vmatprep.mubr.bf16.mxu0 %v2483
    %3303 = vmatmul.mubr.bf16.gmra.mrb[0].mxu0 %v2482
    %v3304 = vpop.f32.mrb[0].mxu0
    %v3305 = vadd.f32 %v2623, %v3304
    %v3306 = vpop.f32.mrb[0].mxu0
    %v3307 = vadd.f32 %v2627, %v3306
    %v3308 = vpop.f32.mrb[0].mxu0
    %v3309 = vadd.f32 %v2623, %v3308
    %v3310 = vpop.f32.mrb[0].mxu0
    %v3311 = vadd.f32 %v2627, %v3310
    %3312 = vdwg.mxu0
    %3313 = vmatprep.subr.bf16.mxu0 %v3047
    %3314 = vmatpush1.bf16.msra.mxu0 %v3046
    %3315 = vmatprep.subr.bf16.mxu0 %v3049
    %3316 = vmatpush1.bf16.msra.mxu0 %v3048
    %3317 = vmatprep.subr.bf16.mxu0 %v3051
    %3318 = vmatpush1.bf16.msra.mxu0 %v3050
    %3319 = vmatprep.subr.bf16.mxu0 %v3053
    %3320 = vmatpush1.bf16.msra.mxu0 %v3052
    %3321 = vmatprep.subr.bf16.mxu0 %v3055
    %3322 = vmatpush1.bf16.msra.mxu0 %v3054
    %3323 = vmatprep.subr.bf16.mxu0 %v3057
    %3324 = vmatpush1.bf16.msra.mxu0 %v3056
    %3325 = vmatprep.subr.bf16.mxu0 %v3059
    %3326 = vmatpush1.bf16.msra.mxu0 %v3058
    %3327 = vmatprep.subr.bf16.mxu0 %v3061
    %3328 = vmatpush1.bf16.msra.mxu0 %v3060
    %3329 = vmatprep.subr.bf16.mxu0 %v3063
    %3330 = vmatpush1.bf16.msra.mxu0 %v3062
    %3331 = vmatprep.subr.bf16.mxu0 %v3065
    %3332 = vmatpush1.bf16.msra.mxu0 %v3064
    %3333 = vmatprep.subr.bf16.mxu0 %v3067
    %3334 = vmatpush1.bf16.msra.mxu0 %v3066
    %3335 = vmatprep.subr.bf16.mxu0 %v3069
    %3336 = vmatpush1.bf16.msra.mxu0 %v3068
    %3337 = vmatprep.subr.bf16.mxu0 %v3071
    %3338 = vmatpush1.bf16.msra.mxu0 %v3070
    %3339 = vmatprep.subr.bf16.mxu0 %v3073
    %3340 = vmatpush1.bf16.msra.mxu0 %v3072
    %3341 = vmatprep.subr.bf16.mxu0 %v3075
    %3342 = vmatpush1.bf16.msra.mxu0 %v3074
    %3343 = vmatprep.subr.bf16.mxu0 %v3077
    %3344 = vmatpush1.bf16.msra.mxu0 %v3076
    %3345 = vmatprep.mubr.bf16.mxu0 %v2485
    %3346 = vmatmul.mubr.bf16.gmra.mrb[0].mxu0 %v2484
    %v3347 = vpop.f32.mrb[0].mxu0
    %v3348 = vadd.f32 %v3305, %v3347
    %v3349 = vpop.f32.mrb[0].mxu0
    %v3350 = vadd.f32 %v3307, %v3349
    %v3351 = vpop.f32.mrb[0].mxu0
    %v3352 = vadd.f32 %v3309, %v3351
    %v3353 = vpop.f32.mrb[0].mxu0
    %v3354 = vadd.f32 %v3311, %v3353
    %3355 = vdwg.mxu0
    %3356 = vmatprep.subr.bf16.mxu0 %v3079
    %3357 = vmatpush1.bf16.msra.mxu0 %v3078
    %3358 = vmatprep.subr.bf16.mxu0 %v3081
    %3359 = vmatpush1.bf16.msra.mxu0 %v3080
    %3360 = vmatprep.subr.bf16.mxu0 %v3083
    %3361 = vmatpush1.bf16.msra.mxu0 %v3082
    %3362 = vmatprep.subr.bf16.mxu0 %v3085
    %3363 = vmatpush1.bf16.msra.mxu0 %v3084
    %3364 = vmatprep.subr.bf16.mxu0 %v3087
    %3365 = vmatpush1.bf16.msra.mxu0 %v3086
    %3366 = vmatprep.subr.bf16.mxu0 %v3089
    %3367 = vmatpush1.bf16.msra.mxu0 %v3088
    %3368 = vmatprep.subr.bf16.mxu0 %v3091
    %3369 = vmatpush1.bf16.msra.mxu0 %v3090
    %3370 = vmatprep.subr.bf16.mxu0 %v3093
    %3371 = vmatpush1.bf16.msra.mxu0 %v3092
    %3372 = vmatprep.subr.bf16.mxu0 %v3095
    %3373 = vmatpush1.bf16.msra.mxu0 %v3094
    %3374 = vmatprep.subr.bf16.mxu0 %v3097
    %3375 = vmatpush1.bf16.msra.mxu0 %v3096
    %3376 = vmatprep.subr.bf16.mxu0 %v3099
    %3377 = vmatpush1.bf16.msra.mxu0 %v3098
    %3378 = vmatprep.subr.bf16.mxu0 %v3101
    %3379 = vmatpush1.bf16.msra.mxu0 %v3100
    %3380 = vmatprep.subr.bf16.mxu0 %v3103
    %3381 = vmatpush1.bf16.msra.mxu0 %v3102
    %3382 = vmatprep.subr.bf16.mxu0 %v3105
    %3383 = vmatpush1.bf16.msra.mxu0 %v3104
    %3384 = vmatprep.subr.bf16.mxu0 %v3107
    %3385 = vmatpush1.bf16.msra.mxu0 %v3106
    %3386 = vmatprep.subr.bf16.mxu0 %v3109
    %3387 = vmatpush1.bf16.msra.mxu0 %v3108
    %3388 = vmatprep.mubr.bf16.mxu0 %v2487
    %3389 = vmatmul.mubr.bf16.gmra.mrb[0].mxu0 %v2486
    %v3390 = vpop.f32.mrb[0].mxu0
    %v3391 = vadd.f32 %v3348, %v3390
    %v3392 = vpop.f32.mrb[0].mxu0
    %v3393 = vadd.f32 %v3350, %v3392
    %v3394 = vpop.f32.mrb[0].mxu0
    %v3395 = vadd.f32 %v3352, %v3394
    %v3396 = vpop.f32.mrb[0].mxu0
    %v3397 = vadd.f32 %v3354, %v3396
    %3398 = vdwg.mxu0
    %3399 = vmatprep.subr.bf16.mxu0 %v3111
    %3400 = vmatpush1.bf16.msra.mxu0 %v3110
    %3401 = vmatprep.subr.bf16.mxu0 %v3113
    %3402 = vmatpush1.bf16.msra.mxu0 %v3112
    %3403 = vmatprep.subr.bf16.mxu0 %v3115
    %3404 = vmatpush1.bf16.msra.mxu0 %v3114
    %3405 = vmatprep.subr.bf16.mxu0 %v3117
    %3406 = vmatpush1.bf16.msra.mxu0 %v3116
    %3407 = vmatprep.subr.bf16.mxu0 %v3119
    %3408 = vmatpush1.bf16.msra.mxu0 %v3118
    %3409 = vmatprep.subr.bf16.mxu0 %v3121
    %3410 = vmatpush1.bf16.msra.mxu0 %v3120
    %3411 = vmatprep.subr.bf16.mxu0 %v3123
    %3412 = vmatpush1.bf16.msra.mxu0 %v3122
    %3413 = vmatprep.subr.bf16.mxu0 %v3125
    %3414 = vmatpush1.bf16.msra.mxu0 %v3124
    %3415 = vmatprep.subr.bf16.mxu0 %v3127
    %3416 = vmatpush1.bf16.msra.mxu0 %v3126
    %3417 = vmatprep.subr.bf16.mxu0 %v3129
    %3418 = vmatpush1.bf16.msra.mxu0 %v3128
    %3419 = vmatprep.subr.bf16.mxu0 %v3131
    %3420 = vmatpush1.bf16.msra.mxu0 %v3130
    %3421 = vmatprep.subr.bf16.mxu0 %v3133
    %3422 = vmatpush1.bf16.msra.mxu0 %v3132
    %3423 = vmatprep.subr.bf16.mxu0 %v3135
    %3424 = vmatpush1.bf16.msra.mxu0 %v3134
    %3425 = vmatprep.subr.bf16.mxu0 %v3137
    %3426 = vmatpush1.bf16.msra.mxu0 %v3136
    %3427 = vmatprep.subr.bf16.mxu0 %v3139
    %3428 = vmatpush1.bf16.msra.mxu0 %v3138
    %3429 = vmatprep.subr.bf16.mxu0 %v3141
    %3430 = vmatpush1.bf16.msra.mxu0 %v3140
    %3431 = vmatprep.mubr.bf16.mxu0 %v2489
    %3432 = vmatmul.mubr.bf16.gmra.mrb[0].mxu0 %v2488
    %v3433 = vpop.f32.mrb[0].mxu0
    %v3434 = vadd.f32 %v3391, %v3433
    %v3435 = vpop.f32.mrb[0].mxu0
    %v3436 = vadd.f32 %v3393, %v3435
    %v3437 = vpop.f32.mrb[0].mxu0
    %v3438 = vadd.f32 %v3395, %v3437
    %v3439 = vpop.f32.mrb[0].mxu0
    %v3440 = vadd.f32 %v3397, %v3439
    %3441 = vdwg.mxu0
    %v3442 = vadd.f32 %v1414, %v3434
    %v3443 = vadd.f32 %v1415, %v3436
    %v3444 = vadd.f32 %v1416, %v3438
    %v3445 = vadd.f32 %v1417, %v3440
    %3446 = vst [vmem:[#allocation14] sm:$0xff] %v3442
    %3447 = vst [vmem:[#allocation14 + $0x8] sm:$0xff] %v3443
    %3448 = vst [vmem:[#allocation14 + $0x10] sm:$0xff] %v3444
    %3449 = vst [vmem:[#allocation14 + $0x18] sm:$0xff] %v3445
    // Predicated region
    $region82: #{tpu_custom_call.1} parent=1 // pred_check
      _
    $region83: #{tpu_custom_call.1} parent=1 // pred_check_branch
      %3451 = sbr.rel (0) target = $region85
    $region84: #{tpu_custom_call.1} parent=1 // pred_region
      %s3453 = ssub.s32 512, 512
      %3454 = vsyncadd [#allocation4], %s3453
      %s3455 = sshll.u32 [#allocation14], 4
      %s3456 = int_to_ptr.vmem [resolvable:$true] %s3455
      %3461 = dma.vmem_to_hbm [thread:$0]  %s3456, 512, %s13, [#allocation4], 256, 256, 16
    $region85: #{tpu_custom_call.1} parent=1 // pred_fallthru
      _
    // Predicated region
    $region86: #{tpu_custom_call.1} parent=1 // pred_check
      _
    $region87: #{tpu_custom_call.1} parent=1 // pred_check_branch
      %3463 = sbr.rel (0) target = $region89
    $region88: #{tpu_custom_call.1} parent=1 // pred_region
      %3464 = dma.done [#allocation4], 512
    $region89: #{tpu_custom_call.1} parent=1 // pred_fallthru
      _
    %3465 = vsyncpa [#allocation3], 1
    %3466 = vsyncpa [#allocation6], 1
    %3467 = vsyncpa [#allocation9], 1
    %3468 = vsyncpa [#allocation12], 1
    %3469 = vsyncpa [#allocation4], 1

</llo_original>
